<compile_context>
chip_gen: v6e
topology: v6e:2x2x1
jax: 0.10.0
libtpu: 0.0.40
codegen_flags: <defaults>
</compile_context>

<pallas_src>
import functools

import jax
import jax.numpy as jnp
from jax import lax
from jax.experimental import pallas as pl
from jax.experimental.pallas import tpu as pltpu


_INV_SQRT2 = 0.7071067811865476


def _gelu_exact(x):
    # PyTorch nn.GELU() default: exact erf formulation (kept for parity).
    return 0.5 * x * (1.0 + lax.erf(x * jnp.float32(_INV_SQRT2)))


def _dot_nt(a, b):
    # (M, K) x (N, K) -> (M, N): contract the LAST dims of both operands so no
    # transpose of `b` is materialized; the MXU consumes the NT form natively.
    return lax.dot_general(
        a, b, (((1,), (1,)), ((), ())), preferred_element_type=jnp.float32)


def _projection_head(x_bf16, w1, b1, w2, b2, gamma, beta, eps=1e-5):
    # Linear -> GELU -> Linear -> (+residual) -> LayerNorm.
    # Matmuls run in bf16 on the MXU with f32 accumulation; the rest is f32.
    projected = jnp.dot(x_bf16, w1, preferred_element_type=jnp.float32) + b1
    h = _gelu_exact(projected)
    h = jnp.dot(h.astype(jnp.bfloat16), w2,
                preferred_element_type=jnp.float32) + b2
    # dropout skipped (eval mode)
    h = h + projected
    mu = jnp.mean(h, axis=-1, keepdims=True)
    var = jnp.mean((h - mu) * (h - mu), axis=-1, keepdims=True)
    h = (h - mu) * lax.rsqrt(var + eps)
    return h * gamma + beta


def _log_softmax(x, axis):
    m = jnp.max(x, axis=axis, keepdims=True)
    z = x - m
    lse = jnp.log(jnp.sum(jnp.exp(z), axis=axis, keepdims=True))
    return z - lse


def _softmax_rows(x):
    m = jnp.max(x, axis=-1, keepdims=True)
    e = jnp.exp(x - m)
    return e * pl.reciprocal(jnp.sum(e, axis=-1, keepdims=True), approx=True)


def _full_sum(x):
    # (B, B) -> (1, 1): lane reduce then sublane reduce.
    return jnp.sum(jnp.sum(x, axis=-1, keepdims=True), axis=0, keepdims=True)


def cxr_vqa_kernel(
    imgf_ref, txtf_ref,
    iw1_ref, ib1_ref, iw2_ref, ib2_ref, ig_ref, ibt_ref,
    tw1_ref, tb1_ref, tw2_ref, tb2_ref, tg_ref, tbt_ref,
    out_ref,
    *, temperature: float,
):
    img_emb = _projection_head(
        imgf_ref[...], iw1_ref[...], ib1_ref[...], iw2_ref[...], ib2_ref[...],
        ig_ref[...], ibt_ref[...])
    text_emb = _projection_head(
        txtf_ref[...], tw1_ref[...], tb1_ref[...], tw2_ref[...], tb2_ref[...],
        tg_ref[...], tbt_ref[...])

    inv_t = jnp.float32(1.0 / temperature)

    # logits = text_emb @ img_emb.T / T   (NT contraction, no transpose)
    logits = _dot_nt(text_emb, img_emb) * inv_t
    imgs_sim = _dot_nt(img_emb, img_emb)
    texts_sim = _dot_nt(text_emb, text_emb)

    targets = _softmax_rows((texts_sim + imgs_sim) * (0.5 * inv_t))

    # Symmetric soft-target CE without materializing logits.T / targets.T:
    #   sum_i texts_loss[i]  = -sum_{ij} targets[ij] * log_softmax(logits, axis=-1)[ij]
    #   sum_i images_loss[i] = -sum_{ij} targets[ij] * log_softmax(logits, axis=0)[ij]
    texts_loss_sum = _full_sum(-targets * _log_softmax(logits, axis=-1))
    images_loss_sum = _full_sum(-targets * _log_softmax(logits, axis=0))

    batch = logits.shape[0]
    out_ref[...] = (texts_loss_sum + images_loss_sum) * jnp.float32(0.5 / batch)


def cxr_vqa_forward(img_features, text_features, params, temperature=1.0):
    """params = (iw1, ib1, iw2, ib2, ig, ibt, tw1, tb1, tw2, tb2, tg, tbt)."""
    (iw1, ib1, iw2, ib2, ig, ibt, tw1, tb1, tw2, tb2, tg, tbt) = params
    bf16 = jnp.bfloat16
    # bf16 for the DMA-dominant operands (features + Linear weights); biases
    # and LayerNorm params stay f32 (tiny).
    args = (
        img_features.astype(bf16), text_features.astype(bf16),
        iw1.astype(bf16), ib1, iw2.astype(bf16), ib2, ig, ibt,
        tw1.astype(bf16), tb1, tw2.astype(bf16), tb2, tg, tbt,
    )
    vmem = pl.BlockSpec(memory_space=pltpu.MemorySpace.VMEM)
    out = pl.pallas_call(
        functools.partial(cxr_vqa_kernel, temperature=temperature),
        out_shape=jax.ShapeDtypeStruct((1, 1), jnp.float32),
        in_specs=[vmem] * len(args),
        out_specs=vmem,
    )(*args)
    return out[0, 0]


def init_params(key, img_dim, txt_dim, proj_dim=256):
    """Deterministic synthetic ProjectionHead weights (PyTorch-style uniform init)."""
    ks = jax.random.split(key, 8)

    def linear(kw, kb, fan_in, fan_out):
        bound = 1.0 / jnp.sqrt(jnp.float32(fan_in))
        w = jax.random.uniform(kw, (fan_in, fan_out), jnp.float32, -bound, bound)
        b = jax.random.uniform(kb, (1, fan_out), jnp.float32, -bound, bound)
        return w, b

    iw1, ib1 = linear(ks[0], ks[1], img_dim, proj_dim)
    iw2, ib2 = linear(ks[2], ks[3], proj_dim, proj_dim)
    ig = jnp.ones((1, proj_dim), jnp.float32)
    ibt = jnp.zeros((1, proj_dim), jnp.float32)

    tw1, tb1 = linear(ks[4], ks[5], txt_dim, proj_dim)
    tw2, tb2 = linear(ks[6], ks[7], proj_dim, proj_dim)
    tg = jnp.ones((1, proj_dim), jnp.float32)
    tbt = jnp.zeros((1, proj_dim), jnp.float32)

    return (iw1, ib1, iw2, ib2, ig, ibt, tw1, tb1, tw2, tb2, tg, tbt)


if __name__ == "__main__":
    B = 8                  # batch
    IMG_DIM = 512 * 3 * 3  # flattened CxrResNet output -> 4608
    TXT_DIM = 512          # CLIP ViT-B/32 text hidden size
    PROJ = 256

    key = jax.random.PRNGKey(0)
    k_img, k_txt, k_par = jax.random.split(key, 3)

    img_features = jax.random.normal(k_img, (B, IMG_DIM), jnp.float32)
    text_features = jax.random.normal(k_txt, (B, TXT_DIM), jnp.float32)
    params = init_params(k_par, IMG_DIM, TXT_DIM, PROJ)

    loss = cxr_vqa_forward(img_features, text_features, params, temperature=1.0)
    jax.block_until_ready(loss)
    print("KERNEL_OK")
</pallas_src>

<mosaic_0001>
module attributes {stable_mosaic.version = 11 : i64} {
  func.func @cxr_vqa_kernel(%arg0: memref<8x4608xbf16, #tpu.memory_space<vmem>>, %arg1: memref<8x512xbf16, #tpu.memory_space<vmem>>, %arg2: memref<4608x256xbf16, #tpu.memory_space<vmem>>, %arg3: memref<1x256xf32, #tpu.memory_space<vmem>>, %arg4: memref<256x256xbf16, #tpu.memory_space<vmem>>, %arg5: memref<1x256xf32, #tpu.memory_space<vmem>>, %arg6: memref<1x256xf32, #tpu.memory_space<vmem>>, %arg7: memref<1x256xf32, #tpu.memory_space<vmem>>, %arg8: memref<512x256xbf16, #tpu.memory_space<vmem>>, %arg9: memref<1x256xf32, #tpu.memory_space<vmem>>, %arg10: memref<256x256xbf16, #tpu.memory_space<vmem>>, %arg11: memref<1x256xf32, #tpu.memory_space<vmem>>, %arg12: memref<1x256xf32, #tpu.memory_space<vmem>>, %arg13: memref<1x256xf32, #tpu.memory_space<vmem>>, %arg14: memref<1x1xf32, #tpu.memory_space<vmem>>) attributes {dimension_semantics = [], scalar_prefetch = 0 : i64, scratch_operands = 0 : i64, tpu.core_type = #tpu.core_type<tc>} {
    %c0 = arith.constant 0 : index
    %c0_0 = arith.constant 0 : index
    %0 = vector.load %arg0[%c0, %c0_0] : memref<8x4608xbf16, #tpu.memory_space<vmem>>, vector<8x4608xbf16>
    %c0_1 = arith.constant 0 : index
    %c0_2 = arith.constant 0 : index
    %1 = vector.load %arg2[%c0_1, %c0_2] : memref<4608x256xbf16, #tpu.memory_space<vmem>>, vector<4608x256xbf16>
    %c0_3 = arith.constant 0 : index
    %c0_4 = arith.constant 0 : index
    %2 = vector.load %arg3[%c0_3, %c0_4] : memref<1x256xf32, #tpu.memory_space<vmem>>, vector<1x256xf32>
    %c0_5 = arith.constant 0 : index
    %c0_6 = arith.constant 0 : index
    %3 = vector.load %arg4[%c0_5, %c0_6] : memref<256x256xbf16, #tpu.memory_space<vmem>>, vector<256x256xbf16>
    %c0_7 = arith.constant 0 : index
    %c0_8 = arith.constant 0 : index
    %4 = vector.load %arg5[%c0_7, %c0_8] : memref<1x256xf32, #tpu.memory_space<vmem>>, vector<1x256xf32>
    %c0_9 = arith.constant 0 : index
    %c0_10 = arith.constant 0 : index
    %5 = vector.load %arg6[%c0_9, %c0_10] : memref<1x256xf32, #tpu.memory_space<vmem>>, vector<1x256xf32>
    %c0_11 = arith.constant 0 : index
    %c0_12 = arith.constant 0 : index
    %6 = vector.load %arg7[%c0_11, %c0_12] : memref<1x256xf32, #tpu.memory_space<vmem>>, vector<1x256xf32>
    %cst = arith.constant dense<0.000000e+00> : vector<8x256xf32>
    %7 = tpu.matmul %0, %1, %cst {dimension_numbers = #tpu.dot_dimension_numbers<[1], [0], [0], [1], [0, 0, 1, 1], [], []>} : vector<8x4608xbf16>, vector<4608x256xbf16>, vector<8x256xf32> -> vector<8x256xf32>
    %8 = vector.broadcast %2 : vector<1x256xf32> to vector<8x256xf32>
    %9 = arith.addf %7, %8 : vector<8x256xf32>
    %cst_13 = arith.constant 5.000000e-01 : f32
    %10 = vector.broadcast %cst_13 : f32 to vector<8x256xf32>
    %11 = arith.mulf %10, %9 : vector<8x256xf32>
    %cst_14 = arith.constant 0.707106769 : f32
    %12 = vector.broadcast %cst_14 : f32 to vector<8x256xf32>
    %13 = arith.mulf %9, %12 : vector<8x256xf32>
    %14 = math.erf %13 : vector<8x256xf32>
    %cst_15 = arith.constant 1.000000e+00 : f32
    %15 = vector.broadcast %cst_15 : f32 to vector<8x256xf32>
    %16 = arith.addf %15, %14 : vector<8x256xf32>
    %17 = arith.mulf %11, %16 : vector<8x256xf32>
    %18 = arith.truncf %17 : vector<8x256xf32> to vector<8x256xbf16>
    %cst_16 = arith.constant dense<0.000000e+00> : vector<8x256xf32>
    %19 = tpu.matmul %18, %3, %cst_16 {dimension_numbers = #tpu.dot_dimension_numbers<[1], [0], [0], [1], [0, 0, 1, 1], [], []>} : vector<8x256xbf16>, vector<256x256xbf16>, vector<8x256xf32> -> vector<8x256xf32>
    %20 = vector.broadcast %4 : vector<1x256xf32> to vector<8x256xf32>
    %21 = arith.addf %19, %20 : vector<8x256xf32>
    %22 = arith.addf %21, %9 : vector<8x256xf32>
    %cst_17 = arith.constant dense<0.000000e+00> : vector<8xf32>
    %23 = vector.multi_reduction <add>, %22, %cst_17 [1] : vector<8x256xf32> to vector<8xf32>
    %24 = vector.shape_cast %23 : vector<8xf32> to vector<8x1xf32>
    %cst_18 = arith.constant 2.560000e+02 : f32
    %25 = vector.broadcast %cst_18 : f32 to vector<8x1xf32>
    %26 = arith.divf %24, %25 : vector<8x1xf32>
    %27 = vector.broadcast %26 : vector<8x1xf32> to vector<8x256xf32>
    %28 = arith.subf %22, %27 : vector<8x256xf32>
    %29 = vector.broadcast %26 : vector<8x1xf32> to vector<8x256xf32>
    %30 = arith.subf %22, %29 : vector<8x256xf32>
    %31 = arith.mulf %28, %30 : vector<8x256xf32>
    %cst_19 = arith.constant dense<0.000000e+00> : vector<8xf32>
    %32 = vector.multi_reduction <add>, %31, %cst_19 [1] : vector<8x256xf32> to vector<8xf32>
    %33 = vector.shape_cast %32 : vector<8xf32> to vector<8x1xf32>
    %cst_20 = arith.constant 2.560000e+02 : f32
    %34 = vector.broadcast %cst_20 : f32 to vector<8x1xf32>
    %35 = arith.divf %33, %34 : vector<8x1xf32>
    %36 = vector.broadcast %26 : vector<8x1xf32> to vector<8x256xf32>
    %37 = arith.subf %22, %36 : vector<8x256xf32>
    %cst_21 = arith.constant 9.99999974E-6 : f32
    %38 = vector.broadcast %cst_21 : f32 to vector<8x1xf32>
    %39 = arith.addf %35, %38 : vector<8x1xf32>
    %40 = math.rsqrt %39 : vector<8x1xf32>
    %41 = vector.broadcast %40 : vector<8x1xf32> to vector<8x256xf32>
    %42 = arith.mulf %37, %41 : vector<8x256xf32>
    %43 = vector.broadcast %5 : vector<1x256xf32> to vector<8x256xf32>
    %44 = arith.mulf %42, %43 : vector<8x256xf32>
    %45 = vector.broadcast %6 : vector<1x256xf32> to vector<8x256xf32>
    %46 = arith.addf %44, %45 : vector<8x256xf32>
    %c0_22 = arith.constant 0 : index
    %c0_23 = arith.constant 0 : index
    %47 = vector.load %arg1[%c0_22, %c0_23] : memref<8x512xbf16, #tpu.memory_space<vmem>>, vector<8x512xbf16>
    %c0_24 = arith.constant 0 : index
    %c0_25 = arith.constant 0 : index
    %48 = vector.load %arg8[%c0_24, %c0_25] : memref<512x256xbf16, #tpu.memory_space<vmem>>, vector<512x256xbf16>
    %c0_26 = arith.constant 0 : index
    %c0_27 = arith.constant 0 : index
    %49 = vector.load %arg9[%c0_26, %c0_27] : memref<1x256xf32, #tpu.memory_space<vmem>>, vector<1x256xf32>
    %c0_28 = arith.constant 0 : index
    %c0_29 = arith.constant 0 : index
    %50 = vector.load %arg10[%c0_28, %c0_29] : memref<256x256xbf16, #tpu.memory_space<vmem>>, vector<256x256xbf16>
    %c0_30 = arith.constant 0 : index
    %c0_31 = arith.constant 0 : index
    %51 = vector.load %arg11[%c0_30, %c0_31] : memref<1x256xf32, #tpu.memory_space<vmem>>, vector<1x256xf32>
    %c0_32 = arith.constant 0 : index
    %c0_33 = arith.constant 0 : index
    %52 = vector.load %arg12[%c0_32, %c0_33] : memref<1x256xf32, #tpu.memory_space<vmem>>, vector<1x256xf32>
    %c0_34 = arith.constant 0 : index
    %c0_35 = arith.constant 0 : index
    %53 = vector.load %arg13[%c0_34, %c0_35] : memref<1x256xf32, #tpu.memory_space<vmem>>, vector<1x256xf32>
    %cst_36 = arith.constant dense<0.000000e+00> : vector<8x256xf32>
    %54 = tpu.matmul %47, %48, %cst_36 {dimension_numbers = #tpu.dot_dimension_numbers<[1], [0], [0], [1], [0, 0, 1, 1], [], []>} : vector<8x512xbf16>, vector<512x256xbf16>, vector<8x256xf32> -> vector<8x256xf32>
    %55 = vector.broadcast %49 : vector<1x256xf32> to vector<8x256xf32>
    %56 = arith.addf %54, %55 : vector<8x256xf32>
    %cst_37 = arith.constant 5.000000e-01 : f32
    %57 = vector.broadcast %cst_37 : f32 to vector<8x256xf32>
    %58 = arith.mulf %57, %56 : vector<8x256xf32>
    %cst_38 = arith.constant 0.707106769 : f32
    %59 = vector.broadcast %cst_38 : f32 to vector<8x256xf32>
    %60 = arith.mulf %56, %59 : vector<8x256xf32>
    %61 = math.erf %60 : vector<8x256xf32>
    %cst_39 = arith.constant 1.000000e+00 : f32
    %62 = vector.broadcast %cst_39 : f32 to vector<8x256xf32>
    %63 = arith.addf %62, %61 : vector<8x256xf32>
    %64 = arith.mulf %58, %63 : vector<8x256xf32>
    %65 = arith.truncf %64 : vector<8x256xf32> to vector<8x256xbf16>
    %cst_40 = arith.constant dense<0.000000e+00> : vector<8x256xf32>
    %66 = tpu.matmul %65, %50, %cst_40 {dimension_numbers = #tpu.dot_dimension_numbers<[1], [0], [0], [1], [0, 0, 1, 1], [], []>} : vector<8x256xbf16>, vector<256x256xbf16>, vector<8x256xf32> -> vector<8x256xf32>
    %67 = vector.broadcast %51 : vector<1x256xf32> to vector<8x256xf32>
    %68 = arith.addf %66, %67 : vector<8x256xf32>
    %69 = arith.addf %68, %56 : vector<8x256xf32>
    %cst_41 = arith.constant dense<0.000000e+00> : vector<8xf32>
    %70 = vector.multi_reduction <add>, %69, %cst_41 [1] : vector<8x256xf32> to vector<8xf32>
    %71 = vector.shape_cast %70 : vector<8xf32> to vector<8x1xf32>
    %cst_42 = arith.constant 2.560000e+02 : f32
    %72 = vector.broadcast %cst_42 : f32 to vector<8x1xf32>
    %73 = arith.divf %71, %72 : vector<8x1xf32>
    %74 = vector.broadcast %73 : vector<8x1xf32> to vector<8x256xf32>
    %75 = arith.subf %69, %74 : vector<8x256xf32>
    %76 = vector.broadcast %73 : vector<8x1xf32> to vector<8x256xf32>
    %77 = arith.subf %69, %76 : vector<8x256xf32>
    %78 = arith.mulf %75, %77 : vector<8x256xf32>
    %cst_43 = arith.constant dense<0.000000e+00> : vector<8xf32>
    %79 = vector.multi_reduction <add>, %78, %cst_43 [1] : vector<8x256xf32> to vector<8xf32>
    %80 = vector.shape_cast %79 : vector<8xf32> to vector<8x1xf32>
    %cst_44 = arith.constant 2.560000e+02 : f32
    %81 = vector.broadcast %cst_44 : f32 to vector<8x1xf32>
    %82 = arith.divf %80, %81 : vector<8x1xf32>
    %83 = vector.broadcast %73 : vector<8x1xf32> to vector<8x256xf32>
    %84 = arith.subf %69, %83 : vector<8x256xf32>
    %cst_45 = arith.constant 9.99999974E-6 : f32
    %85 = vector.broadcast %cst_45 : f32 to vector<8x1xf32>
    %86 = arith.addf %82, %85 : vector<8x1xf32>
    %87 = math.rsqrt %86 : vector<8x1xf32>
    %88 = vector.broadcast %87 : vector<8x1xf32> to vector<8x256xf32>
    %89 = arith.mulf %84, %88 : vector<8x256xf32>
    %90 = vector.broadcast %52 : vector<1x256xf32> to vector<8x256xf32>
    %91 = arith.mulf %89, %90 : vector<8x256xf32>
    %92 = vector.broadcast %53 : vector<1x256xf32> to vector<8x256xf32>
    %93 = arith.addf %91, %92 : vector<8x256xf32>
    %cst_46 = arith.constant dense<0.000000e+00> : vector<8x8xf32>
    %94 = tpu.matmul %93, %46, %cst_46 {dimension_numbers = #tpu.dot_dimension_numbers<[1], [1], [0], [0], [0, 0, 1, 0], [], []>} : vector<8x256xf32>, vector<8x256xf32>, vector<8x8xf32> -> vector<8x8xf32>
    %cst_47 = arith.constant 1.000000e+00 : f32
    %95 = vector.broadcast %cst_47 : f32 to vector<8x8xf32>
    %96 = arith.mulf %94, %95 : vector<8x8xf32>
    %cst_48 = arith.constant dense<0.000000e+00> : vector<8x8xf32>
    %97 = tpu.matmul %46, %46, %cst_48 {dimension_numbers = #tpu.dot_dimension_numbers<[1], [1], [0], [0], [0, 0, 1, 0], [], []>} : vector<8x256xf32>, vector<8x256xf32>, vector<8x8xf32> -> vector<8x8xf32>
    %cst_49 = arith.constant dense<0.000000e+00> : vector<8x8xf32>
    %98 = tpu.matmul %93, %93, %cst_49 {dimension_numbers = #tpu.dot_dimension_numbers<[1], [1], [0], [0], [0, 0, 1, 0], [], []>} : vector<8x256xf32>, vector<8x256xf32>, vector<8x8xf32> -> vector<8x8xf32>
    %99 = arith.addf %98, %97 : vector<8x8xf32>
    %cst_50 = arith.constant 5.000000e-01 : f32
    %cst_51 = arith.constant 1.000000e+00 : f32
    %100 = arith.mulf %cst_50, %cst_51 : f32
    %101 = vector.broadcast %100 : f32 to vector<8x8xf32>
    %102 = arith.mulf %99, %101 : vector<8x8xf32>
    %cst_52 = arith.constant dense<0xFF800000> : vector<8xf32>
    %103 = vector.multi_reduction <maximumf>, %102, %cst_52 [1] : vector<8x8xf32> to vector<8xf32>
    %104 = vector.shape_cast %103 : vector<8xf32> to vector<8x1xf32>
    %105 = vector.broadcast %104 : vector<8x1xf32> to vector<8x8xf32>
    %106 = arith.subf %102, %105 : vector<8x8xf32>
    %107 = math.exp %106 : vector<8x8xf32>
    %cst_53 = arith.constant dense<0.000000e+00> : vector<8xf32>
    %108 = vector.multi_reduction <add>, %107, %cst_53 [1] : vector<8x8xf32> to vector<8xf32>
    %109 = vector.shape_cast %108 : vector<8xf32> to vector<8x1xf32>
    %110 = tpu.reciprocal %109 {approx = true} : vector<8x1xf32> -> vector<8x1xf32>
    %111 = vector.broadcast %110 : vector<8x1xf32> to vector<8x8xf32>
    %112 = arith.mulf %107, %111 : vector<8x8xf32>
    %cst_54 = arith.constant 0.000000e+00 : f32
    %113 = vector.broadcast %cst_54 : f32 to vector<8x8xf32>
    %114 = arith.subf %113, %112 : vector<8x8xf32>
    %cst_55 = arith.constant dense<0xFF800000> : vector<8xf32>
    %115 = vector.multi_reduction <maximumf>, %96, %cst_55 [1] : vector<8x8xf32> to vector<8xf32>
    %116 = vector.shape_cast %115 : vector<8xf32> to vector<8x1xf32>
    %117 = vector.broadcast %116 : vector<8x1xf32> to vector<8x8xf32>
    %118 = arith.subf %96, %117 : vector<8x8xf32>
    %119 = math.exp %118 : vector<8x8xf32>
    %cst_56 = arith.constant dense<0.000000e+00> : vector<8xf32>
    %120 = vector.multi_reduction <add>, %119, %cst_56 [1] : vector<8x8xf32> to vector<8xf32>
    %121 = vector.shape_cast %120 : vector<8xf32> to vector<8x1xf32>
    %122 = math.log %121 : vector<8x1xf32>
    %123 = vector.broadcast %122 : vector<8x1xf32> to vector<8x8xf32>
    %124 = arith.subf %118, %123 : vector<8x8xf32>
    %125 = arith.mulf %114, %124 : vector<8x8xf32>
    %cst_57 = arith.constant dense<0.000000e+00> : vector<8xf32>
    %126 = vector.multi_reduction <add>, %125, %cst_57 [1] : vector<8x8xf32> to vector<8xf32>
    %127 = vector.shape_cast %126 : vector<8xf32> to vector<8x1xf32>
    %cst_58 = arith.constant dense<0.000000e+00> : vector<1xf32>
    %128 = vector.multi_reduction <add>, %127, %cst_58 [0] : vector<8x1xf32> to vector<1xf32>
    %129 = vector.shape_cast %128 : vector<1xf32> to vector<1x1xf32>
    %cst_59 = arith.constant 0.000000e+00 : f32
    %130 = vector.broadcast %cst_59 : f32 to vector<8x8xf32>
    %131 = arith.subf %130, %112 : vector<8x8xf32>
    %cst_60 = arith.constant dense<0xFF800000> : vector<8xf32>
    %132 = vector.multi_reduction <maximumf>, %96, %cst_60 [0] : vector<8x8xf32> to vector<8xf32>
    %133 = vector.shape_cast %132 : vector<8xf32> to vector<1x8xf32>
    %134 = vector.broadcast %133 : vector<1x8xf32> to vector<8x8xf32>
    %135 = arith.subf %96, %134 : vector<8x8xf32>
    %136 = math.exp %135 : vector<8x8xf32>
    %cst_61 = arith.constant dense<0.000000e+00> : vector<8xf32>
    %137 = vector.multi_reduction <add>, %136, %cst_61 [0] : vector<8x8xf32> to vector<8xf32>
    %138 = vector.shape_cast %137 : vector<8xf32> to vector<1x8xf32>
    %139 = math.log %138 : vector<1x8xf32>
    %140 = vector.broadcast %139 : vector<1x8xf32> to vector<8x8xf32>
    %141 = arith.subf %135, %140 : vector<8x8xf32>
    %142 = arith.mulf %131, %141 : vector<8x8xf32>
    %cst_62 = arith.constant dense<0.000000e+00> : vector<8xf32>
    %143 = vector.multi_reduction <add>, %142, %cst_62 [1] : vector<8x8xf32> to vector<8xf32>
    %144 = vector.shape_cast %143 : vector<8xf32> to vector<8x1xf32>
    %cst_63 = arith.constant dense<0.000000e+00> : vector<1xf32>
    %145 = vector.multi_reduction <add>, %144, %cst_63 [0] : vector<8x1xf32> to vector<1xf32>
    %146 = vector.shape_cast %145 : vector<1xf32> to vector<1x1xf32>
    %147 = arith.addf %129, %146 : vector<1x1xf32>
    %cst_64 = arith.constant 6.250000e-02 : f32
    %148 = vector.broadcast %cst_64 : f32 to vector<1x1xf32>
    %149 = arith.mulf %147, %148 : vector<1x1xf32>
    %c0_65 = arith.constant 0 : index
    %c0_66 = arith.constant 0 : index
    %150 = vector.load %arg14[%c0_65, %c0_66] : memref<1x1xf32, #tpu.memory_space<vmem>>, vector<1x1xf32>
    tpu.vector_store %arg14[%c0_65, %c0_66], %149 {strides = array<i32>} : memref<1x1xf32, #tpu.memory_space<vmem>>, vector<1x1xf32>,
    return
  }
}

</mosaic_0001>

<llo_original>
// kernel: tpu_custom_call.1
$region0: #{tpu_custom_call.1}
  #allocation0 [shape = 'u32[]', space=smem, size = 0x4, offset = 0x4, fixed_abs, tag = 'smem constant byte address 0x4 - core index']
  #allocation1 [shape = 'u32[144,128]{1,0:T(1,128)}', space=vmem, size = 0x12000, scoped, tag = 'internal scratch']
  %s0 = inlined_call_operand.hbm [shape: bf16[8,4608], index: 0, kind: input, shape index: {}]
  %s1 = inlined_call_operand.hbm [shape: bf16[8,512], index: 1, kind: input, shape index: {}]
  %s2 = inlined_call_operand.hbm [shape: bf16[4608,256], index: 2, kind: input, shape index: {}]
  %s3 = inlined_call_operand.hbm [shape: f32[1,256], index: 3, kind: input, shape index: {}]
  %s4 = inlined_call_operand.hbm [shape: bf16[256,256], index: 4, kind: input, shape index: {}]
  %s5 = inlined_call_operand.hbm [shape: f32[1,256], index: 5, kind: input, shape index: {}]
  %s6 = inlined_call_operand.hbm [shape: f32[1,256], index: 6, kind: input, shape index: {}]
  %s7 = inlined_call_operand.hbm [shape: f32[1,256], index: 7, kind: input, shape index: {}]
  %s8 = inlined_call_operand.hbm [shape: bf16[512,256], index: 8, kind: input, shape index: {}]
  %s9 = inlined_call_operand.hbm [shape: f32[1,256], index: 9, kind: input, shape index: {}]
  %s10 = inlined_call_operand.hbm [shape: bf16[256,256], index: 10, kind: input, shape index: {}]
  %s11 = inlined_call_operand.hbm [shape: f32[1,256], index: 11, kind: input, shape index: {}]
  %s12 = inlined_call_operand.hbm [shape: f32[1,256], index: 12, kind: input, shape index: {}]
  %s13 = inlined_call_operand.hbm [shape: f32[1,256], index: 13, kind: input, shape index: {}]
  %s14 = inlined_call_operand.hbm [shape: f32[1,1], index: 14, kind: output, shape index: {}]
  %s15 = sld [smem:[#allocation0]]
  $region122: #{tpu_custom_call.1} parent=0
    _
  %s17 = ssub.s32 1, %s15
  %s18 = scalar_select 0, %s17, %s15
  $region1: #{tpu_custom_call.1} parent=0
    #allocation2 [shape = 'u8[73728]{0}', space=vmem, size = 0x12000, scoped, tag = 'input window, operand 0, single buffered']
    #allocation3 [shape = 's32[1]{0}', space=sflag, size = 0x4, scoped, tag = 'scoped memory for tpu_custom_call.1']
    #allocation4 [shape = 's32[1]{0}', space=sflag, size = 0x4, scoped, tag = 'scoped memory for tpu_custom_call.1']
    #allocation5 [shape = 'u8[8192]{0}', space=vmem, size = 0x2000, scoped, tag = 'input window, operand 1, single buffered']
    #allocation6 [shape = 's32[1]{0}', space=sflag, size = 0x4, scoped, tag = 'scoped memory for tpu_custom_call.1']
    #allocation7 [shape = 'u8[2359296]{0}', space=vmem, size = 0x240000, scoped, tag = 'input window, operand 2, single buffered']
    #allocation8 [shape = 'u8[1024]{0}', space=vmem, size = 0x400, scoped, tag = 'input window, operand 3, single buffered']
    #allocation9 [shape = 's32[1]{0}', space=sflag, size = 0x4, scoped, tag = 'scoped memory for tpu_custom_call.1']
    #allocation10 [shape = 'u8[131072]{0}', space=vmem, size = 0x20000, scoped, tag = 'input window, operand 4, single buffered']
    #allocation11 [shape = 'u8[1024]{0}', space=vmem, size = 0x400, scoped, tag = 'input window, operand 5, single buffered']
    #allocation12 [shape = 's32[1]{0}', space=sflag, size = 0x4, scoped, tag = 'scoped memory for tpu_custom_call.1']
    #allocation13 [shape = 'u8[1024]{0}', space=vmem, size = 0x400, scoped, tag = 'input window, operand 6, single buffered']
    #allocation14 [shape = 'u8[1024]{0}', space=vmem, size = 0x400, scoped, tag = 'input window, operand 7, single buffered']
    #allocation15 [shape = 's32[1]{0}', space=sflag, size = 0x4, scoped, tag = 'scoped memory for tpu_custom_call.1']
    #allocation16 [shape = 'u8[262144]{0}', space=vmem, size = 0x40000, scoped, tag = 'input window, operand 8, single buffered']
    #allocation17 [shape = 'u8[1024]{0}', space=vmem, size = 0x400, scoped, tag = 'input window, operand 9, single buffered']
    #allocation18 [shape = 's32[1]{0}', space=sflag, size = 0x4, scoped, tag = 'scoped memory for tpu_custom_call.1']
    #allocation19 [shape = 'u8[131072]{0}', space=vmem, size = 0x20000, scoped, tag = 'input window, operand 10, single buffered']
    #allocation20 [shape = 'u8[1024]{0}', space=vmem, size = 0x400, scoped, tag = 'input window, operand 11, single buffered']
    #allocation21 [shape = 's32[1]{0}', space=sflag, size = 0x4, scoped, tag = 'scoped memory for tpu_custom_call.1']
    #allocation22 [shape = 'u8[1024]{0}', space=vmem, size = 0x400, scoped, tag = 'input window, operand 12, single buffered']
    #allocation23 [shape = 'u8[1024]{0}', space=vmem, size = 0x400, scoped, tag = 'input window, operand 13, single buffered']
    #allocation24 [shape = 's32[1]{0}', space=sflag, size = 0x4, scoped, tag = 'scoped memory for tpu_custom_call.1']
    #allocation25 [shape = 'u8[512]{0}', space=vmem, size = 0x400, scoped, tag = 'output window, operand 0, single buffered']
    %19 = vsyncpa [#allocation3], 0
    %20 = vsyncpa [#allocation6], 0
    %21 = vsyncpa [#allocation9], 0
    %22 = vsyncpa [#allocation12], 0
    %23 = vsyncpa [#allocation15], 0
    %24 = vsyncpa [#allocation18], 0
    %25 = vsyncpa [#allocation21], 0
    %26 = vsyncpa [#allocation24], 0
    %27 = vsyncpa [#allocation4], 0
    // Predicated region
    $region2: #{tpu_custom_call.1} parent=1 // pred_check
      _
    $region3: #{tpu_custom_call.1} parent=1 // pred_check_branch
      %29 = sbr.rel (0) target = $region5
    $region4: #{tpu_custom_call.1} parent=1 // pred_region
      %s31 = ssub.s32 2304, 2304
      %32 = vsyncadd [#allocation3], %s31
      %s34 = sshll.u32 [#allocation2], 4
      %s35 = int_to_ptr.vmem [resolvable:$true] %s34
      %37 = dma.hbm_to_vmem [thread:$0]  %s0, 2304, %s35, [#allocation3]
    $region5: #{tpu_custom_call.1} parent=1 // pred_fallthru
      _
    // Predicated region
    $region6: #{tpu_custom_call.1} parent=1 // pred_check
      _
    $region7: #{tpu_custom_call.1} parent=1 // pred_check_branch
      %39 = sbr.rel (0) target = $region9
    $region8: #{tpu_custom_call.1} parent=1 // pred_region
      %s41 = ssub.s32 256, 256
      %42 = vsyncadd [#allocation6], %s41
      %s44 = sshll.u32 [#allocation5], 4
      %s45 = int_to_ptr.vmem [resolvable:$true] %s44
      %47 = dma.hbm_to_vmem [thread:$0]  %s1, 256, %s45, [#allocation6]
    $region9: #{tpu_custom_call.1} parent=1 // pred_fallthru
      _
    // Predicated region
    $region10: #{tpu_custom_call.1} parent=1 // pred_check
      _
    $region11: #{tpu_custom_call.1} parent=1 // pred_check_branch
      %49 = sbr.rel (0) target = $region13
    $region12: #{tpu_custom_call.1} parent=1 // pred_region
      %s51 = ssub.s32 73728, 73728
      %52 = vsyncadd [#allocation6], %s51
      %s53 = sshll.u32 [#allocation7], 4
      %s54 = int_to_ptr.vmem [resolvable:$true] %s53
      %59 = dma.hbm_to_vmem [thread:$0]  %s2, 73728, %s54, [#allocation6], 128, 128, 8
    $region13: #{tpu_custom_call.1} parent=1 // pred_fallthru
      _
    // Predicated region
    $region14: #{tpu_custom_call.1} parent=1 // pred_check
      _
    $region15: #{tpu_custom_call.1} parent=1 // pred_check_branch
      %61 = sbr.rel (0) target = $region17
    $region16: #{tpu_custom_call.1} parent=1 // pred_region
      %s63 = ssub.s32 32, 32
      %64 = vsyncadd [#allocation9], %s63
      %s66 = sshll.u32 [#allocation8], 4
      %s67 = int_to_ptr.vmem [resolvable:$true] %s66
      %69 = dma.hbm_to_vmem [thread:$0]  %s3, 32, %s67, [#allocation9]
    $region17: #{tpu_custom_call.1} parent=1 // pred_fallthru
      _
    // Predicated region
    $region18: #{tpu_custom_call.1} parent=1 // pred_check
      _
    $region19: #{tpu_custom_call.1} parent=1 // pred_check_branch
      %71 = sbr.rel (0) target = $region21
    $region20: #{tpu_custom_call.1} parent=1 // pred_region
      %s73 = ssub.s32 4096, 4096
      %74 = vsyncadd [#allocation9], %s73
      %s75 = sshll.u32 [#allocation10], 4
      %s76 = int_to_ptr.vmem [resolvable:$true] %s75
      %81 = dma.hbm_to_vmem [thread:$0]  %s4, 4096, %s76, [#allocation9], 128, 128, 8
    $region21: #{tpu_custom_call.1} parent=1 // pred_fallthru
      _
    // Predicated region
    $region22: #{tpu_custom_call.1} parent=1 // pred_check
      _
    $region23: #{tpu_custom_call.1} parent=1 // pred_check_branch
      %83 = sbr.rel (0) target = $region25
    $region24: #{tpu_custom_call.1} parent=1 // pred_region
      %s85 = ssub.s32 32, 32
      %86 = vsyncadd [#allocation12], %s85
      %s88 = sshll.u32 [#allocation11], 4
      %s89 = int_to_ptr.vmem [resolvable:$true] %s88
      %91 = dma.hbm_to_vmem [thread:$0]  %s5, 32, %s89, [#allocation12]
    $region25: #{tpu_custom_call.1} parent=1 // pred_fallthru
      _
    // Predicated region
    $region26: #{tpu_custom_call.1} parent=1 // pred_check
      _
    $region27: #{tpu_custom_call.1} parent=1 // pred_check_branch
      %93 = sbr.rel (0) target = $region29
    $region28: #{tpu_custom_call.1} parent=1 // pred_region
      %s95 = ssub.s32 32, 32
      %96 = vsyncadd [#allocation12], %s95
      %s98 = sshll.u32 [#allocation13], 4
      %s99 = int_to_ptr.vmem [resolvable:$true] %s98
      %101 = dma.hbm_to_vmem [thread:$0]  %s6, 32, %s99, [#allocation12]
    $region29: #{tpu_custom_call.1} parent=1 // pred_fallthru
      _
    // Predicated region
    $region30: #{tpu_custom_call.1} parent=1 // pred_check
      _
    $region31: #{tpu_custom_call.1} parent=1 // pred_check_branch
      %103 = sbr.rel (0) target = $region33
    $region32: #{tpu_custom_call.1} parent=1 // pred_region
      %s105 = ssub.s32 32, 32
      %106 = vsyncadd [#allocation15], %s105
      %s108 = sshll.u32 [#allocation14], 4
      %s109 = int_to_ptr.vmem [resolvable:$true] %s108
      %111 = dma.hbm_to_vmem [thread:$0]  %s7, 32, %s109, [#allocation15]
    $region33: #{tpu_custom_call.1} parent=1 // pred_fallthru
      _
    // Predicated region
    $region34: #{tpu_custom_call.1} parent=1 // pred_check
      _
    $region35: #{tpu_custom_call.1} parent=1 // pred_check_branch
      %113 = sbr.rel (0) target = $region37
    $region36: #{tpu_custom_call.1} parent=1 // pred_region
      %s115 = ssub.s32 8192, 8192
      %116 = vsyncadd [#allocation15], %s115
      %s117 = sshll.u32 [#allocation16], 4
      %s118 = int_to_ptr.vmem [resolvable:$true] %s117
      %123 = dma.hbm_to_vmem [thread:$0]  %s8, 8192, %s118, [#allocation15], 128, 128, 8
    $region37: #{tpu_custom_call.1} parent=1 // pred_fallthru
      _
    // Predicated region
    $region38: #{tpu_custom_call.1} parent=1 // pred_check
      _
    $region39: #{tpu_custom_call.1} parent=1 // pred_check_branch
      %125 = sbr.rel (0) target = $region41
    $region40: #{tpu_custom_call.1} parent=1 // pred_region
      %s127 = ssub.s32 32, 32
      %128 = vsyncadd [#allocation18], %s127
      %s130 = sshll.u32 [#allocation17], 4
      %s131 = int_to_ptr.vmem [resolvable:$true] %s130
      %133 = dma.hbm_to_vmem [thread:$0]  %s9, 32, %s131, [#allocation18]
    $region41: #{tpu_custom_call.1} parent=1 // pred_fallthru
      _
    // Predicated region
    $region42: #{tpu_custom_call.1} parent=1 // pred_check
      _
    $region43: #{tpu_custom_call.1} parent=1 // pred_check_branch
      %135 = sbr.rel (0) target = $region45
    $region44: #{tpu_custom_call.1} parent=1 // pred_region
      %s137 = ssub.s32 4096, 4096
      %138 = vsyncadd [#allocation18], %s137
      %s139 = sshll.u32 [#allocation19], 4
      %s140 = int_to_ptr.vmem [resolvable:$true] %s139
      %145 = dma.hbm_to_vmem [thread:$0]  %s10, 4096, %s140, [#allocation18], 128, 128, 8
    $region45: #{tpu_custom_call.1} parent=1 // pred_fallthru
      _
    // Predicated region
    $region46: #{tpu_custom_call.1} parent=1 // pred_check
      _
    $region47: #{tpu_custom_call.1} parent=1 // pred_check_branch
      %147 = sbr.rel (0) target = $region49
    $region48: #{tpu_custom_call.1} parent=1 // pred_region
      %s149 = ssub.s32 32, 32
      %150 = vsyncadd [#allocation21], %s149
      %s152 = sshll.u32 [#allocation20], 4
      %s153 = int_to_ptr.vmem [resolvable:$true] %s152
      %155 = dma.hbm_to_vmem [thread:$0]  %s11, 32, %s153, [#allocation21]
    $region49: #{tpu_custom_call.1} parent=1 // pred_fallthru
      _
    // Predicated region
    $region50: #{tpu_custom_call.1} parent=1 // pred_check
      _
    $region51: #{tpu_custom_call.1} parent=1 // pred_check_branch
      %157 = sbr.rel (0) target = $region53
    $region52: #{tpu_custom_call.1} parent=1 // pred_region
      %s159 = ssub.s32 32, 32
      %160 = vsyncadd [#allocation21], %s159
      %s162 = sshll.u32 [#allocation22], 4
      %s163 = int_to_ptr.vmem [resolvable:$true] %s162
      %165 = dma.hbm_to_vmem [thread:$0]  %s12, 32, %s163, [#allocation21]
    $region53: #{tpu_custom_call.1} parent=1 // pred_fallthru
      _
    // Predicated region
    $region54: #{tpu_custom_call.1} parent=1 // pred_check
      _
    $region55: #{tpu_custom_call.1} parent=1 // pred_check_branch
      %167 = sbr.rel (0) target = $region57
    $region56: #{tpu_custom_call.1} parent=1 // pred_region
      %s169 = ssub.s32 32, 32
      %170 = vsyncadd [#allocation24], %s169
      %s172 = sshll.u32 [#allocation23], 4
      %s173 = int_to_ptr.vmem [resolvable:$true] %s172
      %175 = dma.hbm_to_vmem [thread:$0]  %s13, 32, %s173, [#allocation24]
    $region57: #{tpu_custom_call.1} parent=1 // pred_fallthru
      _
    // Predicated region
    $region58: #{tpu_custom_call.1} parent=1 // pred_check
      _
    $region59: #{tpu_custom_call.1} parent=1 // pred_check_branch
      %177 = sbr.rel (0) target = $region61
    $region60: #{tpu_custom_call.1} parent=1 // pred_region
      %178 = dma.done [#allocation3], 2304
    $region61: #{tpu_custom_call.1} parent=1 // pred_fallthru
      _
    // Predicated region
    $region62: #{tpu_custom_call.1} parent=1 // pred_check
      _
    $region63: #{tpu_custom_call.1} parent=1 // pred_check_branch
      %180 = sbr.rel (0) target = $region65
    $region64: #{tpu_custom_call.1} parent=1 // pred_region
      %181 = dma.done [#allocation6], 256
    $region65: #{tpu_custom_call.1} parent=1 // pred_fallthru
      _
    // Predicated region
    $region66: #{tpu_custom_call.1} parent=1 // pred_check
      _
    $region67: #{tpu_custom_call.1} parent=1 // pred_check_branch
      %183 = sbr.rel (0) target = $region69
    $region68: #{tpu_custom_call.1} parent=1 // pred_region
      %184 = dma.done [#allocation6], 73728
    $region69: #{tpu_custom_call.1} parent=1 // pred_fallthru
      _
    // Predicated region
    $region70: #{tpu_custom_call.1} parent=1 // pred_check
      _
    $region71: #{tpu_custom_call.1} parent=1 // pred_check_branch
      %186 = sbr.rel (0) target = $region73
    $region72: #{tpu_custom_call.1} parent=1 // pred_region
      %187 = dma.done [#allocation9], 32
    $region73: #{tpu_custom_call.1} parent=1 // pred_fallthru
      _
    // Predicated region
    $region74: #{tpu_custom_call.1} parent=1 // pred_check
      _
    $region75: #{tpu_custom_call.1} parent=1 // pred_check_branch
      %189 = sbr.rel (0) target = $region77
    $region76: #{tpu_custom_call.1} parent=1 // pred_region
      %190 = dma.done [#allocation9], 4096
    $region77: #{tpu_custom_call.1} parent=1 // pred_fallthru
      _
    // Predicated region
    $region78: #{tpu_custom_call.1} parent=1 // pred_check
      _
    $region79: #{tpu_custom_call.1} parent=1 // pred_check_branch
      %192 = sbr.rel (0) target = $region81
    $region80: #{tpu_custom_call.1} parent=1 // pred_region
      %193 = dma.done [#allocation12], 32
    $region81: #{tpu_custom_call.1} parent=1 // pred_fallthru
      _
    // Predicated region
    $region82: #{tpu_custom_call.1} parent=1 // pred_check
      _
    $region83: #{tpu_custom_call.1} parent=1 // pred_check_branch
      %195 = sbr.rel (0) target = $region85
    $region84: #{tpu_custom_call.1} parent=1 // pred_region
      %196 = dma.done [#allocation12], 32
    $region85: #{tpu_custom_call.1} parent=1 // pred_fallthru
      _
    // Predicated region
    $region86: #{tpu_custom_call.1} parent=1 // pred_check
      _
    $region87: #{tpu_custom_call.1} parent=1 // pred_check_branch
      %198 = sbr.rel (0) target = $region89
    $region88: #{tpu_custom_call.1} parent=1 // pred_region
      %199 = dma.done [#allocation15], 32
    $region89: #{tpu_custom_call.1} parent=1 // pred_fallthru
      _
    // Predicated region
    $region90: #{tpu_custom_call.1} parent=1 // pred_check
      _
    $region91: #{tpu_custom_call.1} parent=1 // pred_check_branch
      %201 = sbr.rel (0) target = $region93
    $region92: #{tpu_custom_call.1} parent=1 // pred_region
      %202 = dma.done [#allocation15], 8192
    $region93: #{tpu_custom_call.1} parent=1 // pred_fallthru
      _
    // Predicated region
    $region94: #{tpu_custom_call.1} parent=1 // pred_check
      _
    $region95: #{tpu_custom_call.1} parent=1 // pred_check_branch
      %204 = sbr.rel (0) target = $region97
    $region96: #{tpu_custom_call.1} parent=1 // pred_region
      %205 = dma.done [#allocation18], 32
    $region97: #{tpu_custom_call.1} parent=1 // pred_fallthru
      _
    // Predicated region
    $region98: #{tpu_custom_call.1} parent=1 // pred_check
      _
    $region99: #{tpu_custom_call.1} parent=1 // pred_check_branch
      %207 = sbr.rel (0) target = $region101
    $region100: #{tpu_custom_call.1} parent=1 // pred_region
      %208 = dma.done [#allocation18], 4096
    $region101: #{tpu_custom_call.1} parent=1 // pred_fallthru
      _
    // Predicated region
    $region102: #{tpu_custom_call.1} parent=1 // pred_check
      _
    $region103: #{tpu_custom_call.1} parent=1 // pred_check_branch
      %210 = sbr.rel (0) target = $region105
    $region104: #{tpu_custom_call.1} parent=1 // pred_region
      %211 = dma.done [#allocation21], 32
    $region105: #{tpu_custom_call.1} parent=1 // pred_fallthru
      _
    // Predicated region
    $region106: #{tpu_custom_call.1} parent=1 // pred_check
      _
    $region107: #{tpu_custom_call.1} parent=1 // pred_check_branch
      %213 = sbr.rel (0) target = $region109
    $region108: #{tpu_custom_call.1} parent=1 // pred_region
      %214 = dma.done [#allocation21], 32
    $region109: #{tpu_custom_call.1} parent=1 // pred_fallthru
      _
    // Predicated region
    $region110: #{tpu_custom_call.1} parent=1 // pred_check
      _
    $region111: #{tpu_custom_call.1} parent=1 // pred_check_branch
      %216 = sbr.rel (0) target = $region113
    $region112: #{tpu_custom_call.1} parent=1 // pred_region
      %217 = dma.done [#allocation24], 32
    $region113: #{tpu_custom_call.1} parent=1 // pred_fallthru
      _
    %v218 = vld [vmem:[#allocation2] sm:$0xff]
    %v219 = vld [vmem:[#allocation2 + $0x8] sm:$0xff]
    %v220 = vld [vmem:[#allocation2 + $0x10] sm:$0xff]
    %v221 = vld [vmem:[#allocation2 + $0x18] sm:$0xff]
    %v222 = vld [vmem:[#allocation2 + $0x20] sm:$0xff]
    %v223 = vld [vmem:[#allocation2 + $0x28] sm:$0xff]
    %v224 = vld [vmem:[#allocation2 + $0x30] sm:$0xff]
    %v225 = vld [vmem:[#allocation2 + $0x38] sm:$0xff]
    %v226 = vld [vmem:[#allocation2 + $0x40] sm:$0xff]
    %v227 = vld [vmem:[#allocation2 + $0x48] sm:$0xff]
    %v228 = vld [vmem:[#allocation2 + $0x50] sm:$0xff]
    %v229 = vld [vmem:[#allocation2 + $0x58] sm:$0xff]
    %v230 = vld [vmem:[#allocation2 + $0x60] sm:$0xff]
    %v231 = vld [vmem:[#allocation2 + $0x68] sm:$0xff]
    %v232 = vld [vmem:[#allocation2 + $0x70] sm:$0xff]
    %v233 = vld [vmem:[#allocation2 + $0x78] sm:$0xff]
    %v234 = vld [vmem:[#allocation2 + $0x80] sm:$0xff]
    %v235 = vld [vmem:[#allocation2 + $0x88] sm:$0xff]
    %v236 = vld [vmem:[#allocation7] sm:$0xff]
    %v237 = vld [vmem:[#allocation7 + $0x8] sm:$0xff]
    %v238 = vld [vmem:[#allocation7 + $0x10] sm:$0xff]
    %v239 = vld [vmem:[#allocation7 + $0x18] sm:$0xff]
    %v240 = vld [vmem:[#allocation7 + $0x20] sm:$0xff]
    %v241 = vld [vmem:[#allocation7 + $0x28] sm:$0xff]
    %v242 = vld [vmem:[#allocation7 + $0x30] sm:$0xff]
    %v243 = vld [vmem:[#allocation7 + $0x38] sm:$0xff]
    %v244 = vld [vmem:[#allocation7 + $0x40] sm:$0xff]
    %v245 = vld [vmem:[#allocation7 + $0x48] sm:$0xff]
    %v246 = vld [vmem:[#allocation7 + $0x50] sm:$0xff]
    %v247 = vld [vmem:[#allocation7 + $0x58] sm:$0xff]
    %v248 = vld [vmem:[#allocation7 + $0x60] sm:$0xff]
    %v249 = vld [vmem:[#allocation7 + $0x68] sm:$0xff]
    %v250 = vld [vmem:[#allocation7 + $0x70] sm:$0xff]
    %v251 = vld [vmem:[#allocation7 + $0x78] sm:$0xff]
    %v252 = vld [vmem:[#allocation7 + $0x80] sm:$0xff]
    %v253 = vld [vmem:[#allocation7 + $0x88] sm:$0xff]
    %v254 = vld [vmem:[#allocation7 + $0x90] sm:$0xff]
    %v255 = vld [vmem:[#allocation7 + $0x98] sm:$0xff]
    %v256 = vld [vmem:[#allocation7 + $0xa0] sm:$0xff]
    %v257 = vld [vmem:[#allocation7 + $0xa8] sm:$0xff]
    %v258 = vld [vmem:[#allocation7 + $0xb0] sm:$0xff]
    %v259 = vld [vmem:[#allocation7 + $0xb8] sm:$0xff]
    %v260 = vld [vmem:[#allocation7 + $0xc0] sm:$0xff]
    %v261 = vld [vmem:[#allocation7 + $0xc8] sm:$0xff]
    %v262 = vld [vmem:[#allocation7 + $0xd0] sm:$0xff]
    %v263 = vld [vmem:[#allocation7 + $0xd8] sm:$0xff]
    %v264 = vld [vmem:[#allocation7 + $0xe0] sm:$0xff]
    %v265 = vld [vmem:[#allocation7 + $0xe8] sm:$0xff]
    %v266 = vld [vmem:[#allocation7 + $0xf0] sm:$0xff]
    %v267 = vld [vmem:[#allocation7 + $0xf8] sm:$0xff]
    %v268 = vld [vmem:[#allocation7 + $0x100] sm:$0xff]
    %v269 = vld [vmem:[#allocation7 + $0x108] sm:$0xff]
    %v270 = vld [vmem:[#allocation7 + $0x110] sm:$0xff]
    %v271 = vld [vmem:[#allocation7 + $0x118] sm:$0xff]
    %v272 = vld [vmem:[#allocation7 + $0x120] sm:$0xff]
    %v273 = vld [vmem:[#allocation7 + $0x128] sm:$0xff]
    %v274 = vld [vmem:[#allocation7 + $0x130] sm:$0xff]
    %v275 = vld [vmem:[#allocation7 + $0x138] sm:$0xff]
    %v276 = vld [vmem:[#allocation7 + $0x140] sm:$0xff]
    %v277 = vld [vmem:[#allocation7 + $0x148] sm:$0xff]
    %v278 = vld [vmem:[#allocation7 + $0x150] sm:$0xff]
    %v279 = vld [vmem:[#allocation7 + $0x158] sm:$0xff]
    %v280 = vld [vmem:[#allocation7 + $0x160] sm:$0xff]
    %v281 = vld [vmem:[#allocation7 + $0x168] sm:$0xff]
    %v282 = vld [vmem:[#allocation7 + $0x170] sm:$0xff]
    %v283 = vld [vmem:[#allocation7 + $0x178] sm:$0xff]
    %v284 = vld [vmem:[#allocation7 + $0x180] sm:$0xff]
    %v285 = vld [vmem:[#allocation7 + $0x188] sm:$0xff]
    %v286 = vld [vmem:[#allocation7 + $0x190] sm:$0xff]
    %v287 = vld [vmem:[#allocation7 + $0x198] sm:$0xff]
    %v288 = vld [vmem:[#allocation7 + $0x1a0] sm:$0xff]
    %v289 = vld [vmem:[#allocation7 + $0x1a8] sm:$0xff]
    %v290 = vld [vmem:[#allocation7 + $0x1b0] sm:$0xff]
    %v291 = vld [vmem:[#allocation7 + $0x1b8] sm:$0xff]
    %v292 = vld [vmem:[#allocation7 + $0x1c0] sm:$0xff]
    %v293 = vld [vmem:[#allocation7 + $0x1c8] sm:$0xff]
    %v294 = vld [vmem:[#allocation7 + $0x1d0] sm:$0xff]
    %v295 = vld [vmem:[#allocation7 + $0x1d8] sm:$0xff]
    %v296 = vld [vmem:[#allocation7 + $0x1e0] sm:$0xff]
    %v297 = vld [vmem:[#allocation7 + $0x1e8] sm:$0xff]
    %v298 = vld [vmem:[#allocation7 + $0x1f0] sm:$0xff]
    %v299 = vld [vmem:[#allocation7 + $0x1f8] sm:$0xff]
    %v300 = vld [vmem:[#allocation7 + $0x200] sm:$0xff]
    %v301 = vld [vmem:[#allocation7 + $0x208] sm:$0xff]
    %v302 = vld [vmem:[#allocation7 + $0x210] sm:$0xff]
    %v303 = vld [vmem:[#allocation7 + $0x218] sm:$0xff]
    %v304 = vld [vmem:[#allocation7 + $0x220] sm:$0xff]
    %v305 = vld [vmem:[#allocation7 + $0x228] sm:$0xff]
    %v306 = vld [vmem:[#allocation7 + $0x230] sm:$0xff]
    %v307 = vld [vmem:[#allocation7 + $0x238] sm:$0xff]
    %v308 = vld [vmem:[#allocation7 + $0x240] sm:$0xff]
    %v309 = vld [vmem:[#allocation7 + $0x248] sm:$0xff]
    %v310 = vld [vmem:[#allocation7 + $0x250] sm:$0xff]
    %v311 = vld [vmem:[#allocation7 + $0x258] sm:$0xff]
    %v312 = vld [vmem:[#allocation7 + $0x260] sm:$0xff]
    %v313 = vld [vmem:[#allocation7 + $0x268] sm:$0xff]
    %v314 = vld [vmem:[#allocation7 + $0x270] sm:$0xff]
    %v315 = vld [vmem:[#allocation7 + $0x278] sm:$0xff]
    %v316 = vld [vmem:[#allocation7 + $0x280] sm:$0xff]
    %v317 = vld [vmem:[#allocation7 + $0x288] sm:$0xff]
    %v318 = vld [vmem:[#allocation7 + $0x290] sm:$0xff]
    %v319 = vld [vmem:[#allocation7 + $0x298] sm:$0xff]
    %v320 = vld [vmem:[#allocation7 + $0x2a0] sm:$0xff]
    %v321 = vld [vmem:[#allocation7 + $0x2a8] sm:$0xff]
    %v322 = vld [vmem:[#allocation7 + $0x2b0] sm:$0xff]
    %v323 = vld [vmem:[#allocation7 + $0x2b8] sm:$0xff]
    %v324 = vld [vmem:[#allocation7 + $0x2c0] sm:$0xff]
    %v325 = vld [vmem:[#allocation7 + $0x2c8] sm:$0xff]
    %v326 = vld [vmem:[#allocation7 + $0x2d0] sm:$0xff]
    %v327 = vld [vmem:[#allocation7 + $0x2d8] sm:$0xff]
    %v328 = vld [vmem:[#allocation7 + $0x2e0] sm:$0xff]
    %v329 = vld [vmem:[#allocation7 + $0x2e8] sm:$0xff]
    %v330 = vld [vmem:[#allocation7 + $0x2f0] sm:$0xff]
    %v331 = vld [vmem:[#allocation7 + $0x2f8] sm:$0xff]
    %v332 = vld [vmem:[#allocation7 + $0x300] sm:$0xff]
    %v333 = vld [vmem:[#allocation7 + $0x308] sm:$0xff]
    %v334 = vld [vmem:[#allocation7 + $0x310] sm:$0xff]
    %v335 = vld [vmem:[#allocation7 + $0x318] sm:$0xff]
    %v336 = vld [vmem:[#allocation7 + $0x320] sm:$0xff]
    %v337 = vld [vmem:[#allocation7 + $0x328] sm:$0xff]
    %v338 = vld [vmem:[#allocation7 + $0x330] sm:$0xff]
    %v339 = vld [vmem:[#allocation7 + $0x338] sm:$0xff]
    %v340 = vld [vmem:[#allocation7 + $0x340] sm:$0xff]
    %v341 = vld [vmem:[#allocation7 + $0x348] sm:$0xff]
    %v342 = vld [vmem:[#allocation7 + $0x350] sm:$0xff]
    %v343 = vld [vmem:[#allocation7 + $0x358] sm:$0xff]
    %v344 = vld [vmem:[#allocation7 + $0x360] sm:$0xff]
    %v345 = vld [vmem:[#allocation7 + $0x368] sm:$0xff]
    %v346 = vld [vmem:[#allocation7 + $0x370] sm:$0xff]
    %v347 = vld [vmem:[#allocation7 + $0x378] sm:$0xff]
    %v348 = vld [vmem:[#allocation7 + $0x380] sm:$0xff]
    %v349 = vld [vmem:[#allocation7 + $0x388] sm:$0xff]
    %v350 = vld [vmem:[#allocation7 + $0x390] sm:$0xff]
    %v351 = vld [vmem:[#allocation7 + $0x398] sm:$0xff]
    %v352 = vld [vmem:[#allocation7 + $0x3a0] sm:$0xff]
    %v353 = vld [vmem:[#allocation7 + $0x3a8] sm:$0xff]
    %v354 = vld [vmem:[#allocation7 + $0x3b0] sm:$0xff]
    %v355 = vld [vmem:[#allocation7 + $0x3b8] sm:$0xff]
    %v356 = vld [vmem:[#allocation7 + $0x3c0] sm:$0xff]
    %v357 = vld [vmem:[#allocation7 + $0x3c8] sm:$0xff]
    %v358 = vld [vmem:[#allocation7 + $0x3d0] sm:$0xff]
    %v359 = vld [vmem:[#allocation7 + $0x3d8] sm:$0xff]
    %v360 = vld [vmem:[#allocation7 + $0x3e0] sm:$0xff]
    %v361 = vld [vmem:[#allocation7 + $0x3e8] sm:$0xff]
    %v362 = vld [vmem:[#allocation7 + $0x3f0] sm:$0xff]
    %v363 = vld [vmem:[#allocation7 + $0x3f8] sm:$0xff]
    %v364 = vld [vmem:[#allocation7 + $0x400] sm:$0xff]
    %v365 = vld [vmem:[#allocation7 + $0x408] sm:$0xff]
    %v366 = vld [vmem:[#allocation7 + $0x410] sm:$0xff]
    %v367 = vld [vmem:[#allocation7 + $0x418] sm:$0xff]
    %v368 = vld [vmem:[#allocation7 + $0x420] sm:$0xff]
    %v369 = vld [vmem:[#allocation7 + $0x428] sm:$0xff]
    %v370 = vld [vmem:[#allocation7 + $0x430] sm:$0xff]
    %v371 = vld [vmem:[#allocation7 + $0x438] sm:$0xff]
    %v372 = vld [vmem:[#allocation7 + $0x440] sm:$0xff]
    %v373 = vld [vmem:[#allocation7 + $0x448] sm:$0xff]
    %v374 = vld [vmem:[#allocation7 + $0x450] sm:$0xff]
    %v375 = vld [vmem:[#allocation7 + $0x458] sm:$0xff]
    %v376 = vld [vmem:[#allocation7 + $0x460] sm:$0xff]
    %v377 = vld [vmem:[#allocation7 + $0x468] sm:$0xff]
    %v378 = vld [vmem:[#allocation7 + $0x470] sm:$0xff]
    %v379 = vld [vmem:[#allocation7 + $0x478] sm:$0xff]
    %v380 = vld [vmem:[#allocation7 + $0x480] sm:$0xff]
    %v381 = vld [vmem:[#allocation7 + $0x488] sm:$0xff]
    %v382 = vld [vmem:[#allocation7 + $0x490] sm:$0xff]
    %v383 = vld [vmem:[#allocation7 + $0x498] sm:$0xff]
    %v384 = vld [vmem:[#allocation7 + $0x4a0] sm:$0xff]
    %v385 = vld [vmem:[#allocation7 + $0x4a8] sm:$0xff]
    %v386 = vld [vmem:[#allocation7 + $0x4b0] sm:$0xff]
    %v387 = vld [vmem:[#allocation7 + $0x4b8] sm:$0xff]
    %v388 = vld [vmem:[#allocation7 + $0x4c0] sm:$0xff]
    %v389 = vld [vmem:[#allocation7 + $0x4c8] sm:$0xff]
    %v390 = vld [vmem:[#allocation7 + $0x4d0] sm:$0xff]
    %v391 = vld [vmem:[#allocation7 + $0x4d8] sm:$0xff]
    %v392 = vld [vmem:[#allocation7 + $0x4e0] sm:$0xff]
    %v393 = vld [vmem:[#allocation7 + $0x4e8] sm:$0xff]
    %v394 = vld [vmem:[#allocation7 + $0x4f0] sm:$0xff]
    %v395 = vld [vmem:[#allocation7 + $0x4f8] sm:$0xff]
    %v396 = vld [vmem:[#allocation7 + $0x500] sm:$0xff]
    %v397 = vld [vmem:[#allocation7 + $0x508] sm:$0xff]
    %v398 = vld [vmem:[#allocation7 + $0x510] sm:$0xff]
    %v399 = vld [vmem:[#allocation7 + $0x518] sm:$0xff]
    %v400 = vld [vmem:[#allocation7 + $0x520] sm:$0xff]
    %v401 = vld [vmem:[#allocation7 + $0x528] sm:$0xff]
    %v402 = vld [vmem:[#allocation7 + $0x530] sm:$0xff]
    %v403 = vld [vmem:[#allocation7 + $0x538] sm:$0xff]
    %v404 = vld [vmem:[#allocation7 + $0x540] sm:$0xff]
    %v405 = vld [vmem:[#allocation7 + $0x548] sm:$0xff]
    %v406 = vld [vmem:[#allocation7 + $0x550] sm:$0xff]
    %v407 = vld [vmem:[#allocation7 + $0x558] sm:$0xff]
    %v408 = vld [vmem:[#allocation7 + $0x560] sm:$0xff]
    %v409 = vld [vmem:[#allocation7 + $0x568] sm:$0xff]
    %v410 = vld [vmem:[#allocation7 + $0x570] sm:$0xff]
    %v411 = vld [vmem:[#allocation7 + $0x578] sm:$0xff]
    %v412 = vld [vmem:[#allocation7 + $0x580] sm:$0xff]
    %v413 = vld [vmem:[#allocation7 + $0x588] sm:$0xff]
    %v414 = vld [vmem:[#allocation7 + $0x590] sm:$0xff]
    %v415 = vld [vmem:[#allocation7 + $0x598] sm:$0xff]
    %v416 = vld [vmem:[#allocation7 + $0x5a0] sm:$0xff]
    %v417 = vld [vmem:[#allocation7 + $0x5a8] sm:$0xff]
    %v418 = vld [vmem:[#allocation7 + $0x5b0] sm:$0xff]
    %v419 = vld [vmem:[#allocation7 + $0x5b8] sm:$0xff]
    %v420 = vld [vmem:[#allocation7 + $0x5c0] sm:$0xff]
    %v421 = vld [vmem:[#allocation7 + $0x5c8] sm:$0xff]
    %v422 = vld [vmem:[#allocation7 + $0x5d0] sm:$0xff]
    %v423 = vld [vmem:[#allocation7 + $0x5d8] sm:$0xff]
    %v424 = vld [vmem:[#allocation7 + $0x5e0] sm:$0xff]
    %v425 = vld [vmem:[#allocation7 + $0x5e8] sm:$0xff]
    %v426 = vld [vmem:[#allocation7 + $0x5f0] sm:$0xff]
    %v427 = vld [vmem:[#allocation7 + $0x5f8] sm:$0xff]
    %v428 = vld [vmem:[#allocation7 + $0x600] sm:$0xff]
    %v429 = vld [vmem:[#allocation7 + $0x608] sm:$0xff]
    %v430 = vld [vmem:[#allocation7 + $0x610] sm:$0xff]
    %v431 = vld [vmem:[#allocation7 + $0x618] sm:$0xff]
    %v432 = vld [vmem:[#allocation7 + $0x620] sm:$0xff]
    %v433 = vld [vmem:[#allocation7 + $0x628] sm:$0xff]
    %v434 = vld [vmem:[#allocation7 + $0x630] sm:$0xff]
    %v435 = vld [vmem:[#allocation7 + $0x638] sm:$0xff]
    %v436 = vld [vmem:[#allocation7 + $0x640] sm:$0xff]
    %v437 = vld [vmem:[#allocation7 + $0x648] sm:$0xff]
    %v438 = vld [vmem:[#allocation7 + $0x650] sm:$0xff]
    %v439 = vld [vmem:[#allocation7 + $0x658] sm:$0xff]
    %v440 = vld [vmem:[#allocation7 + $0x660] sm:$0xff]
    %v441 = vld [vmem:[#allocation7 + $0x668] sm:$0xff]
    %v442 = vld [vmem:[#allocation7 + $0x670] sm:$0xff]
    %v443 = vld [vmem:[#allocation7 + $0x678] sm:$0xff]
    %v444 = vld [vmem:[#allocation7 + $0x680] sm:$0xff]
    %v445 = vld [vmem:[#allocation7 + $0x688] sm:$0xff]
    %v446 = vld [vmem:[#allocation7 + $0x690] sm:$0xff]
    %v447 = vld [vmem:[#allocation7 + $0x698] sm:$0xff]
    %v448 = vld [vmem:[#allocation7 + $0x6a0] sm:$0xff]
    %v449 = vld [vmem:[#allocation7 + $0x6a8] sm:$0xff]
    %v450 = vld [vmem:[#allocation7 + $0x6b0] sm:$0xff]
    %v451 = vld [vmem:[#allocation7 + $0x6b8] sm:$0xff]
    %v452 = vld [vmem:[#allocation7 + $0x6c0] sm:$0xff]
    %v453 = vld [vmem:[#allocation7 + $0x6c8] sm:$0xff]
    %v454 = vld [vmem:[#allocation7 + $0x6d0] sm:$0xff]
    %v455 = vld [vmem:[#allocation7 + $0x6d8] sm:$0xff]
    %v456 = vld [vmem:[#allocation7 + $0x6e0] sm:$0xff]
    %v457 = vld [vmem:[#allocation7 + $0x6e8] sm:$0xff]
    %v458 = vld [vmem:[#allocation7 + $0x6f0] sm:$0xff]
    %v459 = vld [vmem:[#allocation7 + $0x6f8] sm:$0xff]
    %v460 = vld [vmem:[#allocation7 + $0x700] sm:$0xff]
    %v461 = vld [vmem:[#allocation7 + $0x708] sm:$0xff]
    %v462 = vld [vmem:[#allocation7 + $0x710] sm:$0xff]
    %v463 = vld [vmem:[#allocation7 + $0x718] sm:$0xff]
    %v464 = vld [vmem:[#allocation7 + $0x720] sm:$0xff]
    %v465 = vld [vmem:[#allocation7 + $0x728] sm:$0xff]
    %v466 = vld [vmem:[#allocation7 + $0x730] sm:$0xff]
    %v467 = vld [vmem:[#allocation7 + $0x738] sm:$0xff]
    %v468 = vld [vmem:[#allocation7 + $0x740] sm:$0xff]
    %v469 = vld [vmem:[#allocation7 + $0x748] sm:$0xff]
    %v470 = vld [vmem:[#allocation7 + $0x750] sm:$0xff]
    %v471 = vld [vmem:[#allocation7 + $0x758] sm:$0xff]
    %v472 = vld [vmem:[#allocation7 + $0x760] sm:$0xff]
    %v473 = vld [vmem:[#allocation7 + $0x768] sm:$0xff]
    %v474 = vld [vmem:[#allocation7 + $0x770] sm:$0xff]
    %v475 = vld [vmem:[#allocation7 + $0x778] sm:$0xff]
    %v476 = vld [vmem:[#allocation7 + $0x780] sm:$0xff]
    %v477 = vld [vmem:[#allocation7 + $0x788] sm:$0xff]
    %v478 = vld [vmem:[#allocation7 + $0x790] sm:$0xff]
    %v479 = vld [vmem:[#allocation7 + $0x798] sm:$0xff]
    %v480 = vld [vmem:[#allocation7 + $0x7a0] sm:$0xff]
    %v481 = vld [vmem:[#allocation7 + $0x7a8] sm:$0xff]
    %v482 = vld [vmem:[#allocation7 + $0x7b0] sm:$0xff]
    %v483 = vld [vmem:[#allocation7 + $0x7b8] sm:$0xff]
    %v484 = vld [vmem:[#allocation7 + $0x7c0] sm:$0xff]
    %v485 = vld [vmem:[#allocation7 + $0x7c8] sm:$0xff]
    %v486 = vld [vmem:[#allocation7 + $0x7d0] sm:$0xff]
    %v487 = vld [vmem:[#allocation7 + $0x7d8] sm:$0xff]
    %v488 = vld [vmem:[#allocation7 + $0x7e0] sm:$0xff]
    %v489 = vld [vmem:[#allocation7 + $0x7e8] sm:$0xff]
    %v490 = vld [vmem:[#allocation7 + $0x7f0] sm:$0xff]
    %v491 = vld [vmem:[#allocation7 + $0x7f8] sm:$0xff]
    %v492 = vld [vmem:[#allocation7 + $0x800] sm:$0xff]
    %v493 = vld [vmem:[#allocation7 + $0x808] sm:$0xff]
    %v494 = vld [vmem:[#allocation7 + $0x810] sm:$0xff]
    %v495 = vld [vmem:[#allocation7 + $0x818] sm:$0xff]
    %v496 = vld [vmem:[#allocation7 + $0x820] sm:$0xff]
    %v497 = vld [vmem:[#allocation7 + $0x828] sm:$0xff]
    %v498 = vld [vmem:[#allocation7 + $0x830] sm:$0xff]
    %v499 = vld [vmem:[#allocation7 + $0x838] sm:$0xff]
    %v500 = vld [vmem:[#allocation7 + $0x840] sm:$0xff]
    %v501 = vld [vmem:[#allocation7 + $0x848] sm:$0xff]
    %v502 = vld [vmem:[#allocation7 + $0x850] sm:$0xff]
    %v503 = vld [vmem:[#allocation7 + $0x858] sm:$0xff]
    %v504 = vld [vmem:[#allocation7 + $0x860] sm:$0xff]
    %v505 = vld [vmem:[#allocation7 + $0x868] sm:$0xff]
    %v506 = vld [vmem:[#allocation7 + $0x870] sm:$0xff]
    %v507 = vld [vmem:[#allocation7 + $0x878] sm:$0xff]
    %v508 = vld [vmem:[#allocation7 + $0x880] sm:$0xff]
    %v509 = vld [vmem:[#allocation7 + $0x888] sm:$0xff]
    %v510 = vld [vmem:[#allocation7 + $0x890] sm:$0xff]
    %v511 = vld [vmem:[#allocation7 + $0x898] sm:$0xff]
    %v512 = vld [vmem:[#allocation7 + $0x8a0] sm:$0xff]
    %v513 = vld [vmem:[#allocation7 + $0x8a8] sm:$0xff]
    %v514 = vld [vmem:[#allocation7 + $0x8b0] sm:$0xff]
    %v515 = vld [vmem:[#allocation7 + $0x8b8] sm:$0xff]
    %v516 = vld [vmem:[#allocation7 + $0x8c0] sm:$0xff]
    %v517 = vld [vmem:[#allocation7 + $0x8c8] sm:$0xff]
    %v518 = vld [vmem:[#allocation7 + $0x8d0] sm:$0xff]
    %v519 = vld [vmem:[#allocation7 + $0x8d8] sm:$0xff]
    %v520 = vld [vmem:[#allocation7 + $0x8e0] sm:$0xff]
    %v521 = vld [vmem:[#allocation7 + $0x8e8] sm:$0xff]
    %v522 = vld [vmem:[#allocation7 + $0x8f0] sm:$0xff]
    %v523 = vld [vmem:[#allocation7 + $0x8f8] sm:$0xff]
    %v524 = vld [vmem:[#allocation7 + $0x900] sm:$0xff]
    %v525 = vld [vmem:[#allocation7 + $0x908] sm:$0xff]
    %v526 = vld [vmem:[#allocation7 + $0x910] sm:$0xff]
    %v527 = vld [vmem:[#allocation7 + $0x918] sm:$0xff]
    %v528 = vld [vmem:[#allocation7 + $0x920] sm:$0xff]
    %v529 = vld [vmem:[#allocation7 + $0x928] sm:$0xff]
    %v530 = vld [vmem:[#allocation7 + $0x930] sm:$0xff]
    %v531 = vld [vmem:[#allocation7 + $0x938] sm:$0xff]
    %v532 = vld [vmem:[#allocation7 + $0x940] sm:$0xff]
    %v533 = vld [vmem:[#allocation7 + $0x948] sm:$0xff]
    %v534 = vld [vmem:[#allocation7 + $0x950] sm:$0xff]
    %v535 = vld [vmem:[#allocation7 + $0x958] sm:$0xff]
    %v536 = vld [vmem:[#allocation7 + $0x960] sm:$0xff]
    %v537 = vld [vmem:[#allocation7 + $0x968] sm:$0xff]
    %v538 = vld [vmem:[#allocation7 + $0x970] sm:$0xff]
    %v539 = vld [vmem:[#allocation7 + $0x978] sm:$0xff]
    %v540 = vld [vmem:[#allocation7 + $0x980] sm:$0xff]
    %v541 = vld [vmem:[#allocation7 + $0x988] sm:$0xff]
    %v542 = vld [vmem:[#allocation7 + $0x990] sm:$0xff]
    %v543 = vld [vmem:[#allocation7 + $0x998] sm:$0xff]
    %v544 = vld [vmem:[#allocation7 + $0x9a0] sm:$0xff]
    %v545 = vld [vmem:[#allocation7 + $0x9a8] sm:$0xff]
    %v546 = vld [vmem:[#allocation7 + $0x9b0] sm:$0xff]
    %v547 = vld [vmem:[#allocation7 + $0x9b8] sm:$0xff]
    %v548 = vld [vmem:[#allocation7 + $0x9c0] sm:$0xff]
    %v549 = vld [vmem:[#allocation7 + $0x9c8] sm:$0xff]
    %v550 = vld [vmem:[#allocation7 + $0x9d0] sm:$0xff]
    %v551 = vld [vmem:[#allocation7 + $0x9d8] sm:$0xff]
    %v552 = vld [vmem:[#allocation7 + $0x9e0] sm:$0xff]
    %v553 = vld [vmem:[#allocation7 + $0x9e8] sm:$0xff]
    %v554 = vld [vmem:[#allocation7 + $0x9f0] sm:$0xff]
    %v555 = vld [vmem:[#allocation7 + $0x9f8] sm:$0xff]
    %v556 = vld [vmem:[#allocation7 + $0xa00] sm:$0xff]
    %v557 = vld [vmem:[#allocation7 + $0xa08] sm:$0xff]
    %v558 = vld [vmem:[#allocation7 + $0xa10] sm:$0xff]
    %v559 = vld [vmem:[#allocation7 + $0xa18] sm:$0xff]
    %v560 = vld [vmem:[#allocation7 + $0xa20] sm:$0xff]
    %v561 = vld [vmem:[#allocation7 + $0xa28] sm:$0xff]
    %v562 = vld [vmem:[#allocation7 + $0xa30] sm:$0xff]
    %v563 = vld [vmem:[#allocation7 + $0xa38] sm:$0xff]
    %v564 = vld [vmem:[#allocation7 + $0xa40] sm:$0xff]
    %v565 = vld [vmem:[#allocation7 + $0xa48] sm:$0xff]
    %v566 = vld [vmem:[#allocation7 + $0xa50] sm:$0xff]
    %v567 = vld [vmem:[#allocation7 + $0xa58] sm:$0xff]
    %v568 = vld [vmem:[#allocation7 + $0xa60] sm:$0xff]
    %v569 = vld [vmem:[#allocation7 + $0xa68] sm:$0xff]
    %v570 = vld [vmem:[#allocation7 + $0xa70] sm:$0xff]
    %v571 = vld [vmem:[#allocation7 + $0xa78] sm:$0xff]
    %v572 = vld [vmem:[#allocation7 + $0xa80] sm:$0xff]
    %v573 = vld [vmem:[#allocation7 + $0xa88] sm:$0xff]
    %v574 = vld [vmem:[#allocation7 + $0xa90] sm:$0xff]
    %v575 = vld [vmem:[#allocation7 + $0xa98] sm:$0xff]
    %v576 = vld [vmem:[#allocation7 + $0xaa0] sm:$0xff]
    %v577 = vld [vmem:[#allocation7 + $0xaa8] sm:$0xff]
    %v578 = vld [vmem:[#allocation7 + $0xab0] sm:$0xff]
    %v579 = vld [vmem:[#allocation7 + $0xab8] sm:$0xff]
    %v580 = vld [vmem:[#allocation7 + $0xac0] sm:$0xff]
    %v581 = vld [vmem:[#allocation7 + $0xac8] sm:$0xff]
    %v582 = vld [vmem:[#allocation7 + $0xad0] sm:$0xff]
    %v583 = vld [vmem:[#allocation7 + $0xad8] sm:$0xff]
    %v584 = vld [vmem:[#allocation7 + $0xae0] sm:$0xff]
    %v585 = vld [vmem:[#allocation7 + $0xae8] sm:$0xff]
    %v586 = vld [vmem:[#allocation7 + $0xaf0] sm:$0xff]
    %v587 = vld [vmem:[#allocation7 + $0xaf8] sm:$0xff]
    %v588 = vld [vmem:[#allocation7 + $0xb00] sm:$0xff]
    %v589 = vld [vmem:[#allocation7 + $0xb08] sm:$0xff]
    %v590 = vld [vmem:[#allocation7 + $0xb10] sm:$0xff]
    %v591 = vld [vmem:[#allocation7 + $0xb18] sm:$0xff]
    %v592 = vld [vmem:[#allocation7 + $0xb20] sm:$0xff]
    %v593 = vld [vmem:[#allocation7 + $0xb28] sm:$0xff]
    %v594 = vld [vmem:[#allocation7 + $0xb30] sm:$0xff]
    %v595 = vld [vmem:[#allocation7 + $0xb38] sm:$0xff]
    %v596 = vld [vmem:[#allocation7 + $0xb40] sm:$0xff]
    %v597 = vld [vmem:[#allocation7 + $0xb48] sm:$0xff]
    %v598 = vld [vmem:[#allocation7 + $0xb50] sm:$0xff]
    %v599 = vld [vmem:[#allocation7 + $0xb58] sm:$0xff]
    %v600 = vld [vmem:[#allocation7 + $0xb60] sm:$0xff]
    %v601 = vld [vmem:[#allocation7 + $0xb68] sm:$0xff]
    %v602 = vld [vmem:[#allocation7 + $0xb70] sm:$0xff]
    %v603 = vld [vmem:[#allocation7 + $0xb78] sm:$0xff]
    %v604 = vld [vmem:[#allocation7 + $0xb80] sm:$0xff]
    %v605 = vld [vmem:[#allocation7 + $0xb88] sm:$0xff]
    %v606 = vld [vmem:[#allocation7 + $0xb90] sm:$0xff]
    %v607 = vld [vmem:[#allocation7 + $0xb98] sm:$0xff]
    %v608 = vld [vmem:[#allocation7 + $0xba0] sm:$0xff]
    %v609 = vld [vmem:[#allocation7 + $0xba8] sm:$0xff]
    %v610 = vld [vmem:[#allocation7 + $0xbb0] sm:$0xff]
    %v611 = vld [vmem:[#allocation7 + $0xbb8] sm:$0xff]
    %v612 = vld [vmem:[#allocation7 + $0xbc0] sm:$0xff]
    %v613 = vld [vmem:[#allocation7 + $0xbc8] sm:$0xff]
    %v614 = vld [vmem:[#allocation7 + $0xbd0] sm:$0xff]
    %v615 = vld [vmem:[#allocation7 + $0xbd8] sm:$0xff]
    %v616 = vld [vmem:[#allocation7 + $0xbe0] sm:$0xff]
    %v617 = vld [vmem:[#allocation7 + $0xbe8] sm:$0xff]
    %v618 = vld [vmem:[#allocation7 + $0xbf0] sm:$0xff]
    %v619 = vld [vmem:[#allocation7 + $0xbf8] sm:$0xff]
    %v620 = vld [vmem:[#allocation7 + $0xc00] sm:$0xff]
    %v621 = vld [vmem:[#allocation7 + $0xc08] sm:$0xff]
    %v622 = vld [vmem:[#allocation7 + $0xc10] sm:$0xff]
    %v623 = vld [vmem:[#allocation7 + $0xc18] sm:$0xff]
    %v624 = vld [vmem:[#allocation7 + $0xc20] sm:$0xff]
    %v625 = vld [vmem:[#allocation7 + $0xc28] sm:$0xff]
    %v626 = vld [vmem:[#allocation7 + $0xc30] sm:$0xff]
    %v627 = vld [vmem:[#allocation7 + $0xc38] sm:$0xff]
    %v628 = vld [vmem:[#allocation7 + $0xc40] sm:$0xff]
    %v629 = vld [vmem:[#allocation7 + $0xc48] sm:$0xff]
    %v630 = vld [vmem:[#allocation7 + $0xc50] sm:$0xff]
    %v631 = vld [vmem:[#allocation7 + $0xc58] sm:$0xff]
    %v632 = vld [vmem:[#allocation7 + $0xc60] sm:$0xff]
    %v633 = vld [vmem:[#allocation7 + $0xc68] sm:$0xff]
    %v634 = vld [vmem:[#allocation7 + $0xc70] sm:$0xff]
    %v635 = vld [vmem:[#allocation7 + $0xc78] sm:$0xff]
    %v636 = vld [vmem:[#allocation7 + $0xc80] sm:$0xff]
    %v637 = vld [vmem:[#allocation7 + $0xc88] sm:$0xff]
    %v638 = vld [vmem:[#allocation7 + $0xc90] sm:$0xff]
    %v639 = vld [vmem:[#allocation7 + $0xc98] sm:$0xff]
    %v640 = vld [vmem:[#allocation7 + $0xca0] sm:$0xff]
    %v641 = vld [vmem:[#allocation7 + $0xca8] sm:$0xff]
    %v642 = vld [vmem:[#allocation7 + $0xcb0] sm:$0xff]
    %v643 = vld [vmem:[#allocation7 + $0xcb8] sm:$0xff]
    %v644 = vld [vmem:[#allocation7 + $0xcc0] sm:$0xff]
    %v645 = vld [vmem:[#allocation7 + $0xcc8] sm:$0xff]
    %v646 = vld [vmem:[#allocation7 + $0xcd0] sm:$0xff]
    %v647 = vld [vmem:[#allocation7 + $0xcd8] sm:$0xff]
    %v648 = vld [vmem:[#allocation7 + $0xce0] sm:$0xff]
    %v649 = vld [vmem:[#allocation7 + $0xce8] sm:$0xff]
    %v650 = vld [vmem:[#allocation7 + $0xcf0] sm:$0xff]
    %v651 = vld [vmem:[#allocation7 + $0xcf8] sm:$0xff]
    %v652 = vld [vmem:[#allocation7 + $0xd00] sm:$0xff]
    %v653 = vld [vmem:[#allocation7 + $0xd08] sm:$0xff]
    %v654 = vld [vmem:[#allocation7 + $0xd10] sm:$0xff]
    %v655 = vld [vmem:[#allocation7 + $0xd18] sm:$0xff]
    %v656 = vld [vmem:[#allocation7 + $0xd20] sm:$0xff]
    %v657 = vld [vmem:[#allocation7 + $0xd28] sm:$0xff]
    %v658 = vld [vmem:[#allocation7 + $0xd30] sm:$0xff]
    %v659 = vld [vmem:[#allocation7 + $0xd38] sm:$0xff]
    %v660 = vld [vmem:[#allocation7 + $0xd40] sm:$0xff]
    %v661 = vld [vmem:[#allocation7 + $0xd48] sm:$0xff]
    %v662 = vld [vmem:[#allocation7 + $0xd50] sm:$0xff]
    %v663 = vld [vmem:[#allocation7 + $0xd58] sm:$0xff]
    %v664 = vld [vmem:[#allocation7 + $0xd60] sm:$0xff]
    %v665 = vld [vmem:[#allocation7 + $0xd68] sm:$0xff]
    %v666 = vld [vmem:[#allocation7 + $0xd70] sm:$0xff]
    %v667 = vld [vmem:[#allocation7 + $0xd78] sm:$0xff]
    %v668 = vld [vmem:[#allocation7 + $0xd80] sm:$0xff]
    %v669 = vld [vmem:[#allocation7 + $0xd88] sm:$0xff]
    %v670 = vld [vmem:[#allocation7 + $0xd90] sm:$0xff]
    %v671 = vld [vmem:[#allocation7 + $0xd98] sm:$0xff]
    %v672 = vld [vmem:[#allocation7 + $0xda0] sm:$0xff]
    %v673 = vld [vmem:[#allocation7 + $0xda8] sm:$0xff]
    %v674 = vld [vmem:[#allocation7 + $0xdb0] sm:$0xff]
    %v675 = vld [vmem:[#allocation7 + $0xdb8] sm:$0xff]
    %v676 = vld [vmem:[#allocation7 + $0xdc0] sm:$0xff]
    %v677 = vld [vmem:[#allocation7 + $0xdc8] sm:$0xff]
    %v678 = vld [vmem:[#allocation7 + $0xdd0] sm:$0xff]
    %v679 = vld [vmem:[#allocation7 + $0xdd8] sm:$0xff]
    %v680 = vld [vmem:[#allocation7 + $0xde0] sm:$0xff]
    %v681 = vld [vmem:[#allocation7 + $0xde8] sm:$0xff]
    %v682 = vld [vmem:[#allocation7 + $0xdf0] sm:$0xff]
    %v683 = vld [vmem:[#allocation7 + $0xdf8] sm:$0xff]
    %v684 = vld [vmem:[#allocation7 + $0xe00] sm:$0xff]
    %v685 = vld [vmem:[#allocation7 + $0xe08] sm:$0xff]
    %v686 = vld [vmem:[#allocation7 + $0xe10] sm:$0xff]
    %v687 = vld [vmem:[#allocation7 + $0xe18] sm:$0xff]
    %v688 = vld [vmem:[#allocation7 + $0xe20] sm:$0xff]
    %v689 = vld [vmem:[#allocation7 + $0xe28] sm:$0xff]
    %v690 = vld [vmem:[#allocation7 + $0xe30] sm:$0xff]
    %v691 = vld [vmem:[#allocation7 + $0xe38] sm:$0xff]
    %v692 = vld [vmem:[#allocation7 + $0xe40] sm:$0xff]
    %v693 = vld [vmem:[#allocation7 + $0xe48] sm:$0xff]
    %v694 = vld [vmem:[#allocation7 + $0xe50] sm:$0xff]
    %v695 = vld [vmem:[#allocation7 + $0xe58] sm:$0xff]
    %v696 = vld [vmem:[#allocation7 + $0xe60] sm:$0xff]
    %v697 = vld [vmem:[#allocation7 + $0xe68] sm:$0xff]
    %v698 = vld [vmem:[#allocation7 + $0xe70] sm:$0xff]
    %v699 = vld [vmem:[#allocation7 + $0xe78] sm:$0xff]
    %v700 = vld [vmem:[#allocation7 + $0xe80] sm:$0xff]
    %v701 = vld [vmem:[#allocation7 + $0xe88] sm:$0xff]
    %v702 = vld [vmem:[#allocation7 + $0xe90] sm:$0xff]
    %v703 = vld [vmem:[#allocation7 + $0xe98] sm:$0xff]
    %v704 = vld [vmem:[#allocation7 + $0xea0] sm:$0xff]
    %v705 = vld [vmem:[#allocation7 + $0xea8] sm:$0xff]
    %v706 = vld [vmem:[#allocation7 + $0xeb0] sm:$0xff]
    %v707 = vld [vmem:[#allocation7 + $0xeb8] sm:$0xff]
    %v708 = vld [vmem:[#allocation7 + $0xec0] sm:$0xff]
    %v709 = vld [vmem:[#allocation7 + $0xec8] sm:$0xff]
    %v710 = vld [vmem:[#allocation7 + $0xed0] sm:$0xff]
    %v711 = vld [vmem:[#allocation7 + $0xed8] sm:$0xff]
    %v712 = vld [vmem:[#allocation7 + $0xee0] sm:$0xff]
    %v713 = vld [vmem:[#allocation7 + $0xee8] sm:$0xff]
    %v714 = vld [vmem:[#allocation7 + $0xef0] sm:$0xff]
    %v715 = vld [vmem:[#allocation7 + $0xef8] sm:$0xff]
    %v716 = vld [vmem:[#allocation7 + $0xf00] sm:$0xff]
    %v717 = vld [vmem:[#allocation7 + $0xf08] sm:$0xff]
    %v718 = vld [vmem:[#allocation7 + $0xf10] sm:$0xff]
    %v719 = vld [vmem:[#allocation7 + $0xf18] sm:$0xff]
    %v720 = vld [vmem:[#allocation7 + $0xf20] sm:$0xff]
    %v721 = vld [vmem:[#allocation7 + $0xf28] sm:$0xff]
    %v722 = vld [vmem:[#allocation7 + $0xf30] sm:$0xff]
    %v723 = vld [vmem:[#allocation7 + $0xf38] sm:$0xff]
    %v724 = vld [vmem:[#allocation7 + $0xf40] sm:$0xff]
    %v725 = vld [vmem:[#allocation7 + $0xf48] sm:$0xff]
    %v726 = vld [vmem:[#allocation7 + $0xf50] sm:$0xff]
    %v727 = vld [vmem:[#allocation7 + $0xf58] sm:$0xff]
    %v728 = vld [vmem:[#allocation7 + $0xf60] sm:$0xff]
    %v729 = vld [vmem:[#allocation7 + $0xf68] sm:$0xff]
    %v730 = vld [vmem:[#allocation7 + $0xf70] sm:$0xff]
    %v731 = vld [vmem:[#allocation7 + $0xf78] sm:$0xff]
    %v732 = vld [vmem:[#allocation7 + $0xf80] sm:$0xff]
    %v733 = vld [vmem:[#allocation7 + $0xf88] sm:$0xff]
    %v734 = vld [vmem:[#allocation7 + $0xf90] sm:$0xff]
    %v735 = vld [vmem:[#allocation7 + $0xf98] sm:$0xff]
    %v736 = vld [vmem:[#allocation7 + $0xfa0] sm:$0xff]
    %v737 = vld [vmem:[#allocation7 + $0xfa8] sm:$0xff]
    %v738 = vld [vmem:[#allocation7 + $0xfb0] sm:$0xff]
    %v739 = vld [vmem:[#allocation7 + $0xfb8] sm:$0xff]
    %v740 = vld [vmem:[#allocation7 + $0xfc0] sm:$0xff]
    %v741 = vld [vmem:[#allocation7 + $0xfc8] sm:$0xff]
    %v742 = vld [vmem:[#allocation7 + $0xfd0] sm:$0xff]
    %v743 = vld [vmem:[#allocation7 + $0xfd8] sm:$0xff]
    %v744 = vld [vmem:[#allocation7 + $0xfe0] sm:$0xff]
    %v745 = vld [vmem:[#allocation7 + $0xfe8] sm:$0xff]
    %v746 = vld [vmem:[#allocation7 + $0xff0] sm:$0xff]
    %v747 = vld [vmem:[#allocation7 + $0xff8] sm:$0xff]
    %v748 = vld [vmem:[#allocation7 + $0x1000] sm:$0xff]
    %v749 = vld [vmem:[#allocation7 + $0x1008] sm:$0xff]
    %v750 = vld [vmem:[#allocation7 + $0x1010] sm:$0xff]
    %v751 = vld [vmem:[#allocation7 + $0x1018] sm:$0xff]
    %v752 = vld [vmem:[#allocation7 + $0x1020] sm:$0xff]
    %v753 = vld [vmem:[#allocation7 + $0x1028] sm:$0xff]
    %v754 = vld [vmem:[#allocation7 + $0x1030] sm:$0xff]
    %v755 = vld [vmem:[#allocation7 + $0x1038] sm:$0xff]
    %v756 = vld [vmem:[#allocation7 + $0x1040] sm:$0xff]
    %v757 = vld [vmem:[#allocation7 + $0x1048] sm:$0xff]
    %v758 = vld [vmem:[#allocation7 + $0x1050] sm:$0xff]
    %v759 = vld [vmem:[#allocation7 + $0x1058] sm:$0xff]
    %v760 = vld [vmem:[#allocation7 + $0x1060] sm:$0xff]
    %v761 = vld [vmem:[#allocation7 + $0x1068] sm:$0xff]
    %v762 = vld [vmem:[#allocation7 + $0x1070] sm:$0xff]
    %v763 = vld [vmem:[#allocation7 + $0x1078] sm:$0xff]
    %v764 = vld [vmem:[#allocation7 + $0x1080] sm:$0xff]
    %v765 = vld [vmem:[#allocation7 + $0x1088] sm:$0xff]
    %v766 = vld [vmem:[#allocation7 + $0x1090] sm:$0xff]
    %v767 = vld [vmem:[#allocation7 + $0x1098] sm:$0xff]
    %v768 = vld [vmem:[#allocation7 + $0x10a0] sm:$0xff]
    %v769 = vld [vmem:[#allocation7 + $0x10a8] sm:$0xff]
    %v770 = vld [vmem:[#allocation7 + $0x10b0] sm:$0xff]
    %v771 = vld [vmem:[#allocation7 + $0x10b8] sm:$0xff]
    %v772 = vld [vmem:[#allocation7 + $0x10c0] sm:$0xff]
    %v773 = vld [vmem:[#allocation7 + $0x10c8] sm:$0xff]
    %v774 = vld [vmem:[#allocation7 + $0x10d0] sm:$0xff]
    %v775 = vld [vmem:[#allocation7 + $0x10d8] sm:$0xff]
    %v776 = vld [vmem:[#allocation7 + $0x10e0] sm:$0xff]
    %v777 = vld [vmem:[#allocation7 + $0x10e8] sm:$0xff]
    %v778 = vld [vmem:[#allocation7 + $0x10f0] sm:$0xff]
    %v779 = vld [vmem:[#allocation7 + $0x10f8] sm:$0xff]
    %v780 = vld [vmem:[#allocation7 + $0x1100] sm:$0xff]
    %v781 = vld [vmem:[#allocation7 + $0x1108] sm:$0xff]
    %v782 = vld [vmem:[#allocation7 + $0x1110] sm:$0xff]
    %v783 = vld [vmem:[#allocation7 + $0x1118] sm:$0xff]
    %v784 = vld [vmem:[#allocation7 + $0x1120] sm:$0xff]
    %v785 = vld [vmem:[#allocation7 + $0x1128] sm:$0xff]
    %v786 = vld [vmem:[#allocation7 + $0x1130] sm:$0xff]
    %v787 = vld [vmem:[#allocation7 + $0x1138] sm:$0xff]
    %v788 = vld [vmem:[#allocation7 + $0x1140] sm:$0xff]
    %v789 = vld [vmem:[#allocation7 + $0x1148] sm:$0xff]
    %v790 = vld [vmem:[#allocation7 + $0x1150] sm:$0xff]
    %v791 = vld [vmem:[#allocation7 + $0x1158] sm:$0xff]
    %v792 = vld [vmem:[#allocation7 + $0x1160] sm:$0xff]
    %v793 = vld [vmem:[#allocation7 + $0x1168] sm:$0xff]
    %v794 = vld [vmem:[#allocation7 + $0x1170] sm:$0xff]
    %v795 = vld [vmem:[#allocation7 + $0x1178] sm:$0xff]
    %v796 = vld [vmem:[#allocation7 + $0x1180] sm:$0xff]
    %v797 = vld [vmem:[#allocation7 + $0x1188] sm:$0xff]
    %v798 = vld [vmem:[#allocation7 + $0x1190] sm:$0xff]
    %v799 = vld [vmem:[#allocation7 + $0x1198] sm:$0xff]
    %v800 = vld [vmem:[#allocation7 + $0x11a0] sm:$0xff]
    %v801 = vld [vmem:[#allocation7 + $0x11a8] sm:$0xff]
    %v802 = vld [vmem:[#allocation7 + $0x11b0] sm:$0xff]
    %v803 = vld [vmem:[#allocation7 + $0x11b8] sm:$0xff]
    %v804 = vld [vmem:[#allocation7 + $0x11c0] sm:$0xff]
    %v805 = vld [vmem:[#allocation7 + $0x11c8] sm:$0xff]
    %v806 = vld [vmem:[#allocation7 + $0x11d0] sm:$0xff]
    %v807 = vld [vmem:[#allocation7 + $0x11d8] sm:$0xff]
    %v808 = vld [vmem:[#allocation7 + $0x11e0] sm:$0xff]
    %v809 = vld [vmem:[#allocation7 + $0x11e8] sm:$0xff]
    %v810 = vld [vmem:[#allocation7 + $0x11f0] sm:$0xff]
    %v811 = vld [vmem:[#allocation7 + $0x11f8] sm:$0xff]
    %v812 = vld [vmem:[#allocation8] sm:$0x3]
    %v813 = vld [vmem:[#allocation10] sm:$0xff]
    %v814 = vld [vmem:[#allocation10 + $0x8] sm:$0xff]
    %v815 = vld [vmem:[#allocation10 + $0x10] sm:$0xff]
    %v816 = vld [vmem:[#allocation10 + $0x18] sm:$0xff]
    %v817 = vld [vmem:[#allocation10 + $0x20] sm:$0xff]
    %v818 = vld [vmem:[#allocation10 + $0x28] sm:$0xff]
    %v819 = vld [vmem:[#allocation10 + $0x30] sm:$0xff]
    %v820 = vld [vmem:[#allocation10 + $0x38] sm:$0xff]
    %v821 = vld [vmem:[#allocation10 + $0x40] sm:$0xff]
    %v822 = vld [vmem:[#allocation10 + $0x48] sm:$0xff]
    %v823 = vld [vmem:[#allocation10 + $0x50] sm:$0xff]
    %v824 = vld [vmem:[#allocation10 + $0x58] sm:$0xff]
    %v825 = vld [vmem:[#allocation10 + $0x60] sm:$0xff]
    %v826 = vld [vmem:[#allocation10 + $0x68] sm:$0xff]
    %v827 = vld [vmem:[#allocation10 + $0x70] sm:$0xff]
    %v828 = vld [vmem:[#allocation10 + $0x78] sm:$0xff]
    %v829 = vld [vmem:[#allocation10 + $0x80] sm:$0xff]
    %v830 = vld [vmem:[#allocation10 + $0x88] sm:$0xff]
    %v831 = vld [vmem:[#allocation10 + $0x90] sm:$0xff]
    %v832 = vld [vmem:[#allocation10 + $0x98] sm:$0xff]
    %v833 = vld [vmem:[#allocation10 + $0xa0] sm:$0xff]
    %v834 = vld [vmem:[#allocation10 + $0xa8] sm:$0xff]
    %v835 = vld [vmem:[#allocation10 + $0xb0] sm:$0xff]
    %v836 = vld [vmem:[#allocation10 + $0xb8] sm:$0xff]
    %v837 = vld [vmem:[#allocation10 + $0xc0] sm:$0xff]
    %v838 = vld [vmem:[#allocation10 + $0xc8] sm:$0xff]
    %v839 = vld [vmem:[#allocation10 + $0xd0] sm:$0xff]
    %v840 = vld [vmem:[#allocation10 + $0xd8] sm:$0xff]
    %v841 = vld [vmem:[#allocation10 + $0xe0] sm:$0xff]
    %v842 = vld [vmem:[#allocation10 + $0xe8] sm:$0xff]
    %v843 = vld [vmem:[#allocation10 + $0xf0] sm:$0xff]
    %v844 = vld [vmem:[#allocation10 + $0xf8] sm:$0xff]
    %v845 = vld [vmem:[#allocation11] sm:$0x3]
    %v846 = vld [vmem:[#allocation13] sm:$0x3]
    %v847 = vld [vmem:[#allocation14] sm:$0x3]
    %v849 = vlaneseq
    %v850 = vshrl.u32 %v849, 7
    %v851 = vsub.s32 0, %v850
    %v852 = vrot.slane %v812, %v851
    %v853 = vlaneseq
    %v854 = vshrl.u32 %v853, 7
    %v855 = vsub.s32 1, %v854
    %v856 = vrot.slane %v812, %v855
    %v877 = vunpack.c.l.b16 %v218
    %v878 = vunpack.c.h.b16 %v218
    %v879 = vunpack.c.l.b16 %v219
    %v880 = vunpack.c.h.b16 %v219
    %v881 = vunpack.c.l.b16 %v220
    %v882 = vunpack.c.h.b16 %v220
    %v883 = vunpack.c.l.b16 %v221
    %v884 = vunpack.c.h.b16 %v221
    %v885 = vunpack.c.l.b16 %v222
    %v886 = vunpack.c.h.b16 %v222
    %v887 = vunpack.c.l.b16 %v223
    %v888 = vunpack.c.h.b16 %v223
    %v889 = vunpack.c.l.b16 %v224
    %v890 = vunpack.c.h.b16 %v224
    %v891 = vunpack.c.l.b16 %v225
    %v892 = vunpack.c.h.b16 %v225
    %v893 = vunpack.c.l.b16 %v226
    %v894 = vunpack.c.h.b16 %v226
    %v895 = vunpack.c.l.b16 %v227
    %v896 = vunpack.c.h.b16 %v227
    %v897 = vunpack.c.l.b16 %v228
    %v898 = vunpack.c.h.b16 %v228
    %v899 = vunpack.c.l.b16 %v229
    %v900 = vunpack.c.h.b16 %v229
    %v901 = vunpack.c.l.b16 %v230
    %v902 = vunpack.c.h.b16 %v230
    %v903 = vunpack.c.l.b16 %v231
    %v904 = vunpack.c.h.b16 %v231
    %v905 = vunpack.c.l.b16 %v232
    %v906 = vunpack.c.h.b16 %v232
    %v907 = vunpack.c.l.b16 %v233
    %v908 = vunpack.c.h.b16 %v233
    %v909 = vunpack.c.l.b16 %v234
    %v910 = vunpack.c.h.b16 %v234
    %v911 = vunpack.c.l.b16 %v235
    %v912 = vunpack.c.h.b16 %v235
    %v913 = vpack.c.b16 %v877, %v877
    %v914 = vpack.c.b16 %v878, %v878
    %v915 = vpack.c.b16 %v879, %v879
    %v916 = vpack.c.b16 %v880, %v880
    %v917 = vpack.c.b16 %v881, %v881
    %v918 = vpack.c.b16 %v882, %v882
    %v919 = vpack.c.b16 %v883, %v883
    %v920 = vpack.c.b16 %v884, %v884
    %v921 = vpack.c.b16 %v885, %v885
    %v922 = vpack.c.b16 %v886, %v886
    %v923 = vpack.c.b16 %v887, %v887
    %v924 = vpack.c.b16 %v888, %v888
    %v925 = vpack.c.b16 %v889, %v889
    %v926 = vpack.c.b16 %v890, %v890
    %v927 = vpack.c.b16 %v891, %v891
    %v928 = vpack.c.b16 %v892, %v892
    %v929 = vpack.c.b16 %v893, %v893
    %v930 = vpack.c.b16 %v894, %v894
    %v931 = vpack.c.b16 %v895, %v895
    %v932 = vpack.c.b16 %v896, %v896
    %v933 = vpack.c.b16 %v897, %v897
    %v934 = vpack.c.b16 %v898, %v898
    %v935 = vpack.c.b16 %v899, %v899
    %v936 = vpack.c.b16 %v900, %v900
    %v937 = vpack.c.b16 %v901, %v901
    %v938 = vpack.c.b16 %v902, %v902
    %v939 = vpack.c.b16 %v903, %v903
    %v940 = vpack.c.b16 %v904, %v904
    %v941 = vpack.c.b16 %v905, %v905
    %v942 = vpack.c.b16 %v906, %v906
    %v943 = vpack.c.b16 %v907, %v907
    %v944 = vpack.c.b16 %v908, %v908
    %v945 = vpack.c.b16 %v909, %v909
    %v946 = vpack.c.b16 %v910, %v910
    %v947 = vpack.c.b16 %v911, %v911
    %v948 = vpack.c.b16 %v912, %v912
    %v1561 = vunpack.c.l.b16 %v236
    %v1562 = vunpack.c.h.b16 %v236
    %v1563 = vunpack.c.l.b16 %v237
    %v1564 = vunpack.c.h.b16 %v237
    %v1565 = vunpack.c.l.b16 %v238
    %v1566 = vunpack.c.h.b16 %v238
    %v1567 = vunpack.c.l.b16 %v239
    %v1568 = vunpack.c.h.b16 %v239
    %v1569 = vunpack.c.l.b16 %v240
    %v1570 = vunpack.c.h.b16 %v240
    %v1571 = vunpack.c.l.b16 %v241
    %v1572 = vunpack.c.h.b16 %v241
    %v1573 = vunpack.c.l.b16 %v242
    %v1574 = vunpack.c.h.b16 %v242
    %v1575 = vunpack.c.l.b16 %v243
    %v1576 = vunpack.c.h.b16 %v243
    %v1577 = vunpack.c.l.b16 %v244
    %v1578 = vunpack.c.h.b16 %v244
    %v1579 = vunpack.c.l.b16 %v245
    %v1580 = vunpack.c.h.b16 %v245
    %v1581 = vunpack.c.l.b16 %v246
    %v1582 = vunpack.c.h.b16 %v246
    %v1583 = vunpack.c.l.b16 %v247
    %v1584 = vunpack.c.h.b16 %v247
    %v1585 = vunpack.c.l.b16 %v248
    %v1586 = vunpack.c.h.b16 %v248
    %v1587 = vunpack.c.l.b16 %v249
    %v1588 = vunpack.c.h.b16 %v249
    %v1589 = vunpack.c.l.b16 %v250
    %v1590 = vunpack.c.h.b16 %v250
    %v1591 = vunpack.c.l.b16 %v251
    %v1592 = vunpack.c.h.b16 %v251
    %v1593 = vunpack.c.l.b16 %v252
    %v1594 = vunpack.c.h.b16 %v252
    %v1595 = vunpack.c.l.b16 %v253
    %v1596 = vunpack.c.h.b16 %v253
    %v1597 = vunpack.c.l.b16 %v254
    %v1598 = vunpack.c.h.b16 %v254
    %v1599 = vunpack.c.l.b16 %v255
    %v1600 = vunpack.c.h.b16 %v255
    %v1601 = vunpack.c.l.b16 %v256
    %v1602 = vunpack.c.h.b16 %v256
    %v1603 = vunpack.c.l.b16 %v257
    %v1604 = vunpack.c.h.b16 %v257
    %v1605 = vunpack.c.l.b16 %v258
    %v1606 = vunpack.c.h.b16 %v258
    %v1607 = vunpack.c.l.b16 %v259
    %v1608 = vunpack.c.h.b16 %v259
    %v1609 = vunpack.c.l.b16 %v260
    %v1610 = vunpack.c.h.b16 %v260
    %v1611 = vunpack.c.l.b16 %v261
    %v1612 = vunpack.c.h.b16 %v261
    %v1613 = vunpack.c.l.b16 %v262
    %v1614 = vunpack.c.h.b16 %v262
    %v1615 = vunpack.c.l.b16 %v263
    %v1616 = vunpack.c.h.b16 %v263
    %v1617 = vunpack.c.l.b16 %v264
    %v1618 = vunpack.c.h.b16 %v264
    %v1619 = vunpack.c.l.b16 %v265
    %v1620 = vunpack.c.h.b16 %v265
    %v1621 = vunpack.c.l.b16 %v266
    %v1622 = vunpack.c.h.b16 %v266
    %v1623 = vunpack.c.l.b16 %v267
    %v1624 = vunpack.c.h.b16 %v267
    %v1625 = vunpack.c.l.b16 %v268
    %v1626 = vunpack.c.h.b16 %v268
    %v1627 = vunpack.c.l.b16 %v269
    %v1628 = vunpack.c.h.b16 %v269
    %v1629 = vunpack.c.l.b16 %v270
    %v1630 = vunpack.c.h.b16 %v270
    %v1631 = vunpack.c.l.b16 %v271
    %v1632 = vunpack.c.h.b16 %v271
    %v1633 = vunpack.c.l.b16 %v272
    %v1634 = vunpack.c.h.b16 %v272
    %v1635 = vunpack.c.l.b16 %v273
    %v1636 = vunpack.c.h.b16 %v273
    %v1637 = vunpack.c.l.b16 %v274
    %v1638 = vunpack.c.h.b16 %v274
    %v1639 = vunpack.c.l.b16 %v275
    %v1640 = vunpack.c.h.b16 %v275
    %v1641 = vunpack.c.l.b16 %v276
    %v1642 = vunpack.c.h.b16 %v276
    %v1643 = vunpack.c.l.b16 %v277
    %v1644 = vunpack.c.h.b16 %v277
    %v1645 = vunpack.c.l.b16 %v278
    %v1646 = vunpack.c.h.b16 %v278
    %v1647 = vunpack.c.l.b16 %v279
    %v1648 = vunpack.c.h.b16 %v279
    %v1649 = vunpack.c.l.b16 %v280
    %v1650 = vunpack.c.h.b16 %v280
    %v1651 = vunpack.c.l.b16 %v281
    %v1652 = vunpack.c.h.b16 %v281
    %v1653 = vunpack.c.l.b16 %v282
    %v1654 = vunpack.c.h.b16 %v282
    %v1655 = vunpack.c.l.b16 %v283
    %v1656 = vunpack.c.h.b16 %v283
    %v1657 = vunpack.c.l.b16 %v284
    %v1658 = vunpack.c.h.b16 %v284
    %v1659 = vunpack.c.l.b16 %v285
    %v1660 = vunpack.c.h.b16 %v285
    %v1661 = vunpack.c.l.b16 %v286
    %v1662 = vunpack.c.h.b16 %v286
    %v1663 = vunpack.c.l.b16 %v287
    %v1664 = vunpack.c.h.b16 %v287
    %v1665 = vunpack.c.l.b16 %v288
    %v1666 = vunpack.c.h.b16 %v288
    %v1667 = vunpack.c.l.b16 %v289
    %v1668 = vunpack.c.h.b16 %v289
    %v1669 = vunpack.c.l.b16 %v290
    %v1670 = vunpack.c.h.b16 %v290
    %v1671 = vunpack.c.l.b16 %v291
    %v1672 = vunpack.c.h.b16 %v291
    %v1673 = vunpack.c.l.b16 %v292
    %v1674 = vunpack.c.h.b16 %v292
    %v1675 = vunpack.c.l.b16 %v293
    %v1676 = vunpack.c.h.b16 %v293
    %v1677 = vunpack.c.l.b16 %v294
    %v1678 = vunpack.c.h.b16 %v294
    %v1679 = vunpack.c.l.b16 %v295
    %v1680 = vunpack.c.h.b16 %v295
    %v1681 = vunpack.c.l.b16 %v296
    %v1682 = vunpack.c.h.b16 %v296
    %v1683 = vunpack.c.l.b16 %v297
    %v1684 = vunpack.c.h.b16 %v297
    %v1685 = vunpack.c.l.b16 %v298
    %v1686 = vunpack.c.h.b16 %v298
    %v1687 = vunpack.c.l.b16 %v299
    %v1688 = vunpack.c.h.b16 %v299
    %v1689 = vunpack.c.l.b16 %v300
    %v1690 = vunpack.c.h.b16 %v300
    %v1691 = vunpack.c.l.b16 %v301
    %v1692 = vunpack.c.h.b16 %v301
    %v1693 = vunpack.c.l.b16 %v302
    %v1694 = vunpack.c.h.b16 %v302
    %v1695 = vunpack.c.l.b16 %v303
    %v1696 = vunpack.c.h.b16 %v303
    %v1697 = vunpack.c.l.b16 %v304
    %v1698 = vunpack.c.h.b16 %v304
    %v1699 = vunpack.c.l.b16 %v305
    %v1700 = vunpack.c.h.b16 %v305
    %v1701 = vunpack.c.l.b16 %v306
    %v1702 = vunpack.c.h.b16 %v306
    %v1703 = vunpack.c.l.b16 %v307
    %v1704 = vunpack.c.h.b16 %v307
    %v1705 = vunpack.c.l.b16 %v308
    %v1706 = vunpack.c.h.b16 %v308
    %v1707 = vunpack.c.l.b16 %v309
    %v1708 = vunpack.c.h.b16 %v309
    %v1709 = vunpack.c.l.b16 %v310
    %v1710 = vunpack.c.h.b16 %v310
    %v1711 = vunpack.c.l.b16 %v311
    %v1712 = vunpack.c.h.b16 %v311
    %v1713 = vunpack.c.l.b16 %v312
    %v1714 = vunpack.c.h.b16 %v312
    %v1715 = vunpack.c.l.b16 %v313
    %v1716 = vunpack.c.h.b16 %v313
    %v1717 = vunpack.c.l.b16 %v314
    %v1718 = vunpack.c.h.b16 %v314
    %v1719 = vunpack.c.l.b16 %v315
    %v1720 = vunpack.c.h.b16 %v315
    %v1721 = vunpack.c.l.b16 %v316
    %v1722 = vunpack.c.h.b16 %v316
    %v1723 = vunpack.c.l.b16 %v317
    %v1724 = vunpack.c.h.b16 %v317
    %v1725 = vunpack.c.l.b16 %v318
    %v1726 = vunpack.c.h.b16 %v318
    %v1727 = vunpack.c.l.b16 %v319
    %v1728 = vunpack.c.h.b16 %v319
    %v1729 = vunpack.c.l.b16 %v320
    %v1730 = vunpack.c.h.b16 %v320
    %v1731 = vunpack.c.l.b16 %v321
    %v1732 = vunpack.c.h.b16 %v321
    %v1733 = vunpack.c.l.b16 %v322
    %v1734 = vunpack.c.h.b16 %v322
    %v1735 = vunpack.c.l.b16 %v323
    %v1736 = vunpack.c.h.b16 %v323
    %v1737 = vunpack.c.l.b16 %v324
    %v1738 = vunpack.c.h.b16 %v324
    %v1739 = vunpack.c.l.b16 %v325
    %v1740 = vunpack.c.h.b16 %v325
    %v1741 = vunpack.c.l.b16 %v326
    %v1742 = vunpack.c.h.b16 %v326
    %v1743 = vunpack.c.l.b16 %v327
    %v1744 = vunpack.c.h.b16 %v327
    %v1745 = vunpack.c.l.b16 %v328
    %v1746 = vunpack.c.h.b16 %v328
    %v1747 = vunpack.c.l.b16 %v329
    %v1748 = vunpack.c.h.b16 %v329
    %v1749 = vunpack.c.l.b16 %v330
    %v1750 = vunpack.c.h.b16 %v330
    %v1751 = vunpack.c.l.b16 %v331
    %v1752 = vunpack.c.h.b16 %v331
    %v1753 = vunpack.c.l.b16 %v332
    %v1754 = vunpack.c.h.b16 %v332
    %v1755 = vunpack.c.l.b16 %v333
    %v1756 = vunpack.c.h.b16 %v333
    %v1757 = vunpack.c.l.b16 %v334
    %v1758 = vunpack.c.h.b16 %v334
    %v1759 = vunpack.c.l.b16 %v335
    %v1760 = vunpack.c.h.b16 %v335
    %v1761 = vunpack.c.l.b16 %v336
    %v1762 = vunpack.c.h.b16 %v336
    %v1763 = vunpack.c.l.b16 %v337
    %v1764 = vunpack.c.h.b16 %v337
    %v1765 = vunpack.c.l.b16 %v338
    %v1766 = vunpack.c.h.b16 %v338
    %v1767 = vunpack.c.l.b16 %v339
    %v1768 = vunpack.c.h.b16 %v339
    %v1769 = vunpack.c.l.b16 %v340
    %v1770 = vunpack.c.h.b16 %v340
    %v1771 = vunpack.c.l.b16 %v341
    %v1772 = vunpack.c.h.b16 %v341
    %v1773 = vunpack.c.l.b16 %v342
    %v1774 = vunpack.c.h.b16 %v342
    %v1775 = vunpack.c.l.b16 %v343
    %v1776 = vunpack.c.h.b16 %v343
    %v1777 = vunpack.c.l.b16 %v344
    %v1778 = vunpack.c.h.b16 %v344
    %v1779 = vunpack.c.l.b16 %v345
    %v1780 = vunpack.c.h.b16 %v345
    %v1781 = vunpack.c.l.b16 %v346
    %v1782 = vunpack.c.h.b16 %v346
    %v1783 = vunpack.c.l.b16 %v347
    %v1784 = vunpack.c.h.b16 %v347
    %v1785 = vunpack.c.l.b16 %v348
    %v1786 = vunpack.c.h.b16 %v348
    %v1787 = vunpack.c.l.b16 %v349
    %v1788 = vunpack.c.h.b16 %v349
    %v1789 = vunpack.c.l.b16 %v350
    %v1790 = vunpack.c.h.b16 %v350
    %v1791 = vunpack.c.l.b16 %v351
    %v1792 = vunpack.c.h.b16 %v351
    %v1793 = vunpack.c.l.b16 %v352
    %v1794 = vunpack.c.h.b16 %v352
    %v1795 = vunpack.c.l.b16 %v353
    %v1796 = vunpack.c.h.b16 %v353
    %v1797 = vunpack.c.l.b16 %v354
    %v1798 = vunpack.c.h.b16 %v354
    %v1799 = vunpack.c.l.b16 %v355
    %v1800 = vunpack.c.h.b16 %v355
    %v1801 = vunpack.c.l.b16 %v356
    %v1802 = vunpack.c.h.b16 %v356
    %v1803 = vunpack.c.l.b16 %v357
    %v1804 = vunpack.c.h.b16 %v357
    %v1805 = vunpack.c.l.b16 %v358
    %v1806 = vunpack.c.h.b16 %v358
    %v1807 = vunpack.c.l.b16 %v359
    %v1808 = vunpack.c.h.b16 %v359
    %v1809 = vunpack.c.l.b16 %v360
    %v1810 = vunpack.c.h.b16 %v360
    %v1811 = vunpack.c.l.b16 %v361
    %v1812 = vunpack.c.h.b16 %v361
    %v1813 = vunpack.c.l.b16 %v362
    %v1814 = vunpack.c.h.b16 %v362
    %v1815 = vunpack.c.l.b16 %v363
    %v1816 = vunpack.c.h.b16 %v363
    %v1817 = vunpack.c.l.b16 %v364
    %v1818 = vunpack.c.h.b16 %v364
    %v1819 = vunpack.c.l.b16 %v365
    %v1820 = vunpack.c.h.b16 %v365
    %v1821 = vunpack.c.l.b16 %v366
    %v1822 = vunpack.c.h.b16 %v366
    %v1823 = vunpack.c.l.b16 %v367
    %v1824 = vunpack.c.h.b16 %v367
    %v1825 = vunpack.c.l.b16 %v368
    %v1826 = vunpack.c.h.b16 %v368
    %v1827 = vunpack.c.l.b16 %v369
    %v1828 = vunpack.c.h.b16 %v369
    %v1829 = vunpack.c.l.b16 %v370
    %v1830 = vunpack.c.h.b16 %v370
    %v1831 = vunpack.c.l.b16 %v371
    %v1832 = vunpack.c.h.b16 %v371
    %v1833 = vunpack.c.l.b16 %v372
    %v1834 = vunpack.c.h.b16 %v372
    %v1835 = vunpack.c.l.b16 %v373
    %v1836 = vunpack.c.h.b16 %v373
    %v1837 = vunpack.c.l.b16 %v374
    %v1838 = vunpack.c.h.b16 %v374
    %v1839 = vunpack.c.l.b16 %v375
    %v1840 = vunpack.c.h.b16 %v375
    %v1841 = vunpack.c.l.b16 %v376
    %v1842 = vunpack.c.h.b16 %v376
    %v1843 = vunpack.c.l.b16 %v377
    %v1844 = vunpack.c.h.b16 %v377
    %v1845 = vunpack.c.l.b16 %v378
    %v1846 = vunpack.c.h.b16 %v378
    %v1847 = vunpack.c.l.b16 %v379
    %v1848 = vunpack.c.h.b16 %v379
    %v1849 = vunpack.c.l.b16 %v380
    %v1850 = vunpack.c.h.b16 %v380
    %v1851 = vunpack.c.l.b16 %v381
    %v1852 = vunpack.c.h.b16 %v381
    %v1853 = vunpack.c.l.b16 %v382
    %v1854 = vunpack.c.h.b16 %v382
    %v1855 = vunpack.c.l.b16 %v383
    %v1856 = vunpack.c.h.b16 %v383
    %v1857 = vunpack.c.l.b16 %v384
    %v1858 = vunpack.c.h.b16 %v384
    %v1859 = vunpack.c.l.b16 %v385
    %v1860 = vunpack.c.h.b16 %v385
    %v1861 = vunpack.c.l.b16 %v386
    %v1862 = vunpack.c.h.b16 %v386
    %v1863 = vunpack.c.l.b16 %v387
    %v1864 = vunpack.c.h.b16 %v387
    %v1865 = vunpack.c.l.b16 %v388
    %v1866 = vunpack.c.h.b16 %v388
    %v1867 = vunpack.c.l.b16 %v389
    %v1868 = vunpack.c.h.b16 %v389
    %v1869 = vunpack.c.l.b16 %v390
    %v1870 = vunpack.c.h.b16 %v390
    %v1871 = vunpack.c.l.b16 %v391
    %v1872 = vunpack.c.h.b16 %v391
    %v1873 = vunpack.c.l.b16 %v392
    %v1874 = vunpack.c.h.b16 %v392
    %v1875 = vunpack.c.l.b16 %v393
    %v1876 = vunpack.c.h.b16 %v393
    %v1877 = vunpack.c.l.b16 %v394
    %v1878 = vunpack.c.h.b16 %v394
    %v1879 = vunpack.c.l.b16 %v395
    %v1880 = vunpack.c.h.b16 %v395
    %v1881 = vunpack.c.l.b16 %v396
    %v1882 = vunpack.c.h.b16 %v396
    %v1883 = vunpack.c.l.b16 %v397
    %v1884 = vunpack.c.h.b16 %v397
    %v1885 = vunpack.c.l.b16 %v398
    %v1886 = vunpack.c.h.b16 %v398
    %v1887 = vunpack.c.l.b16 %v399
    %v1888 = vunpack.c.h.b16 %v399
    %v1889 = vunpack.c.l.b16 %v400
    %v1890 = vunpack.c.h.b16 %v400
    %v1891 = vunpack.c.l.b16 %v401
    %v1892 = vunpack.c.h.b16 %v401
    %v1893 = vunpack.c.l.b16 %v402
    %v1894 = vunpack.c.h.b16 %v402
    %v1895 = vunpack.c.l.b16 %v403
    %v1896 = vunpack.c.h.b16 %v403
    %v1897 = vunpack.c.l.b16 %v404
    %v1898 = vunpack.c.h.b16 %v404
    %v1899 = vunpack.c.l.b16 %v405
    %v1900 = vunpack.c.h.b16 %v405
    %v1901 = vunpack.c.l.b16 %v406
    %v1902 = vunpack.c.h.b16 %v406
    %v1903 = vunpack.c.l.b16 %v407
    %v1904 = vunpack.c.h.b16 %v407
    %v1905 = vunpack.c.l.b16 %v408
    %v1906 = vunpack.c.h.b16 %v408
    %v1907 = vunpack.c.l.b16 %v409
    %v1908 = vunpack.c.h.b16 %v409
    %v1909 = vunpack.c.l.b16 %v410
    %v1910 = vunpack.c.h.b16 %v410
    %v1911 = vunpack.c.l.b16 %v411
    %v1912 = vunpack.c.h.b16 %v411
    %v1913 = vunpack.c.l.b16 %v412
    %v1914 = vunpack.c.h.b16 %v412
    %v1915 = vunpack.c.l.b16 %v413
    %v1916 = vunpack.c.h.b16 %v413
    %v1917 = vunpack.c.l.b16 %v414
    %v1918 = vunpack.c.h.b16 %v414
    %v1919 = vunpack.c.l.b16 %v415
    %v1920 = vunpack.c.h.b16 %v415
    %v1921 = vunpack.c.l.b16 %v416
    %v1922 = vunpack.c.h.b16 %v416
    %v1923 = vunpack.c.l.b16 %v417
    %v1924 = vunpack.c.h.b16 %v417
    %v1925 = vunpack.c.l.b16 %v418
    %v1926 = vunpack.c.h.b16 %v418
    %v1927 = vunpack.c.l.b16 %v419
    %v1928 = vunpack.c.h.b16 %v419
    %v1929 = vunpack.c.l.b16 %v420
    %v1930 = vunpack.c.h.b16 %v420
    %v1931 = vunpack.c.l.b16 %v421
    %v1932 = vunpack.c.h.b16 %v421
    %v1933 = vunpack.c.l.b16 %v422
    %v1934 = vunpack.c.h.b16 %v422
    %v1935 = vunpack.c.l.b16 %v423
    %v1936 = vunpack.c.h.b16 %v423
    %v1937 = vunpack.c.l.b16 %v424
    %v1938 = vunpack.c.h.b16 %v424
    %v1939 = vunpack.c.l.b16 %v425
    %v1940 = vunpack.c.h.b16 %v425
    %v1941 = vunpack.c.l.b16 %v426
    %v1942 = vunpack.c.h.b16 %v426
    %v1943 = vunpack.c.l.b16 %v427
    %v1944 = vunpack.c.h.b16 %v427
    %v1945 = vunpack.c.l.b16 %v428
    %v1946 = vunpack.c.h.b16 %v428
    %v1947 = vunpack.c.l.b16 %v429
    %v1948 = vunpack.c.h.b16 %v429
    %v1949 = vunpack.c.l.b16 %v430
    %v1950 = vunpack.c.h.b16 %v430
    %v1951 = vunpack.c.l.b16 %v431
    %v1952 = vunpack.c.h.b16 %v431
    %v1953 = vunpack.c.l.b16 %v432
    %v1954 = vunpack.c.h.b16 %v432
    %v1955 = vunpack.c.l.b16 %v433
    %v1956 = vunpack.c.h.b16 %v433
    %v1957 = vunpack.c.l.b16 %v434
    %v1958 = vunpack.c.h.b16 %v434
    %v1959 = vunpack.c.l.b16 %v435
    %v1960 = vunpack.c.h.b16 %v435
    %v1961 = vunpack.c.l.b16 %v436
    %v1962 = vunpack.c.h.b16 %v436
    %v1963 = vunpack.c.l.b16 %v437
    %v1964 = vunpack.c.h.b16 %v437
    %v1965 = vunpack.c.l.b16 %v438
    %v1966 = vunpack.c.h.b16 %v438
    %v1967 = vunpack.c.l.b16 %v439
    %v1968 = vunpack.c.h.b16 %v439
    %v1969 = vunpack.c.l.b16 %v440
    %v1970 = vunpack.c.h.b16 %v440
    %v1971 = vunpack.c.l.b16 %v441
    %v1972 = vunpack.c.h.b16 %v441
    %v1973 = vunpack.c.l.b16 %v442
    %v1974 = vunpack.c.h.b16 %v442
    %v1975 = vunpack.c.l.b16 %v443
    %v1976 = vunpack.c.h.b16 %v443
    %v1977 = vunpack.c.l.b16 %v444
    %v1978 = vunpack.c.h.b16 %v444
    %v1979 = vunpack.c.l.b16 %v445
    %v1980 = vunpack.c.h.b16 %v445
    %v1981 = vunpack.c.l.b16 %v446
    %v1982 = vunpack.c.h.b16 %v446
    %v1983 = vunpack.c.l.b16 %v447
    %v1984 = vunpack.c.h.b16 %v447
    %v1985 = vunpack.c.l.b16 %v448
    %v1986 = vunpack.c.h.b16 %v448
    %v1987 = vunpack.c.l.b16 %v449
    %v1988 = vunpack.c.h.b16 %v449
    %v1989 = vunpack.c.l.b16 %v450
    %v1990 = vunpack.c.h.b16 %v450
    %v1991 = vunpack.c.l.b16 %v451
    %v1992 = vunpack.c.h.b16 %v451
    %v1993 = vunpack.c.l.b16 %v452
    %v1994 = vunpack.c.h.b16 %v452
    %v1995 = vunpack.c.l.b16 %v453
    %v1996 = vunpack.c.h.b16 %v453
    %v1997 = vunpack.c.l.b16 %v454
    %v1998 = vunpack.c.h.b16 %v454
    %v1999 = vunpack.c.l.b16 %v455
    %v2000 = vunpack.c.h.b16 %v455
    %v2001 = vunpack.c.l.b16 %v456
    %v2002 = vunpack.c.h.b16 %v456
    %v2003 = vunpack.c.l.b16 %v457
    %v2004 = vunpack.c.h.b16 %v457
    %v2005 = vunpack.c.l.b16 %v458
    %v2006 = vunpack.c.h.b16 %v458
    %v2007 = vunpack.c.l.b16 %v459
    %v2008 = vunpack.c.h.b16 %v459
    %v2009 = vunpack.c.l.b16 %v460
    %v2010 = vunpack.c.h.b16 %v460
    %v2011 = vunpack.c.l.b16 %v461
    %v2012 = vunpack.c.h.b16 %v461
    %v2013 = vunpack.c.l.b16 %v462
    %v2014 = vunpack.c.h.b16 %v462
    %v2015 = vunpack.c.l.b16 %v463
    %v2016 = vunpack.c.h.b16 %v463
    %v2017 = vunpack.c.l.b16 %v464
    %v2018 = vunpack.c.h.b16 %v464
    %v2019 = vunpack.c.l.b16 %v465
    %v2020 = vunpack.c.h.b16 %v465
    %v2021 = vunpack.c.l.b16 %v466
    %v2022 = vunpack.c.h.b16 %v466
    %v2023 = vunpack.c.l.b16 %v467
    %v2024 = vunpack.c.h.b16 %v467
    %v2025 = vunpack.c.l.b16 %v468
    %v2026 = vunpack.c.h.b16 %v468
    %v2027 = vunpack.c.l.b16 %v469
    %v2028 = vunpack.c.h.b16 %v469
    %v2029 = vunpack.c.l.b16 %v470
    %v2030 = vunpack.c.h.b16 %v470
    %v2031 = vunpack.c.l.b16 %v471
    %v2032 = vunpack.c.h.b16 %v471
    %v2033 = vunpack.c.l.b16 %v472
    %v2034 = vunpack.c.h.b16 %v472
    %v2035 = vunpack.c.l.b16 %v473
    %v2036 = vunpack.c.h.b16 %v473
    %v2037 = vunpack.c.l.b16 %v474
    %v2038 = vunpack.c.h.b16 %v474
    %v2039 = vunpack.c.l.b16 %v475
    %v2040 = vunpack.c.h.b16 %v475
    %v2041 = vunpack.c.l.b16 %v476
    %v2042 = vunpack.c.h.b16 %v476
    %v2043 = vunpack.c.l.b16 %v477
    %v2044 = vunpack.c.h.b16 %v477
    %v2045 = vunpack.c.l.b16 %v478
    %v2046 = vunpack.c.h.b16 %v478
    %v2047 = vunpack.c.l.b16 %v479
    %v2048 = vunpack.c.h.b16 %v479
    %v2049 = vunpack.c.l.b16 %v480
    %v2050 = vunpack.c.h.b16 %v480
    %v2051 = vunpack.c.l.b16 %v481
    %v2052 = vunpack.c.h.b16 %v481
    %v2053 = vunpack.c.l.b16 %v482
    %v2054 = vunpack.c.h.b16 %v482
    %v2055 = vunpack.c.l.b16 %v483
    %v2056 = vunpack.c.h.b16 %v483
    %v2057 = vunpack.c.l.b16 %v484
    %v2058 = vunpack.c.h.b16 %v484
    %v2059 = vunpack.c.l.b16 %v485
    %v2060 = vunpack.c.h.b16 %v485
    %v2061 = vunpack.c.l.b16 %v486
    %v2062 = vunpack.c.h.b16 %v486
    %v2063 = vunpack.c.l.b16 %v487
    %v2064 = vunpack.c.h.b16 %v487
    %v2065 = vunpack.c.l.b16 %v488
    %v2066 = vunpack.c.h.b16 %v488
    %v2067 = vunpack.c.l.b16 %v489
    %v2068 = vunpack.c.h.b16 %v489
    %v2069 = vunpack.c.l.b16 %v490
    %v2070 = vunpack.c.h.b16 %v490
    %v2071 = vunpack.c.l.b16 %v491
    %v2072 = vunpack.c.h.b16 %v491
    %v2073 = vunpack.c.l.b16 %v492
    %v2074 = vunpack.c.h.b16 %v492
    %v2075 = vunpack.c.l.b16 %v493
    %v2076 = vunpack.c.h.b16 %v493
    %v2077 = vunpack.c.l.b16 %v494
    %v2078 = vunpack.c.h.b16 %v494
    %v2079 = vunpack.c.l.b16 %v495
    %v2080 = vunpack.c.h.b16 %v495
    %v2081 = vunpack.c.l.b16 %v496
    %v2082 = vunpack.c.h.b16 %v496
    %v2083 = vunpack.c.l.b16 %v497
    %v2084 = vunpack.c.h.b16 %v497
    %v2085 = vunpack.c.l.b16 %v498
    %v2086 = vunpack.c.h.b16 %v498
    %v2087 = vunpack.c.l.b16 %v499
    %v2088 = vunpack.c.h.b16 %v499
    %v2089 = vunpack.c.l.b16 %v500
    %v2090 = vunpack.c.h.b16 %v500
    %v2091 = vunpack.c.l.b16 %v501
    %v2092 = vunpack.c.h.b16 %v501
    %v2093 = vunpack.c.l.b16 %v502
    %v2094 = vunpack.c.h.b16 %v502
    %v2095 = vunpack.c.l.b16 %v503
    %v2096 = vunpack.c.h.b16 %v503
    %v2097 = vunpack.c.l.b16 %v504
    %v2098 = vunpack.c.h.b16 %v504
    %v2099 = vunpack.c.l.b16 %v505
    %v2100 = vunpack.c.h.b16 %v505
    %v2101 = vunpack.c.l.b16 %v506
    %v2102 = vunpack.c.h.b16 %v506
    %v2103 = vunpack.c.l.b16 %v507
    %v2104 = vunpack.c.h.b16 %v507
    %v2105 = vunpack.c.l.b16 %v508
    %v2106 = vunpack.c.h.b16 %v508
    %v2107 = vunpack.c.l.b16 %v509
    %v2108 = vunpack.c.h.b16 %v509
    %v2109 = vunpack.c.l.b16 %v510
    %v2110 = vunpack.c.h.b16 %v510
    %v2111 = vunpack.c.l.b16 %v511
    %v2112 = vunpack.c.h.b16 %v511
    %v2113 = vunpack.c.l.b16 %v512
    %v2114 = vunpack.c.h.b16 %v512
    %v2115 = vunpack.c.l.b16 %v513
    %v2116 = vunpack.c.h.b16 %v513
    %v2117 = vunpack.c.l.b16 %v514
    %v2118 = vunpack.c.h.b16 %v514
    %v2119 = vunpack.c.l.b16 %v515
    %v2120 = vunpack.c.h.b16 %v515
    %v2121 = vunpack.c.l.b16 %v516
    %v2122 = vunpack.c.h.b16 %v516
    %v2123 = vunpack.c.l.b16 %v517
    %v2124 = vunpack.c.h.b16 %v517
    %v2125 = vunpack.c.l.b16 %v518
    %v2126 = vunpack.c.h.b16 %v518
    %v2127 = vunpack.c.l.b16 %v519
    %v2128 = vunpack.c.h.b16 %v519
    %v2129 = vunpack.c.l.b16 %v520
    %v2130 = vunpack.c.h.b16 %v520
    %v2131 = vunpack.c.l.b16 %v521
    %v2132 = vunpack.c.h.b16 %v521
    %v2133 = vunpack.c.l.b16 %v522
    %v2134 = vunpack.c.h.b16 %v522
    %v2135 = vunpack.c.l.b16 %v523
    %v2136 = vunpack.c.h.b16 %v523
    %v2137 = vunpack.c.l.b16 %v524
    %v2138 = vunpack.c.h.b16 %v524
    %v2139 = vunpack.c.l.b16 %v525
    %v2140 = vunpack.c.h.b16 %v525
    %v2141 = vunpack.c.l.b16 %v526
    %v2142 = vunpack.c.h.b16 %v526
    %v2143 = vunpack.c.l.b16 %v527
    %v2144 = vunpack.c.h.b16 %v527
    %v2145 = vunpack.c.l.b16 %v528
    %v2146 = vunpack.c.h.b16 %v528
    %v2147 = vunpack.c.l.b16 %v529
    %v2148 = vunpack.c.h.b16 %v529
    %v2149 = vunpack.c.l.b16 %v530
    %v2150 = vunpack.c.h.b16 %v530
    %v2151 = vunpack.c.l.b16 %v531
    %v2152 = vunpack.c.h.b16 %v531
    %v2153 = vunpack.c.l.b16 %v532
    %v2154 = vunpack.c.h.b16 %v532
    %v2155 = vunpack.c.l.b16 %v533
    %v2156 = vunpack.c.h.b16 %v533
    %v2157 = vunpack.c.l.b16 %v534
    %v2158 = vunpack.c.h.b16 %v534
    %v2159 = vunpack.c.l.b16 %v535
    %v2160 = vunpack.c.h.b16 %v535
    %v2161 = vunpack.c.l.b16 %v536
    %v2162 = vunpack.c.h.b16 %v536
    %v2163 = vunpack.c.l.b16 %v537
    %v2164 = vunpack.c.h.b16 %v537
    %v2165 = vunpack.c.l.b16 %v538
    %v2166 = vunpack.c.h.b16 %v538
    %v2167 = vunpack.c.l.b16 %v539
    %v2168 = vunpack.c.h.b16 %v539
    %v2169 = vunpack.c.l.b16 %v540
    %v2170 = vunpack.c.h.b16 %v540
    %v2171 = vunpack.c.l.b16 %v541
    %v2172 = vunpack.c.h.b16 %v541
    %v2173 = vunpack.c.l.b16 %v542
    %v2174 = vunpack.c.h.b16 %v542
    %v2175 = vunpack.c.l.b16 %v543
    %v2176 = vunpack.c.h.b16 %v543
    %v2177 = vunpack.c.l.b16 %v544
    %v2178 = vunpack.c.h.b16 %v544
    %v2179 = vunpack.c.l.b16 %v545
    %v2180 = vunpack.c.h.b16 %v545
    %v2181 = vunpack.c.l.b16 %v546
    %v2182 = vunpack.c.h.b16 %v546
    %v2183 = vunpack.c.l.b16 %v547
    %v2184 = vunpack.c.h.b16 %v547
    %v2185 = vunpack.c.l.b16 %v548
    %v2186 = vunpack.c.h.b16 %v548
    %v2187 = vunpack.c.l.b16 %v549
    %v2188 = vunpack.c.h.b16 %v549
    %v2189 = vunpack.c.l.b16 %v550
    %v2190 = vunpack.c.h.b16 %v550
    %v2191 = vunpack.c.l.b16 %v551
    %v2192 = vunpack.c.h.b16 %v551
    %v2193 = vunpack.c.l.b16 %v552
    %v2194 = vunpack.c.h.b16 %v552
    %v2195 = vunpack.c.l.b16 %v553
    %v2196 = vunpack.c.h.b16 %v553
    %v2197 = vunpack.c.l.b16 %v554
    %v2198 = vunpack.c.h.b16 %v554
    %v2199 = vunpack.c.l.b16 %v555
    %v2200 = vunpack.c.h.b16 %v555
    %v2201 = vunpack.c.l.b16 %v556
    %v2202 = vunpack.c.h.b16 %v556
    %v2203 = vunpack.c.l.b16 %v557
    %v2204 = vunpack.c.h.b16 %v557
    %v2205 = vunpack.c.l.b16 %v558
    %v2206 = vunpack.c.h.b16 %v558
    %v2207 = vunpack.c.l.b16 %v559
    %v2208 = vunpack.c.h.b16 %v559
    %v2209 = vunpack.c.l.b16 %v560
    %v2210 = vunpack.c.h.b16 %v560
    %v2211 = vunpack.c.l.b16 %v561
    %v2212 = vunpack.c.h.b16 %v561
    %v2213 = vunpack.c.l.b16 %v562
    %v2214 = vunpack.c.h.b16 %v562
    %v2215 = vunpack.c.l.b16 %v563
    %v2216 = vunpack.c.h.b16 %v563
    %v2217 = vunpack.c.l.b16 %v564
    %v2218 = vunpack.c.h.b16 %v564
    %v2219 = vunpack.c.l.b16 %v565
    %v2220 = vunpack.c.h.b16 %v565
    %v2221 = vunpack.c.l.b16 %v566
    %v2222 = vunpack.c.h.b16 %v566
    %v2223 = vunpack.c.l.b16 %v567
    %v2224 = vunpack.c.h.b16 %v567
    %v2225 = vunpack.c.l.b16 %v568
    %v2226 = vunpack.c.h.b16 %v568
    %v2227 = vunpack.c.l.b16 %v569
    %v2228 = vunpack.c.h.b16 %v569
    %v2229 = vunpack.c.l.b16 %v570
    %v2230 = vunpack.c.h.b16 %v570
    %v2231 = vunpack.c.l.b16 %v571
    %v2232 = vunpack.c.h.b16 %v571
    %v2233 = vunpack.c.l.b16 %v572
    %v2234 = vunpack.c.h.b16 %v572
    %v2235 = vunpack.c.l.b16 %v573
    %v2236 = vunpack.c.h.b16 %v573
    %v2237 = vunpack.c.l.b16 %v574
    %v2238 = vunpack.c.h.b16 %v574
    %v2239 = vunpack.c.l.b16 %v575
    %v2240 = vunpack.c.h.b16 %v575
    %v2241 = vunpack.c.l.b16 %v576
    %v2242 = vunpack.c.h.b16 %v576
    %v2243 = vunpack.c.l.b16 %v577
    %v2244 = vunpack.c.h.b16 %v577
    %v2245 = vunpack.c.l.b16 %v578
    %v2246 = vunpack.c.h.b16 %v578
    %v2247 = vunpack.c.l.b16 %v579
    %v2248 = vunpack.c.h.b16 %v579
    %v2249 = vunpack.c.l.b16 %v580
    %v2250 = vunpack.c.h.b16 %v580
    %v2251 = vunpack.c.l.b16 %v581
    %v2252 = vunpack.c.h.b16 %v581
    %v2253 = vunpack.c.l.b16 %v582
    %v2254 = vunpack.c.h.b16 %v582
    %v2255 = vunpack.c.l.b16 %v583
    %v2256 = vunpack.c.h.b16 %v583
    %v2257 = vunpack.c.l.b16 %v584
    %v2258 = vunpack.c.h.b16 %v584
    %v2259 = vunpack.c.l.b16 %v585
    %v2260 = vunpack.c.h.b16 %v585
    %v2261 = vunpack.c.l.b16 %v586
    %v2262 = vunpack.c.h.b16 %v586
    %v2263 = vunpack.c.l.b16 %v587
    %v2264 = vunpack.c.h.b16 %v587
    %v2265 = vunpack.c.l.b16 %v588
    %v2266 = vunpack.c.h.b16 %v588
    %v2267 = vunpack.c.l.b16 %v589
    %v2268 = vunpack.c.h.b16 %v589
    %v2269 = vunpack.c.l.b16 %v590
    %v2270 = vunpack.c.h.b16 %v590
    %v2271 = vunpack.c.l.b16 %v591
    %v2272 = vunpack.c.h.b16 %v591
    %v2273 = vunpack.c.l.b16 %v592
    %v2274 = vunpack.c.h.b16 %v592
    %v2275 = vunpack.c.l.b16 %v593
    %v2276 = vunpack.c.h.b16 %v593
    %v2277 = vunpack.c.l.b16 %v594
    %v2278 = vunpack.c.h.b16 %v594
    %v2279 = vunpack.c.l.b16 %v595
    %v2280 = vunpack.c.h.b16 %v595
    %v2281 = vunpack.c.l.b16 %v596
    %v2282 = vunpack.c.h.b16 %v596
    %v2283 = vunpack.c.l.b16 %v597
    %v2284 = vunpack.c.h.b16 %v597
    %v2285 = vunpack.c.l.b16 %v598
    %v2286 = vunpack.c.h.b16 %v598
    %v2287 = vunpack.c.l.b16 %v599
    %v2288 = vunpack.c.h.b16 %v599
    %v2289 = vunpack.c.l.b16 %v600
    %v2290 = vunpack.c.h.b16 %v600
    %v2291 = vunpack.c.l.b16 %v601
    %v2292 = vunpack.c.h.b16 %v601
    %v2293 = vunpack.c.l.b16 %v602
    %v2294 = vunpack.c.h.b16 %v602
    %v2295 = vunpack.c.l.b16 %v603
    %v2296 = vunpack.c.h.b16 %v603
    %v2297 = vunpack.c.l.b16 %v604
    %v2298 = vunpack.c.h.b16 %v604
    %v2299 = vunpack.c.l.b16 %v605
    %v2300 = vunpack.c.h.b16 %v605
    %v2301 = vunpack.c.l.b16 %v606
    %v2302 = vunpack.c.h.b16 %v606
    %v2303 = vunpack.c.l.b16 %v607
    %v2304 = vunpack.c.h.b16 %v607
    %v2305 = vunpack.c.l.b16 %v608
    %v2306 = vunpack.c.h.b16 %v608
    %v2307 = vunpack.c.l.b16 %v609
    %v2308 = vunpack.c.h.b16 %v609
    %v2309 = vunpack.c.l.b16 %v610
    %v2310 = vunpack.c.h.b16 %v610
    %v2311 = vunpack.c.l.b16 %v611
    %v2312 = vunpack.c.h.b16 %v611
    %v2313 = vunpack.c.l.b16 %v612
    %v2314 = vunpack.c.h.b16 %v612
    %v2315 = vunpack.c.l.b16 %v613
    %v2316 = vunpack.c.h.b16 %v613
    %v2317 = vunpack.c.l.b16 %v614
    %v2318 = vunpack.c.h.b16 %v614
    %v2319 = vunpack.c.l.b16 %v615
    %v2320 = vunpack.c.h.b16 %v615
    %v2321 = vunpack.c.l.b16 %v616
    %v2322 = vunpack.c.h.b16 %v616
    %v2323 = vunpack.c.l.b16 %v617
    %v2324 = vunpack.c.h.b16 %v617
    %v2325 = vunpack.c.l.b16 %v618
    %v2326 = vunpack.c.h.b16 %v618
    %v2327 = vunpack.c.l.b16 %v619
    %v2328 = vunpack.c.h.b16 %v619
    %v2329 = vunpack.c.l.b16 %v620
    %v2330 = vunpack.c.h.b16 %v620
    %v2331 = vunpack.c.l.b16 %v621
    %v2332 = vunpack.c.h.b16 %v621
    %v2333 = vunpack.c.l.b16 %v622
    %v2334 = vunpack.c.h.b16 %v622
    %v2335 = vunpack.c.l.b16 %v623
    %v2336 = vunpack.c.h.b16 %v623
    %v2337 = vunpack.c.l.b16 %v624
    %v2338 = vunpack.c.h.b16 %v624
    %v2339 = vunpack.c.l.b16 %v625
    %v2340 = vunpack.c.h.b16 %v625
    %v2341 = vunpack.c.l.b16 %v626
    %v2342 = vunpack.c.h.b16 %v626
    %v2343 = vunpack.c.l.b16 %v627
    %v2344 = vunpack.c.h.b16 %v627
    %v2345 = vunpack.c.l.b16 %v628
    %v2346 = vunpack.c.h.b16 %v628
    %v2347 = vunpack.c.l.b16 %v629
    %v2348 = vunpack.c.h.b16 %v629
    %v2349 = vunpack.c.l.b16 %v630
    %v2350 = vunpack.c.h.b16 %v630
    %v2351 = vunpack.c.l.b16 %v631
    %v2352 = vunpack.c.h.b16 %v631
    %v2353 = vunpack.c.l.b16 %v632
    %v2354 = vunpack.c.h.b16 %v632
    %v2355 = vunpack.c.l.b16 %v633
    %v2356 = vunpack.c.h.b16 %v633
    %v2357 = vunpack.c.l.b16 %v634
    %v2358 = vunpack.c.h.b16 %v634
    %v2359 = vunpack.c.l.b16 %v635
    %v2360 = vunpack.c.h.b16 %v635
    %v2361 = vunpack.c.l.b16 %v636
    %v2362 = vunpack.c.h.b16 %v636
    %v2363 = vunpack.c.l.b16 %v637
    %v2364 = vunpack.c.h.b16 %v637
    %v2365 = vunpack.c.l.b16 %v638
    %v2366 = vunpack.c.h.b16 %v638
    %v2367 = vunpack.c.l.b16 %v639
    %v2368 = vunpack.c.h.b16 %v639
    %v2369 = vunpack.c.l.b16 %v640
    %v2370 = vunpack.c.h.b16 %v640
    %v2371 = vunpack.c.l.b16 %v641
    %v2372 = vunpack.c.h.b16 %v641
    %v2373 = vunpack.c.l.b16 %v642
    %v2374 = vunpack.c.h.b16 %v642
    %v2375 = vunpack.c.l.b16 %v643
    %v2376 = vunpack.c.h.b16 %v643
    %v2377 = vunpack.c.l.b16 %v644
    %v2378 = vunpack.c.h.b16 %v644
    %v2379 = vunpack.c.l.b16 %v645
    %v2380 = vunpack.c.h.b16 %v645
    %v2381 = vunpack.c.l.b16 %v646
    %v2382 = vunpack.c.h.b16 %v646
    %v2383 = vunpack.c.l.b16 %v647
    %v2384 = vunpack.c.h.b16 %v647
    %v2385 = vunpack.c.l.b16 %v648
    %v2386 = vunpack.c.h.b16 %v648
    %v2387 = vunpack.c.l.b16 %v649
    %v2388 = vunpack.c.h.b16 %v649
    %v2389 = vunpack.c.l.b16 %v650
    %v2390 = vunpack.c.h.b16 %v650
    %v2391 = vunpack.c.l.b16 %v651
    %v2392 = vunpack.c.h.b16 %v651
    %v2393 = vunpack.c.l.b16 %v652
    %v2394 = vunpack.c.h.b16 %v652
    %v2395 = vunpack.c.l.b16 %v653
    %v2396 = vunpack.c.h.b16 %v653
    %v2397 = vunpack.c.l.b16 %v654
    %v2398 = vunpack.c.h.b16 %v654
    %v2399 = vunpack.c.l.b16 %v655
    %v2400 = vunpack.c.h.b16 %v655
    %v2401 = vunpack.c.l.b16 %v656
    %v2402 = vunpack.c.h.b16 %v656
    %v2403 = vunpack.c.l.b16 %v657
    %v2404 = vunpack.c.h.b16 %v657
    %v2405 = vunpack.c.l.b16 %v658
    %v2406 = vunpack.c.h.b16 %v658
    %v2407 = vunpack.c.l.b16 %v659
    %v2408 = vunpack.c.h.b16 %v659
    %v2409 = vunpack.c.l.b16 %v660
    %v2410 = vunpack.c.h.b16 %v660
    %v2411 = vunpack.c.l.b16 %v661
    %v2412 = vunpack.c.h.b16 %v661
    %v2413 = vunpack.c.l.b16 %v662
    %v2414 = vunpack.c.h.b16 %v662
    %v2415 = vunpack.c.l.b16 %v663
    %v2416 = vunpack.c.h.b16 %v663
    %v2417 = vunpack.c.l.b16 %v664
    %v2418 = vunpack.c.h.b16 %v664
    %v2419 = vunpack.c.l.b16 %v665
    %v2420 = vunpack.c.h.b16 %v665
    %v2421 = vunpack.c.l.b16 %v666
    %v2422 = vunpack.c.h.b16 %v666
    %v2423 = vunpack.c.l.b16 %v667
    %v2424 = vunpack.c.h.b16 %v667
    %v2425 = vunpack.c.l.b16 %v668
    %v2426 = vunpack.c.h.b16 %v668
    %v2427 = vunpack.c.l.b16 %v669
    %v2428 = vunpack.c.h.b16 %v669
    %v2429 = vunpack.c.l.b16 %v670
    %v2430 = vunpack.c.h.b16 %v670
    %v2431 = vunpack.c.l.b16 %v671
    %v2432 = vunpack.c.h.b16 %v671
    %v2433 = vunpack.c.l.b16 %v672
    %v2434 = vunpack.c.h.b16 %v672
    %v2435 = vunpack.c.l.b16 %v673
    %v2436 = vunpack.c.h.b16 %v673
    %v2437 = vunpack.c.l.b16 %v674
    %v2438 = vunpack.c.h.b16 %v674
    %v2439 = vunpack.c.l.b16 %v675
    %v2440 = vunpack.c.h.b16 %v675
    %v2441 = vunpack.c.l.b16 %v676
    %v2442 = vunpack.c.h.b16 %v676
    %v2443 = vunpack.c.l.b16 %v677
    %v2444 = vunpack.c.h.b16 %v677
    %v2445 = vunpack.c.l.b16 %v678
    %v2446 = vunpack.c.h.b16 %v678
    %v2447 = vunpack.c.l.b16 %v679
    %v2448 = vunpack.c.h.b16 %v679
    %v2449 = vunpack.c.l.b16 %v680
    %v2450 = vunpack.c.h.b16 %v680
    %v2451 = vunpack.c.l.b16 %v681
    %v2452 = vunpack.c.h.b16 %v681
    %v2453 = vunpack.c.l.b16 %v682
    %v2454 = vunpack.c.h.b16 %v682
    %v2455 = vunpack.c.l.b16 %v683
    %v2456 = vunpack.c.h.b16 %v683
    %v2457 = vunpack.c.l.b16 %v684
    %v2458 = vunpack.c.h.b16 %v684
    %v2459 = vunpack.c.l.b16 %v685
    %v2460 = vunpack.c.h.b16 %v685
    %v2461 = vunpack.c.l.b16 %v686
    %v2462 = vunpack.c.h.b16 %v686
    %v2463 = vunpack.c.l.b16 %v687
    %v2464 = vunpack.c.h.b16 %v687
    %v2465 = vunpack.c.l.b16 %v688
    %v2466 = vunpack.c.h.b16 %v688
    %v2467 = vunpack.c.l.b16 %v689
    %v2468 = vunpack.c.h.b16 %v689
    %v2469 = vunpack.c.l.b16 %v690
    %v2470 = vunpack.c.h.b16 %v690
    %v2471 = vunpack.c.l.b16 %v691
    %v2472 = vunpack.c.h.b16 %v691
    %v2473 = vunpack.c.l.b16 %v692
    %v2474 = vunpack.c.h.b16 %v692
    %v2475 = vunpack.c.l.b16 %v693
    %v2476 = vunpack.c.h.b16 %v693
    %v2477 = vunpack.c.l.b16 %v694
    %v2478 = vunpack.c.h.b16 %v694
    %v2479 = vunpack.c.l.b16 %v695
    %v2480 = vunpack.c.h.b16 %v695
    %v2481 = vunpack.c.l.b16 %v696
    %v2482 = vunpack.c.h.b16 %v696
    %v2483 = vunpack.c.l.b16 %v697
    %v2484 = vunpack.c.h.b16 %v697
    %v2485 = vunpack.c.l.b16 %v698
    %v2486 = vunpack.c.h.b16 %v698
    %v2487 = vunpack.c.l.b16 %v699
    %v2488 = vunpack.c.h.b16 %v699
    %v2489 = vunpack.c.l.b16 %v700
    %v2490 = vunpack.c.h.b16 %v700
    %v2491 = vunpack.c.l.b16 %v701
    %v2492 = vunpack.c.h.b16 %v701
    %v2493 = vunpack.c.l.b16 %v702
    %v2494 = vunpack.c.h.b16 %v702
    %v2495 = vunpack.c.l.b16 %v703
    %v2496 = vunpack.c.h.b16 %v703
    %v2497 = vunpack.c.l.b16 %v704
    %v2498 = vunpack.c.h.b16 %v704
    %v2499 = vunpack.c.l.b16 %v705
    %v2500 = vunpack.c.h.b16 %v705
    %v2501 = vunpack.c.l.b16 %v706
    %v2502 = vunpack.c.h.b16 %v706
    %v2503 = vunpack.c.l.b16 %v707
    %v2504 = vunpack.c.h.b16 %v707
    %v2505 = vunpack.c.l.b16 %v708
    %v2506 = vunpack.c.h.b16 %v708
    %v2507 = vunpack.c.l.b16 %v709
    %v2508 = vunpack.c.h.b16 %v709
    %v2509 = vunpack.c.l.b16 %v710
    %v2510 = vunpack.c.h.b16 %v710
    %v2511 = vunpack.c.l.b16 %v711
    %v2512 = vunpack.c.h.b16 %v711
    %v2513 = vunpack.c.l.b16 %v712
    %v2514 = vunpack.c.h.b16 %v712
    %v2515 = vunpack.c.l.b16 %v713
    %v2516 = vunpack.c.h.b16 %v713
    %v2517 = vunpack.c.l.b16 %v714
    %v2518 = vunpack.c.h.b16 %v714
    %v2519 = vunpack.c.l.b16 %v715
    %v2520 = vunpack.c.h.b16 %v715
    %v2521 = vunpack.c.l.b16 %v716
    %v2522 = vunpack.c.h.b16 %v716
    %v2523 = vunpack.c.l.b16 %v717
    %v2524 = vunpack.c.h.b16 %v717
    %v2525 = vunpack.c.l.b16 %v718
    %v2526 = vunpack.c.h.b16 %v718
    %v2527 = vunpack.c.l.b16 %v719
    %v2528 = vunpack.c.h.b16 %v719
    %v2529 = vunpack.c.l.b16 %v720
    %v2530 = vunpack.c.h.b16 %v720
    %v2531 = vunpack.c.l.b16 %v721
    %v2532 = vunpack.c.h.b16 %v721
    %v2533 = vunpack.c.l.b16 %v722
    %v2534 = vunpack.c.h.b16 %v722
    %v2535 = vunpack.c.l.b16 %v723
    %v2536 = vunpack.c.h.b16 %v723
    %v2537 = vunpack.c.l.b16 %v724
    %v2538 = vunpack.c.h.b16 %v724
    %v2539 = vunpack.c.l.b16 %v725
    %v2540 = vunpack.c.h.b16 %v725
    %v2541 = vunpack.c.l.b16 %v726
    %v2542 = vunpack.c.h.b16 %v726
    %v2543 = vunpack.c.l.b16 %v727
    %v2544 = vunpack.c.h.b16 %v727
    %v2545 = vunpack.c.l.b16 %v728
    %v2546 = vunpack.c.h.b16 %v728
    %v2547 = vunpack.c.l.b16 %v729
    %v2548 = vunpack.c.h.b16 %v729
    %v2549 = vunpack.c.l.b16 %v730
    %v2550 = vunpack.c.h.b16 %v730
    %v2551 = vunpack.c.l.b16 %v731
    %v2552 = vunpack.c.h.b16 %v731
    %v2553 = vunpack.c.l.b16 %v732
    %v2554 = vunpack.c.h.b16 %v732
    %v2555 = vunpack.c.l.b16 %v733
    %v2556 = vunpack.c.h.b16 %v733
    %v2557 = vunpack.c.l.b16 %v734
    %v2558 = vunpack.c.h.b16 %v734
    %v2559 = vunpack.c.l.b16 %v735
    %v2560 = vunpack.c.h.b16 %v735
    %v2561 = vunpack.c.l.b16 %v736
    %v2562 = vunpack.c.h.b16 %v736
    %v2563 = vunpack.c.l.b16 %v737
    %v2564 = vunpack.c.h.b16 %v737
    %v2565 = vunpack.c.l.b16 %v738
    %v2566 = vunpack.c.h.b16 %v738
    %v2567 = vunpack.c.l.b16 %v739
    %v2568 = vunpack.c.h.b16 %v739
    %v2569 = vunpack.c.l.b16 %v740
    %v2570 = vunpack.c.h.b16 %v740
    %v2571 = vunpack.c.l.b16 %v741
    %v2572 = vunpack.c.h.b16 %v741
    %v2573 = vunpack.c.l.b16 %v742
    %v2574 = vunpack.c.h.b16 %v742
    %v2575 = vunpack.c.l.b16 %v743
    %v2576 = vunpack.c.h.b16 %v743
    %v2577 = vunpack.c.l.b16 %v744
    %v2578 = vunpack.c.h.b16 %v744
    %v2579 = vunpack.c.l.b16 %v745
    %v2580 = vunpack.c.h.b16 %v745
    %v2581 = vunpack.c.l.b16 %v746
    %v2582 = vunpack.c.h.b16 %v746
    %v2583 = vunpack.c.l.b16 %v747
    %v2584 = vunpack.c.h.b16 %v747
    %v2585 = vunpack.c.l.b16 %v748
    %v2586 = vunpack.c.h.b16 %v748
    %v2587 = vunpack.c.l.b16 %v749
    %v2588 = vunpack.c.h.b16 %v749
    %v2589 = vunpack.c.l.b16 %v750
    %v2590 = vunpack.c.h.b16 %v750
    %v2591 = vunpack.c.l.b16 %v751
    %v2592 = vunpack.c.h.b16 %v751
    %v2593 = vunpack.c.l.b16 %v752
    %v2594 = vunpack.c.h.b16 %v752
    %v2595 = vunpack.c.l.b16 %v753
    %v2596 = vunpack.c.h.b16 %v753
    %v2597 = vunpack.c.l.b16 %v754
    %v2598 = vunpack.c.h.b16 %v754
    %v2599 = vunpack.c.l.b16 %v755
    %v2600 = vunpack.c.h.b16 %v755
    %v2601 = vunpack.c.l.b16 %v756
    %v2602 = vunpack.c.h.b16 %v756
    %v2603 = vunpack.c.l.b16 %v757
    %v2604 = vunpack.c.h.b16 %v757
    %v2605 = vunpack.c.l.b16 %v758
    %v2606 = vunpack.c.h.b16 %v758
    %v2607 = vunpack.c.l.b16 %v759
    %v2608 = vunpack.c.h.b16 %v759
    %v2609 = vunpack.c.l.b16 %v760
    %v2610 = vunpack.c.h.b16 %v760
    %v2611 = vunpack.c.l.b16 %v761
    %v2612 = vunpack.c.h.b16 %v761
    %v2613 = vunpack.c.l.b16 %v762
    %v2614 = vunpack.c.h.b16 %v762
    %v2615 = vunpack.c.l.b16 %v763
    %v2616 = vunpack.c.h.b16 %v763
    %v2617 = vunpack.c.l.b16 %v764
    %v2618 = vunpack.c.h.b16 %v764
    %v2619 = vunpack.c.l.b16 %v765
    %v2620 = vunpack.c.h.b16 %v765
    %v2621 = vunpack.c.l.b16 %v766
    %v2622 = vunpack.c.h.b16 %v766
    %v2623 = vunpack.c.l.b16 %v767
    %v2624 = vunpack.c.h.b16 %v767
    %v2625 = vunpack.c.l.b16 %v768
    %v2626 = vunpack.c.h.b16 %v768
    %v2627 = vunpack.c.l.b16 %v769
    %v2628 = vunpack.c.h.b16 %v769
    %v2629 = vunpack.c.l.b16 %v770
    %v2630 = vunpack.c.h.b16 %v770
    %v2631 = vunpack.c.l.b16 %v771
    %v2632 = vunpack.c.h.b16 %v771
    %v2633 = vunpack.c.l.b16 %v772
    %v2634 = vunpack.c.h.b16 %v772
    %v2635 = vunpack.c.l.b16 %v773
    %v2636 = vunpack.c.h.b16 %v773
    %v2637 = vunpack.c.l.b16 %v774
    %v2638 = vunpack.c.h.b16 %v774
    %v2639 = vunpack.c.l.b16 %v775
    %v2640 = vunpack.c.h.b16 %v775
    %v2641 = vunpack.c.l.b16 %v776
    %v2642 = vunpack.c.h.b16 %v776
    %v2643 = vunpack.c.l.b16 %v777
    %v2644 = vunpack.c.h.b16 %v777
    %v2645 = vunpack.c.l.b16 %v778
    %v2646 = vunpack.c.h.b16 %v778
    %v2647 = vunpack.c.l.b16 %v779
    %v2648 = vunpack.c.h.b16 %v779
    %v2649 = vunpack.c.l.b16 %v780
    %v2650 = vunpack.c.h.b16 %v780
    %v2651 = vunpack.c.l.b16 %v781
    %v2652 = vunpack.c.h.b16 %v781
    %v2653 = vunpack.c.l.b16 %v782
    %v2654 = vunpack.c.h.b16 %v782
    %v2655 = vunpack.c.l.b16 %v783
    %v2656 = vunpack.c.h.b16 %v783
    %v2657 = vunpack.c.l.b16 %v784
    %v2658 = vunpack.c.h.b16 %v784
    %v2659 = vunpack.c.l.b16 %v785
    %v2660 = vunpack.c.h.b16 %v785
    %v2661 = vunpack.c.l.b16 %v786
    %v2662 = vunpack.c.h.b16 %v786
    %v2663 = vunpack.c.l.b16 %v787
    %v2664 = vunpack.c.h.b16 %v787
    %v2665 = vunpack.c.l.b16 %v788
    %v2666 = vunpack.c.h.b16 %v788
    %v2667 = vunpack.c.l.b16 %v789
    %v2668 = vunpack.c.h.b16 %v789
    %v2669 = vunpack.c.l.b16 %v790
    %v2670 = vunpack.c.h.b16 %v790
    %v2671 = vunpack.c.l.b16 %v791
    %v2672 = vunpack.c.h.b16 %v791
    %v2673 = vunpack.c.l.b16 %v792
    %v2674 = vunpack.c.h.b16 %v792
    %v2675 = vunpack.c.l.b16 %v793
    %v2676 = vunpack.c.h.b16 %v793
    %v2677 = vunpack.c.l.b16 %v794
    %v2678 = vunpack.c.h.b16 %v794
    %v2679 = vunpack.c.l.b16 %v795
    %v2680 = vunpack.c.h.b16 %v795
    %v2681 = vunpack.c.l.b16 %v796
    %v2682 = vunpack.c.h.b16 %v796
    %v2683 = vunpack.c.l.b16 %v797
    %v2684 = vunpack.c.h.b16 %v797
    %v2685 = vunpack.c.l.b16 %v798
    %v2686 = vunpack.c.h.b16 %v798
    %v2687 = vunpack.c.l.b16 %v799
    %v2688 = vunpack.c.h.b16 %v799
    %v2689 = vunpack.c.l.b16 %v800
    %v2690 = vunpack.c.h.b16 %v800
    %v2691 = vunpack.c.l.b16 %v801
    %v2692 = vunpack.c.h.b16 %v801
    %v2693 = vunpack.c.l.b16 %v802
    %v2694 = vunpack.c.h.b16 %v802
    %v2695 = vunpack.c.l.b16 %v803
    %v2696 = vunpack.c.h.b16 %v803
    %v2697 = vunpack.c.l.b16 %v804
    %v2698 = vunpack.c.h.b16 %v804
    %v2699 = vunpack.c.l.b16 %v805
    %v2700 = vunpack.c.h.b16 %v805
    %v2701 = vunpack.c.l.b16 %v806
    %v2702 = vunpack.c.h.b16 %v806
    %v2703 = vunpack.c.l.b16 %v807
    %v2704 = vunpack.c.h.b16 %v807
    %v2705 = vunpack.c.l.b16 %v808
    %v2706 = vunpack.c.h.b16 %v808
    %v2707 = vunpack.c.l.b16 %v809
    %v2708 = vunpack.c.h.b16 %v809
    %v2709 = vunpack.c.l.b16 %v810
    %v2710 = vunpack.c.h.b16 %v810
    %v2711 = vunpack.c.l.b16 %v811
    %v2712 = vunpack.c.h.b16 %v811
    %v2713 = vpack.c.b16 %v1563, %v1561
    %v2714 = vpack.c.b16 %v1564, %v1562
    %v2715 = vpack.c.b16 %v1567, %v1565
    %v2716 = vpack.c.b16 %v1568, %v1566
    %v2717 = vpack.c.b16 %v1571, %v1569
    %v2718 = vpack.c.b16 %v1572, %v1570
    %v2719 = vpack.c.b16 %v1575, %v1573
    %v2720 = vpack.c.b16 %v1576, %v1574
    %v2721 = vpack.c.b16 %v1579, %v1577
    %v2722 = vpack.c.b16 %v1580, %v1578
    %v2723 = vpack.c.b16 %v1583, %v1581
    %v2724 = vpack.c.b16 %v1584, %v1582
    %v2725 = vpack.c.b16 %v1587, %v1585
    %v2726 = vpack.c.b16 %v1588, %v1586
    %v2727 = vpack.c.b16 %v1591, %v1589
    %v2728 = vpack.c.b16 %v1592, %v1590
    %v2729 = vpack.c.b16 %v1595, %v1593
    %v2730 = vpack.c.b16 %v1596, %v1594
    %v2731 = vpack.c.b16 %v1599, %v1597
    %v2732 = vpack.c.b16 %v1600, %v1598
    %v2733 = vpack.c.b16 %v1603, %v1601
    %v2734 = vpack.c.b16 %v1604, %v1602
    %v2735 = vpack.c.b16 %v1607, %v1605
    %v2736 = vpack.c.b16 %v1608, %v1606
    %v2737 = vpack.c.b16 %v1611, %v1609
    %v2738 = vpack.c.b16 %v1612, %v1610
    %v2739 = vpack.c.b16 %v1615, %v1613
    %v2740 = vpack.c.b16 %v1616, %v1614
    %v2741 = vpack.c.b16 %v1619, %v1617
    %v2742 = vpack.c.b16 %v1620, %v1618
    %v2743 = vpack.c.b16 %v1623, %v1621
    %v2744 = vpack.c.b16 %v1624, %v1622
    %v2745 = vpack.c.b16 %v1627, %v1625
    %v2746 = vpack.c.b16 %v1628, %v1626
    %v2747 = vpack.c.b16 %v1631, %v1629
    %v2748 = vpack.c.b16 %v1632, %v1630
    %v2749 = vpack.c.b16 %v1635, %v1633
    %v2750 = vpack.c.b16 %v1636, %v1634
    %v2751 = vpack.c.b16 %v1639, %v1637
    %v2752 = vpack.c.b16 %v1640, %v1638
    %v2753 = vpack.c.b16 %v1643, %v1641
    %v2754 = vpack.c.b16 %v1644, %v1642
    %v2755 = vpack.c.b16 %v1647, %v1645
    %v2756 = vpack.c.b16 %v1648, %v1646
    %v2757 = vpack.c.b16 %v1651, %v1649
    %v2758 = vpack.c.b16 %v1652, %v1650
    %v2759 = vpack.c.b16 %v1655, %v1653
    %v2760 = vpack.c.b16 %v1656, %v1654
    %v2761 = vpack.c.b16 %v1659, %v1657
    %v2762 = vpack.c.b16 %v1660, %v1658
    %v2763 = vpack.c.b16 %v1663, %v1661
    %v2764 = vpack.c.b16 %v1664, %v1662
    %v2765 = vpack.c.b16 %v1667, %v1665
    %v2766 = vpack.c.b16 %v1668, %v1666
    %v2767 = vpack.c.b16 %v1671, %v1669
    %v2768 = vpack.c.b16 %v1672, %v1670
    %v2769 = vpack.c.b16 %v1675, %v1673
    %v2770 = vpack.c.b16 %v1676, %v1674
    %v2771 = vpack.c.b16 %v1679, %v1677
    %v2772 = vpack.c.b16 %v1680, %v1678
    %v2773 = vpack.c.b16 %v1683, %v1681
    %v2774 = vpack.c.b16 %v1684, %v1682
    %v2775 = vpack.c.b16 %v1687, %v1685
    %v2776 = vpack.c.b16 %v1688, %v1686
    %v2777 = vpack.c.b16 %v1691, %v1689
    %v2778 = vpack.c.b16 %v1692, %v1690
    %v2779 = vpack.c.b16 %v1695, %v1693
    %v2780 = vpack.c.b16 %v1696, %v1694
    %v2781 = vpack.c.b16 %v1699, %v1697
    %v2782 = vpack.c.b16 %v1700, %v1698
    %v2783 = vpack.c.b16 %v1703, %v1701
    %v2784 = vpack.c.b16 %v1704, %v1702
    %v2785 = vpack.c.b16 %v1707, %v1705
    %v2786 = vpack.c.b16 %v1708, %v1706
    %v2787 = vpack.c.b16 %v1711, %v1709
    %v2788 = vpack.c.b16 %v1712, %v1710
    %v2789 = vpack.c.b16 %v1715, %v1713
    %v2790 = vpack.c.b16 %v1716, %v1714
    %v2791 = vpack.c.b16 %v1719, %v1717
    %v2792 = vpack.c.b16 %v1720, %v1718
    %v2793 = vpack.c.b16 %v1723, %v1721
    %v2794 = vpack.c.b16 %v1724, %v1722
    %v2795 = vpack.c.b16 %v1727, %v1725
    %v2796 = vpack.c.b16 %v1728, %v1726
    %v2797 = vpack.c.b16 %v1731, %v1729
    %v2798 = vpack.c.b16 %v1732, %v1730
    %v2799 = vpack.c.b16 %v1735, %v1733
    %v2800 = vpack.c.b16 %v1736, %v1734
    %v2801 = vpack.c.b16 %v1739, %v1737
    %v2802 = vpack.c.b16 %v1740, %v1738
    %v2803 = vpack.c.b16 %v1743, %v1741
    %v2804 = vpack.c.b16 %v1744, %v1742
    %v2805 = vpack.c.b16 %v1747, %v1745
    %v2806 = vpack.c.b16 %v1748, %v1746
    %v2807 = vpack.c.b16 %v1751, %v1749
    %v2808 = vpack.c.b16 %v1752, %v1750
    %v2809 = vpack.c.b16 %v1755, %v1753
    %v2810 = vpack.c.b16 %v1756, %v1754
    %v2811 = vpack.c.b16 %v1759, %v1757
    %v2812 = vpack.c.b16 %v1760, %v1758
    %v2813 = vpack.c.b16 %v1763, %v1761
    %v2814 = vpack.c.b16 %v1764, %v1762
    %v2815 = vpack.c.b16 %v1767, %v1765
    %v2816 = vpack.c.b16 %v1768, %v1766
    %v2817 = vpack.c.b16 %v1771, %v1769
    %v2818 = vpack.c.b16 %v1772, %v1770
    %v2819 = vpack.c.b16 %v1775, %v1773
    %v2820 = vpack.c.b16 %v1776, %v1774
    %v2821 = vpack.c.b16 %v1779, %v1777
    %v2822 = vpack.c.b16 %v1780, %v1778
    %v2823 = vpack.c.b16 %v1783, %v1781
    %v2824 = vpack.c.b16 %v1784, %v1782
    %v2825 = vpack.c.b16 %v1787, %v1785
    %v2826 = vpack.c.b16 %v1788, %v1786
    %v2827 = vpack.c.b16 %v1791, %v1789
    %v2828 = vpack.c.b16 %v1792, %v1790
    %v2829 = vpack.c.b16 %v1795, %v1793
    %v2830 = vpack.c.b16 %v1796, %v1794
    %v2831 = vpack.c.b16 %v1799, %v1797
    %v2832 = vpack.c.b16 %v1800, %v1798
    %v2833 = vpack.c.b16 %v1803, %v1801
    %v2834 = vpack.c.b16 %v1804, %v1802
    %v2835 = vpack.c.b16 %v1807, %v1805
    %v2836 = vpack.c.b16 %v1808, %v1806
    %v2837 = vpack.c.b16 %v1811, %v1809
    %v2838 = vpack.c.b16 %v1812, %v1810
    %v2839 = vpack.c.b16 %v1815, %v1813
    %v2840 = vpack.c.b16 %v1816, %v1814
    %v2841 = vpack.c.b16 %v1819, %v1817
    %v2842 = vpack.c.b16 %v1820, %v1818
    %v2843 = vpack.c.b16 %v1823, %v1821
    %v2844 = vpack.c.b16 %v1824, %v1822
    %v2845 = vpack.c.b16 %v1827, %v1825
    %v2846 = vpack.c.b16 %v1828, %v1826
    %v2847 = vpack.c.b16 %v1831, %v1829
    %v2848 = vpack.c.b16 %v1832, %v1830
    %v2849 = vpack.c.b16 %v1835, %v1833
    %v2850 = vpack.c.b16 %v1836, %v1834
    %v2851 = vpack.c.b16 %v1839, %v1837
    %v2852 = vpack.c.b16 %v1840, %v1838
    %v2853 = vpack.c.b16 %v1843, %v1841
    %v2854 = vpack.c.b16 %v1844, %v1842
    %v2855 = vpack.c.b16 %v1847, %v1845
    %v2856 = vpack.c.b16 %v1848, %v1846
    %v2857 = vpack.c.b16 %v1851, %v1849
    %v2858 = vpack.c.b16 %v1852, %v1850
    %v2859 = vpack.c.b16 %v1855, %v1853
    %v2860 = vpack.c.b16 %v1856, %v1854
    %v2861 = vpack.c.b16 %v1859, %v1857
    %v2862 = vpack.c.b16 %v1860, %v1858
    %v2863 = vpack.c.b16 %v1863, %v1861
    %v2864 = vpack.c.b16 %v1864, %v1862
    %v2865 = vpack.c.b16 %v1867, %v1865
    %v2866 = vpack.c.b16 %v1868, %v1866
    %v2867 = vpack.c.b16 %v1871, %v1869
    %v2868 = vpack.c.b16 %v1872, %v1870
    %v2869 = vpack.c.b16 %v1875, %v1873
    %v2870 = vpack.c.b16 %v1876, %v1874
    %v2871 = vpack.c.b16 %v1879, %v1877
    %v2872 = vpack.c.b16 %v1880, %v1878
    %v2873 = vpack.c.b16 %v1883, %v1881
    %v2874 = vpack.c.b16 %v1884, %v1882
    %v2875 = vpack.c.b16 %v1887, %v1885
    %v2876 = vpack.c.b16 %v1888, %v1886
    %v2877 = vpack.c.b16 %v1891, %v1889
    %v2878 = vpack.c.b16 %v1892, %v1890
    %v2879 = vpack.c.b16 %v1895, %v1893
    %v2880 = vpack.c.b16 %v1896, %v1894
    %v2881 = vpack.c.b16 %v1899, %v1897
    %v2882 = vpack.c.b16 %v1900, %v1898
    %v2883 = vpack.c.b16 %v1903, %v1901
    %v2884 = vpack.c.b16 %v1904, %v1902
    %v2885 = vpack.c.b16 %v1907, %v1905
    %v2886 = vpack.c.b16 %v1908, %v1906
    %v2887 = vpack.c.b16 %v1911, %v1909
    %v2888 = vpack.c.b16 %v1912, %v1910
    %v2889 = vpack.c.b16 %v1915, %v1913
    %v2890 = vpack.c.b16 %v1916, %v1914
    %v2891 = vpack.c.b16 %v1919, %v1917
    %v2892 = vpack.c.b16 %v1920, %v1918
    %v2893 = vpack.c.b16 %v1923, %v1921
    %v2894 = vpack.c.b16 %v1924, %v1922
    %v2895 = vpack.c.b16 %v1927, %v1925
    %v2896 = vpack.c.b16 %v1928, %v1926
    %v2897 = vpack.c.b16 %v1931, %v1929
    %v2898 = vpack.c.b16 %v1932, %v1930
    %v2899 = vpack.c.b16 %v1935, %v1933
    %v2900 = vpack.c.b16 %v1936, %v1934
    %v2901 = vpack.c.b16 %v1939, %v1937
    %v2902 = vpack.c.b16 %v1940, %v1938
    %v2903 = vpack.c.b16 %v1943, %v1941
    %v2904 = vpack.c.b16 %v1944, %v1942
    %v2905 = vpack.c.b16 %v1947, %v1945
    %v2906 = vpack.c.b16 %v1948, %v1946
    %v2907 = vpack.c.b16 %v1951, %v1949
    %v2908 = vpack.c.b16 %v1952, %v1950
    %v2909 = vpack.c.b16 %v1955, %v1953
    %v2910 = vpack.c.b16 %v1956, %v1954
    %v2911 = vpack.c.b16 %v1959, %v1957
    %v2912 = vpack.c.b16 %v1960, %v1958
    %v2913 = vpack.c.b16 %v1963, %v1961
    %v2914 = vpack.c.b16 %v1964, %v1962
    %v2915 = vpack.c.b16 %v1967, %v1965
    %v2916 = vpack.c.b16 %v1968, %v1966
    %v2917 = vpack.c.b16 %v1971, %v1969
    %v2918 = vpack.c.b16 %v1972, %v1970
    %v2919 = vpack.c.b16 %v1975, %v1973
    %v2920 = vpack.c.b16 %v1976, %v1974
    %v2921 = vpack.c.b16 %v1979, %v1977
    %v2922 = vpack.c.b16 %v1980, %v1978
    %v2923 = vpack.c.b16 %v1983, %v1981
    %v2924 = vpack.c.b16 %v1984, %v1982
    %v2925 = vpack.c.b16 %v1987, %v1985
    %v2926 = vpack.c.b16 %v1988, %v1986
    %v2927 = vpack.c.b16 %v1991, %v1989
    %v2928 = vpack.c.b16 %v1992, %v1990
    %v2929 = vpack.c.b16 %v1995, %v1993
    %v2930 = vpack.c.b16 %v1996, %v1994
    %v2931 = vpack.c.b16 %v1999, %v1997
    %v2932 = vpack.c.b16 %v2000, %v1998
    %v2933 = vpack.c.b16 %v2003, %v2001
    %v2934 = vpack.c.b16 %v2004, %v2002
    %v2935 = vpack.c.b16 %v2007, %v2005
    %v2936 = vpack.c.b16 %v2008, %v2006
    %v2937 = vpack.c.b16 %v2011, %v2009
    %v2938 = vpack.c.b16 %v2012, %v2010
    %v2939 = vpack.c.b16 %v2015, %v2013
    %v2940 = vpack.c.b16 %v2016, %v2014
    %v2941 = vpack.c.b16 %v2019, %v2017
    %v2942 = vpack.c.b16 %v2020, %v2018
    %v2943 = vpack.c.b16 %v2023, %v2021
    %v2944 = vpack.c.b16 %v2024, %v2022
    %v2945 = vpack.c.b16 %v2027, %v2025
    %v2946 = vpack.c.b16 %v2028, %v2026
    %v2947 = vpack.c.b16 %v2031, %v2029
    %v2948 = vpack.c.b16 %v2032, %v2030
    %v2949 = vpack.c.b16 %v2035, %v2033
    %v2950 = vpack.c.b16 %v2036, %v2034
    %v2951 = vpack.c.b16 %v2039, %v2037
    %v2952 = vpack.c.b16 %v2040, %v2038
    %v2953 = vpack.c.b16 %v2043, %v2041
    %v2954 = vpack.c.b16 %v2044, %v2042
    %v2955 = vpack.c.b16 %v2047, %v2045
    %v2956 = vpack.c.b16 %v2048, %v2046
    %v2957 = vpack.c.b16 %v2051, %v2049
    %v2958 = vpack.c.b16 %v2052, %v2050
    %v2959 = vpack.c.b16 %v2055, %v2053
    %v2960 = vpack.c.b16 %v2056, %v2054
    %v2961 = vpack.c.b16 %v2059, %v2057
    %v2962 = vpack.c.b16 %v2060, %v2058
    %v2963 = vpack.c.b16 %v2063, %v2061
    %v2964 = vpack.c.b16 %v2064, %v2062
    %v2965 = vpack.c.b16 %v2067, %v2065
    %v2966 = vpack.c.b16 %v2068, %v2066
    %v2967 = vpack.c.b16 %v2071, %v2069
    %v2968 = vpack.c.b16 %v2072, %v2070
    %v2969 = vpack.c.b16 %v2075, %v2073
    %v2970 = vpack.c.b16 %v2076, %v2074
    %v2971 = vpack.c.b16 %v2079, %v2077
    %v2972 = vpack.c.b16 %v2080, %v2078
    %v2973 = vpack.c.b16 %v2083, %v2081
    %v2974 = vpack.c.b16 %v2084, %v2082
    %v2975 = vpack.c.b16 %v2087, %v2085
    %v2976 = vpack.c.b16 %v2088, %v2086
    %v2977 = vpack.c.b16 %v2091, %v2089
    %v2978 = vpack.c.b16 %v2092, %v2090
    %v2979 = vpack.c.b16 %v2095, %v2093
    %v2980 = vpack.c.b16 %v2096, %v2094
    %v2981 = vpack.c.b16 %v2099, %v2097
    %v2982 = vpack.c.b16 %v2100, %v2098
    %v2983 = vpack.c.b16 %v2103, %v2101
    %v2984 = vpack.c.b16 %v2104, %v2102
    %v2985 = vpack.c.b16 %v2107, %v2105
    %v2986 = vpack.c.b16 %v2108, %v2106
    %v2987 = vpack.c.b16 %v2111, %v2109
    %v2988 = vpack.c.b16 %v2112, %v2110
    %v2989 = vpack.c.b16 %v2115, %v2113
    %v2990 = vpack.c.b16 %v2116, %v2114
    %v2991 = vpack.c.b16 %v2119, %v2117
    %v2992 = vpack.c.b16 %v2120, %v2118
    %v2993 = vpack.c.b16 %v2123, %v2121
    %v2994 = vpack.c.b16 %v2124, %v2122
    %v2995 = vpack.c.b16 %v2127, %v2125
    %v2996 = vpack.c.b16 %v2128, %v2126
    %v2997 = vpack.c.b16 %v2131, %v2129
    %v2998 = vpack.c.b16 %v2132, %v2130
    %v2999 = vpack.c.b16 %v2135, %v2133
    %v3000 = vpack.c.b16 %v2136, %v2134
    %v3001 = vpack.c.b16 %v2139, %v2137
    %v3002 = vpack.c.b16 %v2140, %v2138
    %v3003 = vpack.c.b16 %v2143, %v2141
    %v3004 = vpack.c.b16 %v2144, %v2142
    %v3005 = vpack.c.b16 %v2147, %v2145
    %v3006 = vpack.c.b16 %v2148, %v2146
    %v3007 = vpack.c.b16 %v2151, %v2149
    %v3008 = vpack.c.b16 %v2152, %v2150
    %v3009 = vpack.c.b16 %v2155, %v2153
    %v3010 = vpack.c.b16 %v2156, %v2154
    %v3011 = vpack.c.b16 %v2159, %v2157
    %v3012 = vpack.c.b16 %v2160, %v2158
    %v3013 = vpack.c.b16 %v2163, %v2161
    %v3014 = vpack.c.b16 %v2164, %v2162
    %v3015 = vpack.c.b16 %v2167, %v2165
    %v3016 = vpack.c.b16 %v2168, %v2166
    %v3017 = vpack.c.b16 %v2171, %v2169
    %v3018 = vpack.c.b16 %v2172, %v2170
    %v3019 = vpack.c.b16 %v2175, %v2173
    %v3020 = vpack.c.b16 %v2176, %v2174
    %v3021 = vpack.c.b16 %v2179, %v2177
    %v3022 = vpack.c.b16 %v2180, %v2178
    %v3023 = vpack.c.b16 %v2183, %v2181
    %v3024 = vpack.c.b16 %v2184, %v2182
    %v3025 = vpack.c.b16 %v2187, %v2185
    %v3026 = vpack.c.b16 %v2188, %v2186
    %v3027 = vpack.c.b16 %v2191, %v2189
    %v3028 = vpack.c.b16 %v2192, %v2190
    %v3029 = vpack.c.b16 %v2195, %v2193
    %v3030 = vpack.c.b16 %v2196, %v2194
    %v3031 = vpack.c.b16 %v2199, %v2197
    %v3032 = vpack.c.b16 %v2200, %v2198
    %v3033 = vpack.c.b16 %v2203, %v2201
    %v3034 = vpack.c.b16 %v2204, %v2202
    %v3035 = vpack.c.b16 %v2207, %v2205
    %v3036 = vpack.c.b16 %v2208, %v2206
    %v3037 = vpack.c.b16 %v2211, %v2209
    %v3038 = vpack.c.b16 %v2212, %v2210
    %v3039 = vpack.c.b16 %v2215, %v2213
    %v3040 = vpack.c.b16 %v2216, %v2214
    %v3041 = vpack.c.b16 %v2219, %v2217
    %v3042 = vpack.c.b16 %v2220, %v2218
    %v3043 = vpack.c.b16 %v2223, %v2221
    %v3044 = vpack.c.b16 %v2224, %v2222
    %v3045 = vpack.c.b16 %v2227, %v2225
    %v3046 = vpack.c.b16 %v2228, %v2226
    %v3047 = vpack.c.b16 %v2231, %v2229
    %v3048 = vpack.c.b16 %v2232, %v2230
    %v3049 = vpack.c.b16 %v2235, %v2233
    %v3050 = vpack.c.b16 %v2236, %v2234
    %v3051 = vpack.c.b16 %v2239, %v2237
    %v3052 = vpack.c.b16 %v2240, %v2238
    %v3053 = vpack.c.b16 %v2243, %v2241
    %v3054 = vpack.c.b16 %v2244, %v2242
    %v3055 = vpack.c.b16 %v2247, %v2245
    %v3056 = vpack.c.b16 %v2248, %v2246
    %v3057 = vpack.c.b16 %v2251, %v2249
    %v3058 = vpack.c.b16 %v2252, %v2250
    %v3059 = vpack.c.b16 %v2255, %v2253
    %v3060 = vpack.c.b16 %v2256, %v2254
    %v3061 = vpack.c.b16 %v2259, %v2257
    %v3062 = vpack.c.b16 %v2260, %v2258
    %v3063 = vpack.c.b16 %v2263, %v2261
    %v3064 = vpack.c.b16 %v2264, %v2262
    %v3065 = vpack.c.b16 %v2267, %v2265
    %v3066 = vpack.c.b16 %v2268, %v2266
    %v3067 = vpack.c.b16 %v2271, %v2269
    %v3068 = vpack.c.b16 %v2272, %v2270
    %v3069 = vpack.c.b16 %v2275, %v2273
    %v3070 = vpack.c.b16 %v2276, %v2274
    %v3071 = vpack.c.b16 %v2279, %v2277
    %v3072 = vpack.c.b16 %v2280, %v2278
    %v3073 = vpack.c.b16 %v2283, %v2281
    %v3074 = vpack.c.b16 %v2284, %v2282
    %v3075 = vpack.c.b16 %v2287, %v2285
    %v3076 = vpack.c.b16 %v2288, %v2286
    %v3077 = vpack.c.b16 %v2291, %v2289
    %v3078 = vpack.c.b16 %v2292, %v2290
    %v3079 = vpack.c.b16 %v2295, %v2293
    %v3080 = vpack.c.b16 %v2296, %v2294
    %v3081 = vpack.c.b16 %v2299, %v2297
    %v3082 = vpack.c.b16 %v2300, %v2298
    %v3083 = vpack.c.b16 %v2303, %v2301
    %v3084 = vpack.c.b16 %v2304, %v2302
    %v3085 = vpack.c.b16 %v2307, %v2305
    %v3086 = vpack.c.b16 %v2308, %v2306
    %v3087 = vpack.c.b16 %v2311, %v2309
    %v3088 = vpack.c.b16 %v2312, %v2310
    %v3089 = vpack.c.b16 %v2315, %v2313
    %v3090 = vpack.c.b16 %v2316, %v2314
    %v3091 = vpack.c.b16 %v2319, %v2317
    %v3092 = vpack.c.b16 %v2320, %v2318
    %v3093 = vpack.c.b16 %v2323, %v2321
    %v3094 = vpack.c.b16 %v2324, %v2322
    %v3095 = vpack.c.b16 %v2327, %v2325
    %v3096 = vpack.c.b16 %v2328, %v2326
    %v3097 = vpack.c.b16 %v2331, %v2329
    %v3098 = vpack.c.b16 %v2332, %v2330
    %v3099 = vpack.c.b16 %v2335, %v2333
    %v3100 = vpack.c.b16 %v2336, %v2334
    %v3101 = vpack.c.b16 %v2339, %v2337
    %v3102 = vpack.c.b16 %v2340, %v2338
    %v3103 = vpack.c.b16 %v2343, %v2341
    %v3104 = vpack.c.b16 %v2344, %v2342
    %v3105 = vpack.c.b16 %v2347, %v2345
    %v3106 = vpack.c.b16 %v2348, %v2346
    %v3107 = vpack.c.b16 %v2351, %v2349
    %v3108 = vpack.c.b16 %v2352, %v2350
    %v3109 = vpack.c.b16 %v2355, %v2353
    %v3110 = vpack.c.b16 %v2356, %v2354
    %v3111 = vpack.c.b16 %v2359, %v2357
    %v3112 = vpack.c.b16 %v2360, %v2358
    %v3113 = vpack.c.b16 %v2363, %v2361
    %v3114 = vpack.c.b16 %v2364, %v2362
    %v3115 = vpack.c.b16 %v2367, %v2365
    %v3116 = vpack.c.b16 %v2368, %v2366
    %v3117 = vpack.c.b16 %v2371, %v2369
    %v3118 = vpack.c.b16 %v2372, %v2370
    %v3119 = vpack.c.b16 %v2375, %v2373
    %v3120 = vpack.c.b16 %v2376, %v2374
    %v3121 = vpack.c.b16 %v2379, %v2377
    %v3122 = vpack.c.b16 %v2380, %v2378
    %v3123 = vpack.c.b16 %v2383, %v2381
    %v3124 = vpack.c.b16 %v2384, %v2382
    %v3125 = vpack.c.b16 %v2387, %v2385
    %v3126 = vpack.c.b16 %v2388, %v2386
    %v3127 = vpack.c.b16 %v2391, %v2389
    %v3128 = vpack.c.b16 %v2392, %v2390
    %v3129 = vpack.c.b16 %v2395, %v2393
    %v3130 = vpack.c.b16 %v2396, %v2394
    %v3131 = vpack.c.b16 %v2399, %v2397
    %v3132 = vpack.c.b16 %v2400, %v2398
    %v3133 = vpack.c.b16 %v2403, %v2401
    %v3134 = vpack.c.b16 %v2404, %v2402
    %v3135 = vpack.c.b16 %v2407, %v2405
    %v3136 = vpack.c.b16 %v2408, %v2406
    %v3137 = vpack.c.b16 %v2411, %v2409
    %v3138 = vpack.c.b16 %v2412, %v2410
    %v3139 = vpack.c.b16 %v2415, %v2413
    %v3140 = vpack.c.b16 %v2416, %v2414
    %v3141 = vpack.c.b16 %v2419, %v2417
    %v3142 = vpack.c.b16 %v2420, %v2418
    %v3143 = vpack.c.b16 %v2423, %v2421
    %v3144 = vpack.c.b16 %v2424, %v2422
    %v3145 = vpack.c.b16 %v2427, %v2425
    %v3146 = vpack.c.b16 %v2428, %v2426
    %v3147 = vpack.c.b16 %v2431, %v2429
    %v3148 = vpack.c.b16 %v2432, %v2430
    %v3149 = vpack.c.b16 %v2435, %v2433
    %v3150 = vpack.c.b16 %v2436, %v2434
    %v3151 = vpack.c.b16 %v2439, %v2437
    %v3152 = vpack.c.b16 %v2440, %v2438
    %v3153 = vpack.c.b16 %v2443, %v2441
    %v3154 = vpack.c.b16 %v2444, %v2442
    %v3155 = vpack.c.b16 %v2447, %v2445
    %v3156 = vpack.c.b16 %v2448, %v2446
    %v3157 = vpack.c.b16 %v2451, %v2449
    %v3158 = vpack.c.b16 %v2452, %v2450
    %v3159 = vpack.c.b16 %v2455, %v2453
    %v3160 = vpack.c.b16 %v2456, %v2454
    %v3161 = vpack.c.b16 %v2459, %v2457
    %v3162 = vpack.c.b16 %v2460, %v2458
    %v3163 = vpack.c.b16 %v2463, %v2461
    %v3164 = vpack.c.b16 %v2464, %v2462
    %v3165 = vpack.c.b16 %v2467, %v2465
    %v3166 = vpack.c.b16 %v2468, %v2466
    %v3167 = vpack.c.b16 %v2471, %v2469
    %v3168 = vpack.c.b16 %v2472, %v2470
    %v3169 = vpack.c.b16 %v2475, %v2473
    %v3170 = vpack.c.b16 %v2476, %v2474
    %v3171 = vpack.c.b16 %v2479, %v2477
    %v3172 = vpack.c.b16 %v2480, %v2478
    %v3173 = vpack.c.b16 %v2483, %v2481
    %v3174 = vpack.c.b16 %v2484, %v2482
    %v3175 = vpack.c.b16 %v2487, %v2485
    %v3176 = vpack.c.b16 %v2488, %v2486
    %v3177 = vpack.c.b16 %v2491, %v2489
    %v3178 = vpack.c.b16 %v2492, %v2490
    %v3179 = vpack.c.b16 %v2495, %v2493
    %v3180 = vpack.c.b16 %v2496, %v2494
    %v3181 = vpack.c.b16 %v2499, %v2497
    %v3182 = vpack.c.b16 %v2500, %v2498
    %v3183 = vpack.c.b16 %v2503, %v2501
    %v3184 = vpack.c.b16 %v2504, %v2502
    %v3185 = vpack.c.b16 %v2507, %v2505
    %v3186 = vpack.c.b16 %v2508, %v2506
    %v3187 = vpack.c.b16 %v2511, %v2509
    %v3188 = vpack.c.b16 %v2512, %v2510
    %v3189 = vpack.c.b16 %v2515, %v2513
    %v3190 = vpack.c.b16 %v2516, %v2514
    %v3191 = vpack.c.b16 %v2519, %v2517
    %v3192 = vpack.c.b16 %v2520, %v2518
    %v3193 = vpack.c.b16 %v2523, %v2521
    %v3194 = vpack.c.b16 %v2524, %v2522
    %v3195 = vpack.c.b16 %v2527, %v2525
    %v3196 = vpack.c.b16 %v2528, %v2526
    %v3197 = vpack.c.b16 %v2531, %v2529
    %v3198 = vpack.c.b16 %v2532, %v2530
    %v3199 = vpack.c.b16 %v2535, %v2533
    %v3200 = vpack.c.b16 %v2536, %v2534
    %v3201 = vpack.c.b16 %v2539, %v2537
    %v3202 = vpack.c.b16 %v2540, %v2538
    %v3203 = vpack.c.b16 %v2543, %v2541
    %v3204 = vpack.c.b16 %v2544, %v2542
    %v3205 = vpack.c.b16 %v2547, %v2545
    %v3206 = vpack.c.b16 %v2548, %v2546
    %v3207 = vpack.c.b16 %v2551, %v2549
    %v3208 = vpack.c.b16 %v2552, %v2550
    %v3209 = vpack.c.b16 %v2555, %v2553
    %v3210 = vpack.c.b16 %v2556, %v2554
    %v3211 = vpack.c.b16 %v2559, %v2557
    %v3212 = vpack.c.b16 %v2560, %v2558
    %v3213 = vpack.c.b16 %v2563, %v2561
    %v3214 = vpack.c.b16 %v2564, %v2562
    %v3215 = vpack.c.b16 %v2567, %v2565
    %v3216 = vpack.c.b16 %v2568, %v2566
    %v3217 = vpack.c.b16 %v2571, %v2569
    %v3218 = vpack.c.b16 %v2572, %v2570
    %v3219 = vpack.c.b16 %v2575, %v2573
    %v3220 = vpack.c.b16 %v2576, %v2574
    %v3221 = vpack.c.b16 %v2579, %v2577
    %v3222 = vpack.c.b16 %v2580, %v2578
    %v3223 = vpack.c.b16 %v2583, %v2581
    %v3224 = vpack.c.b16 %v2584, %v2582
    %v3225 = vpack.c.b16 %v2587, %v2585
    %v3226 = vpack.c.b16 %v2588, %v2586
    %v3227 = vpack.c.b16 %v2591, %v2589
    %v3228 = vpack.c.b16 %v2592, %v2590
    %v3229 = vpack.c.b16 %v2595, %v2593
    %v3230 = vpack.c.b16 %v2596, %v2594
    %v3231 = vpack.c.b16 %v2599, %v2597
    %v3232 = vpack.c.b16 %v2600, %v2598
    %v3233 = vpack.c.b16 %v2603, %v2601
    %v3234 = vpack.c.b16 %v2604, %v2602
    %v3235 = vpack.c.b16 %v2607, %v2605
    %v3236 = vpack.c.b16 %v2608, %v2606
    %v3237 = vpack.c.b16 %v2611, %v2609
    %v3238 = vpack.c.b16 %v2612, %v2610
    %v3239 = vpack.c.b16 %v2615, %v2613
    %v3240 = vpack.c.b16 %v2616, %v2614
    %v3241 = vpack.c.b16 %v2619, %v2617
    %v3242 = vpack.c.b16 %v2620, %v2618
    %v3243 = vpack.c.b16 %v2623, %v2621
    %v3244 = vpack.c.b16 %v2624, %v2622
    %v3245 = vpack.c.b16 %v2627, %v2625
    %v3246 = vpack.c.b16 %v2628, %v2626
    %v3247 = vpack.c.b16 %v2631, %v2629
    %v3248 = vpack.c.b16 %v2632, %v2630
    %v3249 = vpack.c.b16 %v2635, %v2633
    %v3250 = vpack.c.b16 %v2636, %v2634
    %v3251 = vpack.c.b16 %v2639, %v2637
    %v3252 = vpack.c.b16 %v2640, %v2638
    %v3253 = vpack.c.b16 %v2643, %v2641
    %v3254 = vpack.c.b16 %v2644, %v2642
    %v3255 = vpack.c.b16 %v2647, %v2645
    %v3256 = vpack.c.b16 %v2648, %v2646
    %v3257 = vpack.c.b16 %v2651, %v2649
    %v3258 = vpack.c.b16 %v2652, %v2650
    %v3259 = vpack.c.b16 %v2655, %v2653
    %v3260 = vpack.c.b16 %v2656, %v2654
    %v3261 = vpack.c.b16 %v2659, %v2657
    %v3262 = vpack.c.b16 %v2660, %v2658
    %v3263 = vpack.c.b16 %v2663, %v2661
    %v3264 = vpack.c.b16 %v2664, %v2662
    %v3265 = vpack.c.b16 %v2667, %v2665
    %v3266 = vpack.c.b16 %v2668, %v2666
    %v3267 = vpack.c.b16 %v2671, %v2669
    %v3268 = vpack.c.b16 %v2672, %v2670
    %v3269 = vpack.c.b16 %v2675, %v2673
    %v3270 = vpack.c.b16 %v2676, %v2674
    %v3271 = vpack.c.b16 %v2679, %v2677
    %v3272 = vpack.c.b16 %v2680, %v2678
    %v3273 = vpack.c.b16 %v2683, %v2681
    %v3274 = vpack.c.b16 %v2684, %v2682
    %v3275 = vpack.c.b16 %v2687, %v2685
    %v3276 = vpack.c.b16 %v2688, %v2686
    %v3277 = vpack.c.b16 %v2691, %v2689
    %v3278 = vpack.c.b16 %v2692, %v2690
    %v3279 = vpack.c.b16 %v2695, %v2693
    %v3280 = vpack.c.b16 %v2696, %v2694
    %v3281 = vpack.c.b16 %v2699, %v2697
    %v3282 = vpack.c.b16 %v2700, %v2698
    %v3283 = vpack.c.b16 %v2703, %v2701
    %v3284 = vpack.c.b16 %v2704, %v2702
    %v3285 = vpack.c.b16 %v2707, %v2705
    %v3286 = vpack.c.b16 %v2708, %v2706
    %v3287 = vpack.c.b16 %v2711, %v2709
    %v3288 = vpack.c.b16 %v2712, %v2710
    %3865 = vmatprep.subr.bf16.mxu0 %v2728
    %3866 = vmatpush1.bf16.msra.mxu0 %v2727
    %3867 = vmatprep.subr.bf16.mxu0 %v2726
    %3868 = vmatpush1.bf16.msra.mxu0 %v2725
    %3869 = vmatprep.subr.bf16.mxu0 %v2724
    %3870 = vmatpush1.bf16.msra.mxu0 %v2723
    %3871 = vmatprep.subr.bf16.mxu0 %v2722
    %3872 = vmatpush1.bf16.msra.mxu0 %v2721
    %3873 = vmatprep.subr.bf16.mxu0 %v2720
    %3874 = vmatpush1.bf16.msra.mxu0 %v2719
    %3875 = vmatprep.subr.bf16.mxu0 %v2718
    %3876 = vmatpush1.bf16.msra.mxu0 %v2717
    %3877 = vmatprep.subr.bf16.mxu0 %v2716
    %3878 = vmatpush1.bf16.msra.mxu0 %v2715
    %3879 = vmatprep.subr.bf16.mxu0 %v2714
    %3880 = vmatpush1.bf16.msra.mxu0 %v2713
    %3881 = vmatprep.subr.bf16.mxu0 %v2744
    %3882 = vmatpush2.bf16.msra.mxu0 %v2743
    %3883 = vmatprep.subr.bf16.mxu0 %v2742
    %3884 = vmatpush2.bf16.msra.mxu0 %v2741
    %3885 = vmatprep.subr.bf16.mxu0 %v2740
    %3886 = vmatpush2.bf16.msra.mxu0 %v2739
    %3887 = vmatprep.subr.bf16.mxu0 %v2738
    %3888 = vmatpush2.bf16.msra.mxu0 %v2737
    %3889 = vmatprep.subr.bf16.mxu0 %v2736
    %3890 = vmatpush2.bf16.msra.mxu0 %v2735
    %3891 = vmatprep.subr.bf16.mxu0 %v2734
    %3892 = vmatpush2.bf16.msra.mxu0 %v2733
    %3893 = vmatprep.subr.bf16.mxu0 %v2732
    %3894 = vmatpush2.bf16.msra.mxu0 %v2731
    %3895 = vmatprep.subr.bf16.mxu0 %v2730
    %3896 = vmatpush2.bf16.msra.mxu0 %v2729
    %3897 = vmatprep.mubr.bf16.mxu0 %v914
    %3898 = vmatmul.mubr.bf16.gmra.mxu0 %v913
    %v3899 = vpop.f32.mrf.mxu0
    %v3900 = vadd.f32 %v852, %v3899
    %v3901 = vpop.f32.mrf.mxu0
    %v3902 = vadd.f32 %v856, %v3901
    %v3903 = vpop.f32.mrf.mxu0
    %v3904 = vpop.f32.mrf.mxu0
    %3905 = vdwg.mxu0
    %3906 = vmatprep.subr.bf16.mxu0 %v2760
    %3907 = vmatpush1.bf16.msra.mxu0 %v2759
    %3908 = vmatprep.subr.bf16.mxu0 %v2758
    %3909 = vmatpush1.bf16.msra.mxu0 %v2757
    %3910 = vmatprep.subr.bf16.mxu0 %v2756
    %3911 = vmatpush1.bf16.msra.mxu0 %v2755
    %3912 = vmatprep.subr.bf16.mxu0 %v2754
    %3913 = vmatpush1.bf16.msra.mxu0 %v2753
    %3914 = vmatprep.subr.bf16.mxu0 %v2752
    %3915 = vmatpush1.bf16.msra.mxu0 %v2751
    %3916 = vmatprep.subr.bf16.mxu0 %v2750
    %3917 = vmatpush1.bf16.msra.mxu0 %v2749
    %3918 = vmatprep.subr.bf16.mxu0 %v2748
    %3919 = vmatpush1.bf16.msra.mxu0 %v2747
    %3920 = vmatprep.subr.bf16.mxu0 %v2746
    %3921 = vmatpush1.bf16.msra.mxu0 %v2745
    %3922 = vmatprep.subr.bf16.mxu0 %v2776
    %3923 = vmatpush2.bf16.msra.mxu0 %v2775
    %3924 = vmatprep.subr.bf16.mxu0 %v2774
    %3925 = vmatpush2.bf16.msra.mxu0 %v2773
    %3926 = vmatprep.subr.bf16.mxu0 %v2772
    %3927 = vmatpush2.bf16.msra.mxu0 %v2771
    %3928 = vmatprep.subr.bf16.mxu0 %v2770
    %3929 = vmatpush2.bf16.msra.mxu0 %v2769
    %3930 = vmatprep.subr.bf16.mxu0 %v2768
    %3931 = vmatpush2.bf16.msra.mxu0 %v2767
    %3932 = vmatprep.subr.bf16.mxu0 %v2766
    %3933 = vmatpush2.bf16.msra.mxu0 %v2765
    %3934 = vmatprep.subr.bf16.mxu0 %v2764
    %3935 = vmatpush2.bf16.msra.mxu0 %v2763
    %3936 = vmatprep.subr.bf16.mxu0 %v2762
    %3937 = vmatpush2.bf16.msra.mxu0 %v2761
    %3938 = vmatprep.mubr.bf16.mxu0 %v916
    %3939 = vmatmul.mubr.bf16.gmra.mxu0 %v915
    %v3940 = vpop.f32.mrf.mxu0
    %v3941 = vadd.f32 %v3900, %v3940
    %v3942 = vpop.f32.mrf.mxu0
    %v3943 = vadd.f32 %v3902, %v3942
    %v3944 = vpop.f32.mrf.mxu0
    %v3945 = vpop.f32.mrf.mxu0
    %3946 = vdwg.mxu0
    %3947 = vmatprep.subr.bf16.mxu0 %v2792
    %3948 = vmatpush1.bf16.msra.mxu0 %v2791
    %3949 = vmatprep.subr.bf16.mxu0 %v2790
    %3950 = vmatpush1.bf16.msra.mxu0 %v2789
    %3951 = vmatprep.subr.bf16.mxu0 %v2788
    %3952 = vmatpush1.bf16.msra.mxu0 %v2787
    %3953 = vmatprep.subr.bf16.mxu0 %v2786
    %3954 = vmatpush1.bf16.msra.mxu0 %v2785
    %3955 = vmatprep.subr.bf16.mxu0 %v2784
    %3956 = vmatpush1.bf16.msra.mxu0 %v2783
    %3957 = vmatprep.subr.bf16.mxu0 %v2782
    %3958 = vmatpush1.bf16.msra.mxu0 %v2781
    %3959 = vmatprep.subr.bf16.mxu0 %v2780
    %3960 = vmatpush1.bf16.msra.mxu0 %v2779
    %3961 = vmatprep.subr.bf16.mxu0 %v2778
    %3962 = vmatpush1.bf16.msra.mxu0 %v2777
    %3963 = vmatprep.subr.bf16.mxu0 %v2808
    %3964 = vmatpush2.bf16.msra.mxu0 %v2807
    %3965 = vmatprep.subr.bf16.mxu0 %v2806
    %3966 = vmatpush2.bf16.msra.mxu0 %v2805
    %3967 = vmatprep.subr.bf16.mxu0 %v2804
    %3968 = vmatpush2.bf16.msra.mxu0 %v2803
    %3969 = vmatprep.subr.bf16.mxu0 %v2802
    %3970 = vmatpush2.bf16.msra.mxu0 %v2801
    %3971 = vmatprep.subr.bf16.mxu0 %v2800
    %3972 = vmatpush2.bf16.msra.mxu0 %v2799
    %3973 = vmatprep.subr.bf16.mxu0 %v2798
    %3974 = vmatpush2.bf16.msra.mxu0 %v2797
    %3975 = vmatprep.subr.bf16.mxu0 %v2796
    %3976 = vmatpush2.bf16.msra.mxu0 %v2795
    %3977 = vmatprep.subr.bf16.mxu0 %v2794
    %3978 = vmatpush2.bf16.msra.mxu0 %v2793
    %3979 = vmatprep.mubr.bf16.mxu0 %v918
    %3980 = vmatmul.mubr.bf16.gmra.mxu0 %v917
    %v3981 = vpop.f32.mrf.mxu0
    %v3982 = vadd.f32 %v3941, %v3981
    %v3983 = vpop.f32.mrf.mxu0
    %v3984 = vadd.f32 %v3943, %v3983
    %v3985 = vpop.f32.mrf.mxu0
    %v3986 = vpop.f32.mrf.mxu0
    %3987 = vdwg.mxu0
    %3988 = vmatprep.subr.bf16.mxu0 %v2824
    %3989 = vmatpush1.bf16.msra.mxu0 %v2823
    %3990 = vmatprep.subr.bf16.mxu0 %v2822
    %3991 = vmatpush1.bf16.msra.mxu0 %v2821
    %3992 = vmatprep.subr.bf16.mxu0 %v2820
    %3993 = vmatpush1.bf16.msra.mxu0 %v2819
    %3994 = vmatprep.subr.bf16.mxu0 %v2818
    %3995 = vmatpush1.bf16.msra.mxu0 %v2817
    %3996 = vmatprep.subr.bf16.mxu0 %v2816
    %3997 = vmatpush1.bf16.msra.mxu0 %v2815
    %3998 = vmatprep.subr.bf16.mxu0 %v2814
    %3999 = vmatpush1.bf16.msra.mxu0 %v2813
    %4000 = vmatprep.subr.bf16.mxu0 %v2812
    %4001 = vmatpush1.bf16.msra.mxu0 %v2811
    %4002 = vmatprep.subr.bf16.mxu0 %v2810
    %4003 = vmatpush1.bf16.msra.mxu0 %v2809
    %4004 = vmatprep.subr.bf16.mxu0 %v2840
    %4005 = vmatpush2.bf16.msra.mxu0 %v2839
    %4006 = vmatprep.subr.bf16.mxu0 %v2838
    %4007 = vmatpush2.bf16.msra.mxu0 %v2837
    %4008 = vmatprep.subr.bf16.mxu0 %v2836
    %4009 = vmatpush2.bf16.msra.mxu0 %v2835
    %4010 = vmatprep.subr.bf16.mxu0 %v2834
    %4011 = vmatpush2.bf16.msra.mxu0 %v2833
    %4012 = vmatprep.subr.bf16.mxu0 %v2832
    %4013 = vmatpush2.bf16.msra.mxu0 %v2831
    %4014 = vmatprep.subr.bf16.mxu0 %v2830
    %4015 = vmatpush2.bf16.msra.mxu0 %v2829
    %4016 = vmatprep.subr.bf16.mxu0 %v2828
    %4017 = vmatpush2.bf16.msra.mxu0 %v2827
    %4018 = vmatprep.subr.bf16.mxu0 %v2826
    %4019 = vmatpush2.bf16.msra.mxu0 %v2825
    %4020 = vmatprep.mubr.bf16.mxu0 %v920
    %4021 = vmatmul.mubr.bf16.gmra.mxu0 %v919
    %v4022 = vpop.f32.mrf.mxu0
    %v4023 = vadd.f32 %v3982, %v4022
    %v4024 = vpop.f32.mrf.mxu0
    %v4025 = vadd.f32 %v3984, %v4024
    %v4026 = vpop.f32.mrf.mxu0
    %v4027 = vpop.f32.mrf.mxu0
    %4028 = vdwg.mxu0
    %4029 = vmatprep.subr.bf16.mxu0 %v2856
    %4030 = vmatpush1.bf16.msra.mxu0 %v2855
    %4031 = vmatprep.subr.bf16.mxu0 %v2854
    %4032 = vmatpush1.bf16.msra.mxu0 %v2853
    %4033 = vmatprep.subr.bf16.mxu0 %v2852
    %4034 = vmatpush1.bf16.msra.mxu0 %v2851
    %4035 = vmatprep.subr.bf16.mxu0 %v2850
    %4036 = vmatpush1.bf16.msra.mxu0 %v2849
    %4037 = vmatprep.subr.bf16.mxu0 %v2848
    %4038 = vmatpush1.bf16.msra.mxu0 %v2847
    %4039 = vmatprep.subr.bf16.mxu0 %v2846
    %4040 = vmatpush1.bf16.msra.mxu0 %v2845
    %4041 = vmatprep.subr.bf16.mxu0 %v2844
    %4042 = vmatpush1.bf16.msra.mxu0 %v2843
    %4043 = vmatprep.subr.bf16.mxu0 %v2842
    %4044 = vmatpush1.bf16.msra.mxu0 %v2841
    %4045 = vmatprep.subr.bf16.mxu0 %v2872
    %4046 = vmatpush2.bf16.msra.mxu0 %v2871
    %4047 = vmatprep.subr.bf16.mxu0 %v2870
    %4048 = vmatpush2.bf16.msra.mxu0 %v2869
    %4049 = vmatprep.subr.bf16.mxu0 %v2868
    %4050 = vmatpush2.bf16.msra.mxu0 %v2867
    %4051 = vmatprep.subr.bf16.mxu0 %v2866
    %4052 = vmatpush2.bf16.msra.mxu0 %v2865
    %4053 = vmatprep.subr.bf16.mxu0 %v2864
    %4054 = vmatpush2.bf16.msra.mxu0 %v2863
    %4055 = vmatprep.subr.bf16.mxu0 %v2862
    %4056 = vmatpush2.bf16.msra.mxu0 %v2861
    %4057 = vmatprep.subr.bf16.mxu0 %v2860
    %4058 = vmatpush2.bf16.msra.mxu0 %v2859
    %4059 = vmatprep.subr.bf16.mxu0 %v2858
    %4060 = vmatpush2.bf16.msra.mxu0 %v2857
    %4061 = vmatprep.mubr.bf16.mxu0 %v922
    %4062 = vmatmul.mubr.bf16.gmra.mxu0 %v921
    %v4063 = vpop.f32.mrf.mxu0
    %v4064 = vadd.f32 %v4023, %v4063
    %v4065 = vpop.f32.mrf.mxu0
    %v4066 = vadd.f32 %v4025, %v4065
    %v4067 = vpop.f32.mrf.mxu0
    %v4068 = vpop.f32.mrf.mxu0
    %4069 = vdwg.mxu0
    %4070 = vmatprep.subr.bf16.mxu0 %v2888
    %4071 = vmatpush1.bf16.msra.mxu0 %v2887
    %4072 = vmatprep.subr.bf16.mxu0 %v2886
    %4073 = vmatpush1.bf16.msra.mxu0 %v2885
    %4074 = vmatprep.subr.bf16.mxu0 %v2884
    %4075 = vmatpush1.bf16.msra.mxu0 %v2883
    %4076 = vmatprep.subr.bf16.mxu0 %v2882
    %4077 = vmatpush1.bf16.msra.mxu0 %v2881
    %4078 = vmatprep.subr.bf16.mxu0 %v2880
    %4079 = vmatpush1.bf16.msra.mxu0 %v2879
    %4080 = vmatprep.subr.bf16.mxu0 %v2878
    %4081 = vmatpush1.bf16.msra.mxu0 %v2877
    %4082 = vmatprep.subr.bf16.mxu0 %v2876
    %4083 = vmatpush1.bf16.msra.mxu0 %v2875
    %4084 = vmatprep.subr.bf16.mxu0 %v2874
    %4085 = vmatpush1.bf16.msra.mxu0 %v2873
    %4086 = vmatprep.subr.bf16.mxu0 %v2904
    %4087 = vmatpush2.bf16.msra.mxu0 %v2903
    %4088 = vmatprep.subr.bf16.mxu0 %v2902
    %4089 = vmatpush2.bf16.msra.mxu0 %v2901
    %4090 = vmatprep.subr.bf16.mxu0 %v2900
    %4091 = vmatpush2.bf16.msra.mxu0 %v2899
    %4092 = vmatprep.subr.bf16.mxu0 %v2898
    %4093 = vmatpush2.bf16.msra.mxu0 %v2897
    %4094 = vmatprep.subr.bf16.mxu0 %v2896
    %4095 = vmatpush2.bf16.msra.mxu0 %v2895
    %4096 = vmatprep.subr.bf16.mxu0 %v2894
    %4097 = vmatpush2.bf16.msra.mxu0 %v2893
    %4098 = vmatprep.subr.bf16.mxu0 %v2892
    %4099 = vmatpush2.bf16.msra.mxu0 %v2891
    %4100 = vmatprep.subr.bf16.mxu0 %v2890
    %4101 = vmatpush2.bf16.msra.mxu0 %v2889
    %4102 = vmatprep.mubr.bf16.mxu0 %v924
    %4103 = vmatmul.mubr.bf16.gmra.mxu0 %v923
    %v4104 = vpop.f32.mrf.mxu0
    %v4105 = vadd.f32 %v4064, %v4104
    %v4106 = vpop.f32.mrf.mxu0
    %v4107 = vadd.f32 %v4066, %v4106
    %v4108 = vpop.f32.mrf.mxu0
    %v4109 = vpop.f32.mrf.mxu0
    %4110 = vdwg.mxu0
    %4111 = vmatprep.subr.bf16.mxu0 %v2920
    %4112 = vmatpush1.bf16.msra.mxu0 %v2919
    %4113 = vmatprep.subr.bf16.mxu0 %v2918
    %4114 = vmatpush1.bf16.msra.mxu0 %v2917
    %4115 = vmatprep.subr.bf16.mxu0 %v2916
    %4116 = vmatpush1.bf16.msra.mxu0 %v2915
    %4117 = vmatprep.subr.bf16.mxu0 %v2914
    %4118 = vmatpush1.bf16.msra.mxu0 %v2913
    %4119 = vmatprep.subr.bf16.mxu0 %v2912
    %4120 = vmatpush1.bf16.msra.mxu0 %v2911
    %4121 = vmatprep.subr.bf16.mxu0 %v2910
    %4122 = vmatpush1.bf16.msra.mxu0 %v2909
    %4123 = vmatprep.subr.bf16.mxu0 %v2908
    %4124 = vmatpush1.bf16.msra.mxu0 %v2907
    %4125 = vmatprep.subr.bf16.mxu0 %v2906
    %4126 = vmatpush1.bf16.msra.mxu0 %v2905
    %4127 = vmatprep.subr.bf16.mxu0 %v2936
    %4128 = vmatpush2.bf16.msra.mxu0 %v2935
    %4129 = vmatprep.subr.bf16.mxu0 %v2934
    %4130 = vmatpush2.bf16.msra.mxu0 %v2933
    %4131 = vmatprep.subr.bf16.mxu0 %v2932
    %4132 = vmatpush2.bf16.msra.mxu0 %v2931
    %4133 = vmatprep.subr.bf16.mxu0 %v2930
    %4134 = vmatpush2.bf16.msra.mxu0 %v2929
    %4135 = vmatprep.subr.bf16.mxu0 %v2928
    %4136 = vmatpush2.bf16.msra.mxu0 %v2927
    %4137 = vmatprep.subr.bf16.mxu0 %v2926
    %4138 = vmatpush2.bf16.msra.mxu0 %v2925
    %4139 = vmatprep.subr.bf16.mxu0 %v2924
    %4140 = vmatpush2.bf16.msra.mxu0 %v2923
    %4141 = vmatprep.subr.bf16.mxu0 %v2922
    %4142 = vmatpush2.bf16.msra.mxu0 %v2921
    %4143 = vmatprep.mubr.bf16.mxu0 %v926
    %4144 = vmatmul.mubr.bf16.gmra.mxu0 %v925
    %v4145 = vpop.f32.mrf.mxu0
    %v4146 = vadd.f32 %v4105, %v4145
    %v4147 = vpop.f32.mrf.mxu0
    %v4148 = vadd.f32 %v4107, %v4147
    %v4149 = vpop.f32.mrf.mxu0
    %v4150 = vpop.f32.mrf.mxu0
    %4151 = vdwg.mxu0
    %4152 = vmatprep.subr.bf16.mxu0 %v2952
    %4153 = vmatpush1.bf16.msra.mxu0 %v2951
    %4154 = vmatprep.subr.bf16.mxu0 %v2950
    %4155 = vmatpush1.bf16.msra.mxu0 %v2949
    %4156 = vmatprep.subr.bf16.mxu0 %v2948
    %4157 = vmatpush1.bf16.msra.mxu0 %v2947
    %4158 = vmatprep.subr.bf16.mxu0 %v2946
    %4159 = vmatpush1.bf16.msra.mxu0 %v2945
    %4160 = vmatprep.subr.bf16.mxu0 %v2944
    %4161 = vmatpush1.bf16.msra.mxu0 %v2943
    %4162 = vmatprep.subr.bf16.mxu0 %v2942
    %4163 = vmatpush1.bf16.msra.mxu0 %v2941
    %4164 = vmatprep.subr.bf16.mxu0 %v2940
    %4165 = vmatpush1.bf16.msra.mxu0 %v2939
    %4166 = vmatprep.subr.bf16.mxu0 %v2938
    %4167 = vmatpush1.bf16.msra.mxu0 %v2937
    %4168 = vmatprep.subr.bf16.mxu0 %v2968
    %4169 = vmatpush2.bf16.msra.mxu0 %v2967
    %4170 = vmatprep.subr.bf16.mxu0 %v2966
    %4171 = vmatpush2.bf16.msra.mxu0 %v2965
    %4172 = vmatprep.subr.bf16.mxu0 %v2964
    %4173 = vmatpush2.bf16.msra.mxu0 %v2963
    %4174 = vmatprep.subr.bf16.mxu0 %v2962
    %4175 = vmatpush2.bf16.msra.mxu0 %v2961
    %4176 = vmatprep.subr.bf16.mxu0 %v2960
    %4177 = vmatpush2.bf16.msra.mxu0 %v2959
    %4178 = vmatprep.subr.bf16.mxu0 %v2958
    %4179 = vmatpush2.bf16.msra.mxu0 %v2957
    %4180 = vmatprep.subr.bf16.mxu0 %v2956
    %4181 = vmatpush2.bf16.msra.mxu0 %v2955
    %4182 = vmatprep.subr.bf16.mxu0 %v2954
    %4183 = vmatpush2.bf16.msra.mxu0 %v2953
    %4184 = vmatprep.mubr.bf16.mxu0 %v928
    %4185 = vmatmul.mubr.bf16.gmra.mxu0 %v927
    %v4186 = vpop.f32.mrf.mxu0
    %v4187 = vadd.f32 %v4146, %v4186
    %v4188 = vpop.f32.mrf.mxu0
    %v4189 = vadd.f32 %v4148, %v4188
    %v4190 = vpop.f32.mrf.mxu0
    %v4191 = vpop.f32.mrf.mxu0
    %4192 = vdwg.mxu0
    %4193 = vmatprep.subr.bf16.mxu0 %v2984
    %4194 = vmatpush1.bf16.msra.mxu0 %v2983
    %4195 = vmatprep.subr.bf16.mxu0 %v2982
    %4196 = vmatpush1.bf16.msra.mxu0 %v2981
    %4197 = vmatprep.subr.bf16.mxu0 %v2980
    %4198 = vmatpush1.bf16.msra.mxu0 %v2979
    %4199 = vmatprep.subr.bf16.mxu0 %v2978
    %4200 = vmatpush1.bf16.msra.mxu0 %v2977
    %4201 = vmatprep.subr.bf16.mxu0 %v2976
    %4202 = vmatpush1.bf16.msra.mxu0 %v2975
    %4203 = vmatprep.subr.bf16.mxu0 %v2974
    %4204 = vmatpush1.bf16.msra.mxu0 %v2973
    %4205 = vmatprep.subr.bf16.mxu0 %v2972
    %4206 = vmatpush1.bf16.msra.mxu0 %v2971
    %4207 = vmatprep.subr.bf16.mxu0 %v2970
    %4208 = vmatpush1.bf16.msra.mxu0 %v2969
    %4209 = vmatprep.subr.bf16.mxu0 %v3000
    %4210 = vmatpush2.bf16.msra.mxu0 %v2999
    %4211 = vmatprep.subr.bf16.mxu0 %v2998
    %4212 = vmatpush2.bf16.msra.mxu0 %v2997
    %4213 = vmatprep.subr.bf16.mxu0 %v2996
    %4214 = vmatpush2.bf16.msra.mxu0 %v2995
    %4215 = vmatprep.subr.bf16.mxu0 %v2994
    %4216 = vmatpush2.bf16.msra.mxu0 %v2993
    %4217 = vmatprep.subr.bf16.mxu0 %v2992
    %4218 = vmatpush2.bf16.msra.mxu0 %v2991
    %4219 = vmatprep.subr.bf16.mxu0 %v2990
    %4220 = vmatpush2.bf16.msra.mxu0 %v2989
    %4221 = vmatprep.subr.bf16.mxu0 %v2988
    %4222 = vmatpush2.bf16.msra.mxu0 %v2987
    %4223 = vmatprep.subr.bf16.mxu0 %v2986
    %4224 = vmatpush2.bf16.msra.mxu0 %v2985
    %4225 = vmatprep.mubr.bf16.mxu0 %v930
    %4226 = vmatmul.mubr.bf16.gmra.mxu0 %v929
    %v4227 = vpop.f32.mrf.mxu0
    %v4228 = vadd.f32 %v4187, %v4227
    %v4229 = vpop.f32.mrf.mxu0
    %v4230 = vadd.f32 %v4189, %v4229
    %v4231 = vpop.f32.mrf.mxu0
    %v4232 = vpop.f32.mrf.mxu0
    %4233 = vdwg.mxu0
    %4234 = vmatprep.subr.bf16.mxu0 %v3016
    %4235 = vmatpush1.bf16.msra.mxu0 %v3015
    %4236 = vmatprep.subr.bf16.mxu0 %v3014
    %4237 = vmatpush1.bf16.msra.mxu0 %v3013
    %4238 = vmatprep.subr.bf16.mxu0 %v3012
    %4239 = vmatpush1.bf16.msra.mxu0 %v3011
    %4240 = vmatprep.subr.bf16.mxu0 %v3010
    %4241 = vmatpush1.bf16.msra.mxu0 %v3009
    %4242 = vmatprep.subr.bf16.mxu0 %v3008
    %4243 = vmatpush1.bf16.msra.mxu0 %v3007
    %4244 = vmatprep.subr.bf16.mxu0 %v3006
    %4245 = vmatpush1.bf16.msra.mxu0 %v3005
    %4246 = vmatprep.subr.bf16.mxu0 %v3004
    %4247 = vmatpush1.bf16.msra.mxu0 %v3003
    %4248 = vmatprep.subr.bf16.mxu0 %v3002
    %4249 = vmatpush1.bf16.msra.mxu0 %v3001
    %4250 = vmatprep.subr.bf16.mxu0 %v3032
    %4251 = vmatpush2.bf16.msra.mxu0 %v3031
    %4252 = vmatprep.subr.bf16.mxu0 %v3030
    %4253 = vmatpush2.bf16.msra.mxu0 %v3029
    %4254 = vmatprep.subr.bf16.mxu0 %v3028
    %4255 = vmatpush2.bf16.msra.mxu0 %v3027
    %4256 = vmatprep.subr.bf16.mxu0 %v3026
    %4257 = vmatpush2.bf16.msra.mxu0 %v3025
    %4258 = vmatprep.subr.bf16.mxu0 %v3024
    %4259 = vmatpush2.bf16.msra.mxu0 %v3023
    %4260 = vmatprep.subr.bf16.mxu0 %v3022
    %4261 = vmatpush2.bf16.msra.mxu0 %v3021
    %4262 = vmatprep.subr.bf16.mxu0 %v3020
    %4263 = vmatpush2.bf16.msra.mxu0 %v3019
    %4264 = vmatprep.subr.bf16.mxu0 %v3018
    %4265 = vmatpush2.bf16.msra.mxu0 %v3017
    %4266 = vmatprep.mubr.bf16.mxu0 %v932
    %4267 = vmatmul.mubr.bf16.gmra.mxu0 %v931
    %v4268 = vpop.f32.mrf.mxu0
    %v4269 = vadd.f32 %v4228, %v4268
    %v4270 = vpop.f32.mrf.mxu0
    %v4271 = vadd.f32 %v4230, %v4270
    %v4272 = vpop.f32.mrf.mxu0
    %v4273 = vpop.f32.mrf.mxu0
    %4274 = vdwg.mxu0
    %4275 = vmatprep.subr.bf16.mxu0 %v3048
    %4276 = vmatpush1.bf16.msra.mxu0 %v3047
    %4277 = vmatprep.subr.bf16.mxu0 %v3046
    %4278 = vmatpush1.bf16.msra.mxu0 %v3045
    %4279 = vmatprep.subr.bf16.mxu0 %v3044
    %4280 = vmatpush1.bf16.msra.mxu0 %v3043
    %4281 = vmatprep.subr.bf16.mxu0 %v3042
    %4282 = vmatpush1.bf16.msra.mxu0 %v3041
    %4283 = vmatprep.subr.bf16.mxu0 %v3040
    %4284 = vmatpush1.bf16.msra.mxu0 %v3039
    %4285 = vmatprep.subr.bf16.mxu0 %v3038
    %4286 = vmatpush1.bf16.msra.mxu0 %v3037
    %4287 = vmatprep.subr.bf16.mxu0 %v3036
    %4288 = vmatpush1.bf16.msra.mxu0 %v3035
    %4289 = vmatprep.subr.bf16.mxu0 %v3034
    %4290 = vmatpush1.bf16.msra.mxu0 %v3033
    %4291 = vmatprep.subr.bf16.mxu0 %v3064
    %4292 = vmatpush2.bf16.msra.mxu0 %v3063
    %4293 = vmatprep.subr.bf16.mxu0 %v3062
    %4294 = vmatpush2.bf16.msra.mxu0 %v3061
    %4295 = vmatprep.subr.bf16.mxu0 %v3060
    %4296 = vmatpush2.bf16.msra.mxu0 %v3059
    %4297 = vmatprep.subr.bf16.mxu0 %v3058
    %4298 = vmatpush2.bf16.msra.mxu0 %v3057
    %4299 = vmatprep.subr.bf16.mxu0 %v3056
    %4300 = vmatpush2.bf16.msra.mxu0 %v3055
    %4301 = vmatprep.subr.bf16.mxu0 %v3054
    %4302 = vmatpush2.bf16.msra.mxu0 %v3053
    %4303 = vmatprep.subr.bf16.mxu0 %v3052
    %4304 = vmatpush2.bf16.msra.mxu0 %v3051
    %4305 = vmatprep.subr.bf16.mxu0 %v3050
    %4306 = vmatpush2.bf16.msra.mxu0 %v3049
    %4307 = vmatprep.mubr.bf16.mxu0 %v934
    %4308 = vmatmul.mubr.bf16.gmra.mxu0 %v933
    %v4309 = vpop.f32.mrf.mxu0
    %v4310 = vadd.f32 %v4269, %v4309
    %v4311 = vpop.f32.mrf.mxu0
    %v4312 = vadd.f32 %v4271, %v4311
    %v4313 = vpop.f32.mrf.mxu0
    %v4314 = vpop.f32.mrf.mxu0
    %4315 = vdwg.mxu0
    %4316 = vmatprep.subr.bf16.mxu0 %v3080
    %4317 = vmatpush1.bf16.msra.mxu0 %v3079
    %4318 = vmatprep.subr.bf16.mxu0 %v3078
    %4319 = vmatpush1.bf16.msra.mxu0 %v3077
    %4320 = vmatprep.subr.bf16.mxu0 %v3076
    %4321 = vmatpush1.bf16.msra.mxu0 %v3075
    %4322 = vmatprep.subr.bf16.mxu0 %v3074
    %4323 = vmatpush1.bf16.msra.mxu0 %v3073
    %4324 = vmatprep.subr.bf16.mxu0 %v3072
    %4325 = vmatpush1.bf16.msra.mxu0 %v3071
    %4326 = vmatprep.subr.bf16.mxu0 %v3070
    %4327 = vmatpush1.bf16.msra.mxu0 %v3069
    %4328 = vmatprep.subr.bf16.mxu0 %v3068
    %4329 = vmatpush1.bf16.msra.mxu0 %v3067
    %4330 = vmatprep.subr.bf16.mxu0 %v3066
    %4331 = vmatpush1.bf16.msra.mxu0 %v3065
    %4332 = vmatprep.subr.bf16.mxu0 %v3096
    %4333 = vmatpush2.bf16.msra.mxu0 %v3095
    %4334 = vmatprep.subr.bf16.mxu0 %v3094
    %4335 = vmatpush2.bf16.msra.mxu0 %v3093
    %4336 = vmatprep.subr.bf16.mxu0 %v3092
    %4337 = vmatpush2.bf16.msra.mxu0 %v3091
    %4338 = vmatprep.subr.bf16.mxu0 %v3090
    %4339 = vmatpush2.bf16.msra.mxu0 %v3089
    %4340 = vmatprep.subr.bf16.mxu0 %v3088
    %4341 = vmatpush2.bf16.msra.mxu0 %v3087
    %4342 = vmatprep.subr.bf16.mxu0 %v3086
    %4343 = vmatpush2.bf16.msra.mxu0 %v3085
    %4344 = vmatprep.subr.bf16.mxu0 %v3084
    %4345 = vmatpush2.bf16.msra.mxu0 %v3083
    %4346 = vmatprep.subr.bf16.mxu0 %v3082
    %4347 = vmatpush2.bf16.msra.mxu0 %v3081
    %4348 = vmatprep.mubr.bf16.mxu0 %v936
    %4349 = vmatmul.mubr.bf16.gmra.mxu0 %v935
    %v4350 = vpop.f32.mrf.mxu0
    %v4351 = vadd.f32 %v4310, %v4350
    %v4352 = vpop.f32.mrf.mxu0
    %v4353 = vadd.f32 %v4312, %v4352
    %v4354 = vpop.f32.mrf.mxu0
    %v4355 = vpop.f32.mrf.mxu0
    %4356 = vdwg.mxu0
    %4357 = vmatprep.subr.bf16.mxu0 %v3112
    %4358 = vmatpush1.bf16.msra.mxu0 %v3111
    %4359 = vmatprep.subr.bf16.mxu0 %v3110
    %4360 = vmatpush1.bf16.msra.mxu0 %v3109
    %4361 = vmatprep.subr.bf16.mxu0 %v3108
    %4362 = vmatpush1.bf16.msra.mxu0 %v3107
    %4363 = vmatprep.subr.bf16.mxu0 %v3106
    %4364 = vmatpush1.bf16.msra.mxu0 %v3105
    %4365 = vmatprep.subr.bf16.mxu0 %v3104
    %4366 = vmatpush1.bf16.msra.mxu0 %v3103
    %4367 = vmatprep.subr.bf16.mxu0 %v3102
    %4368 = vmatpush1.bf16.msra.mxu0 %v3101
    %4369 = vmatprep.subr.bf16.mxu0 %v3100
    %4370 = vmatpush1.bf16.msra.mxu0 %v3099
    %4371 = vmatprep.subr.bf16.mxu0 %v3098
    %4372 = vmatpush1.bf16.msra.mxu0 %v3097
    %4373 = vmatprep.subr.bf16.mxu0 %v3128
    %4374 = vmatpush2.bf16.msra.mxu0 %v3127
    %4375 = vmatprep.subr.bf16.mxu0 %v3126
    %4376 = vmatpush2.bf16.msra.mxu0 %v3125
    %4377 = vmatprep.subr.bf16.mxu0 %v3124
    %4378 = vmatpush2.bf16.msra.mxu0 %v3123
    %4379 = vmatprep.subr.bf16.mxu0 %v3122
    %4380 = vmatpush2.bf16.msra.mxu0 %v3121
    %4381 = vmatprep.subr.bf16.mxu0 %v3120
    %4382 = vmatpush2.bf16.msra.mxu0 %v3119
    %4383 = vmatprep.subr.bf16.mxu0 %v3118
    %4384 = vmatpush2.bf16.msra.mxu0 %v3117
    %4385 = vmatprep.subr.bf16.mxu0 %v3116
    %4386 = vmatpush2.bf16.msra.mxu0 %v3115
    %4387 = vmatprep.subr.bf16.mxu0 %v3114
    %4388 = vmatpush2.bf16.msra.mxu0 %v3113
    %4389 = vmatprep.mubr.bf16.mxu0 %v938
    %4390 = vmatmul.mubr.bf16.gmra.mxu0 %v937
    %v4391 = vpop.f32.mrf.mxu0
    %v4392 = vadd.f32 %v4351, %v4391
    %v4393 = vpop.f32.mrf.mxu0
    %v4394 = vadd.f32 %v4353, %v4393
    %v4395 = vpop.f32.mrf.mxu0
    %v4396 = vpop.f32.mrf.mxu0
    %4397 = vdwg.mxu0
    %4398 = vmatprep.subr.bf16.mxu0 %v3144
    %4399 = vmatpush1.bf16.msra.mxu0 %v3143
    %4400 = vmatprep.subr.bf16.mxu0 %v3142
    %4401 = vmatpush1.bf16.msra.mxu0 %v3141
    %4402 = vmatprep.subr.bf16.mxu0 %v3140
    %4403 = vmatpush1.bf16.msra.mxu0 %v3139
    %4404 = vmatprep.subr.bf16.mxu0 %v3138
    %4405 = vmatpush1.bf16.msra.mxu0 %v3137
    %4406 = vmatprep.subr.bf16.mxu0 %v3136
    %4407 = vmatpush1.bf16.msra.mxu0 %v3135
    %4408 = vmatprep.subr.bf16.mxu0 %v3134
    %4409 = vmatpush1.bf16.msra.mxu0 %v3133
    %4410 = vmatprep.subr.bf16.mxu0 %v3132
    %4411 = vmatpush1.bf16.msra.mxu0 %v3131
    %4412 = vmatprep.subr.bf16.mxu0 %v3130
    %4413 = vmatpush1.bf16.msra.mxu0 %v3129
    %4414 = vmatprep.subr.bf16.mxu0 %v3160
    %4415 = vmatpush2.bf16.msra.mxu0 %v3159
    %4416 = vmatprep.subr.bf16.mxu0 %v3158
    %4417 = vmatpush2.bf16.msra.mxu0 %v3157
    %4418 = vmatprep.subr.bf16.mxu0 %v3156
    %4419 = vmatpush2.bf16.msra.mxu0 %v3155
    %4420 = vmatprep.subr.bf16.mxu0 %v3154
    %4421 = vmatpush2.bf16.msra.mxu0 %v3153
    %4422 = vmatprep.subr.bf16.mxu0 %v3152
    %4423 = vmatpush2.bf16.msra.mxu0 %v3151
    %4424 = vmatprep.subr.bf16.mxu0 %v3150
    %4425 = vmatpush2.bf16.msra.mxu0 %v3149
    %4426 = vmatprep.subr.bf16.mxu0 %v3148
    %4427 = vmatpush2.bf16.msra.mxu0 %v3147
    %4428 = vmatprep.subr.bf16.mxu0 %v3146
    %4429 = vmatpush2.bf16.msra.mxu0 %v3145
    %4430 = vmatprep.mubr.bf16.mxu0 %v940
    %4431 = vmatmul.mubr.bf16.gmra.mxu0 %v939
    %v4432 = vpop.f32.mrf.mxu0
    %v4433 = vadd.f32 %v4392, %v4432
    %v4434 = vpop.f32.mrf.mxu0
    %v4435 = vadd.f32 %v4394, %v4434
    %v4436 = vpop.f32.mrf.mxu0
    %v4437 = vpop.f32.mrf.mxu0
    %4438 = vdwg.mxu0
    %4439 = vmatprep.subr.bf16.mxu0 %v3176
    %4440 = vmatpush1.bf16.msra.mxu0 %v3175
    %4441 = vmatprep.subr.bf16.mxu0 %v3174
    %4442 = vmatpush1.bf16.msra.mxu0 %v3173
    %4443 = vmatprep.subr.bf16.mxu0 %v3172
    %4444 = vmatpush1.bf16.msra.mxu0 %v3171
    %4445 = vmatprep.subr.bf16.mxu0 %v3170
    %4446 = vmatpush1.bf16.msra.mxu0 %v3169
    %4447 = vmatprep.subr.bf16.mxu0 %v3168
    %4448 = vmatpush1.bf16.msra.mxu0 %v3167
    %4449 = vmatprep.subr.bf16.mxu0 %v3166
    %4450 = vmatpush1.bf16.msra.mxu0 %v3165
    %4451 = vmatprep.subr.bf16.mxu0 %v3164
    %4452 = vmatpush1.bf16.msra.mxu0 %v3163
    %4453 = vmatprep.subr.bf16.mxu0 %v3162
    %4454 = vmatpush1.bf16.msra.mxu0 %v3161
    %4455 = vmatprep.subr.bf16.mxu0 %v3192
    %4456 = vmatpush2.bf16.msra.mxu0 %v3191
    %4457 = vmatprep.subr.bf16.mxu0 %v3190
    %4458 = vmatpush2.bf16.msra.mxu0 %v3189
    %4459 = vmatprep.subr.bf16.mxu0 %v3188
    %4460 = vmatpush2.bf16.msra.mxu0 %v3187
    %4461 = vmatprep.subr.bf16.mxu0 %v3186
    %4462 = vmatpush2.bf16.msra.mxu0 %v3185
    %4463 = vmatprep.subr.bf16.mxu0 %v3184
    %4464 = vmatpush2.bf16.msra.mxu0 %v3183
    %4465 = vmatprep.subr.bf16.mxu0 %v3182
    %4466 = vmatpush2.bf16.msra.mxu0 %v3181
    %4467 = vmatprep.subr.bf16.mxu0 %v3180
    %4468 = vmatpush2.bf16.msra.mxu0 %v3179
    %4469 = vmatprep.subr.bf16.mxu0 %v3178
    %4470 = vmatpush2.bf16.msra.mxu0 %v3177
    %4471 = vmatprep.mubr.bf16.mxu0 %v942
    %4472 = vmatmul.mubr.bf16.gmra.mxu0 %v941
    %v4473 = vpop.f32.mrf.mxu0
    %v4474 = vadd.f32 %v4433, %v4473
    %v4475 = vpop.f32.mrf.mxu0
    %v4476 = vadd.f32 %v4435, %v4475
    %v4477 = vpop.f32.mrf.mxu0
    %v4478 = vpop.f32.mrf.mxu0
    %4479 = vdwg.mxu0
    %4480 = vmatprep.subr.bf16.mxu0 %v3208
    %4481 = vmatpush1.bf16.msra.mxu0 %v3207
    %4482 = vmatprep.subr.bf16.mxu0 %v3206
    %4483 = vmatpush1.bf16.msra.mxu0 %v3205
    %4484 = vmatprep.subr.bf16.mxu0 %v3204
    %4485 = vmatpush1.bf16.msra.mxu0 %v3203
    %4486 = vmatprep.subr.bf16.mxu0 %v3202
    %4487 = vmatpush1.bf16.msra.mxu0 %v3201
    %4488 = vmatprep.subr.bf16.mxu0 %v3200
    %4489 = vmatpush1.bf16.msra.mxu0 %v3199
    %4490 = vmatprep.subr.bf16.mxu0 %v3198
    %4491 = vmatpush1.bf16.msra.mxu0 %v3197
    %4492 = vmatprep.subr.bf16.mxu0 %v3196
    %4493 = vmatpush1.bf16.msra.mxu0 %v3195
    %4494 = vmatprep.subr.bf16.mxu0 %v3194
    %4495 = vmatpush1.bf16.msra.mxu0 %v3193
    %4496 = vmatprep.subr.bf16.mxu0 %v3224
    %4497 = vmatpush2.bf16.msra.mxu0 %v3223
    %4498 = vmatprep.subr.bf16.mxu0 %v3222
    %4499 = vmatpush2.bf16.msra.mxu0 %v3221
    %4500 = vmatprep.subr.bf16.mxu0 %v3220
    %4501 = vmatpush2.bf16.msra.mxu0 %v3219
    %4502 = vmatprep.subr.bf16.mxu0 %v3218
    %4503 = vmatpush2.bf16.msra.mxu0 %v3217
    %4504 = vmatprep.subr.bf16.mxu0 %v3216
    %4505 = vmatpush2.bf16.msra.mxu0 %v3215
    %4506 = vmatprep.subr.bf16.mxu0 %v3214
    %4507 = vmatpush2.bf16.msra.mxu0 %v3213
    %4508 = vmatprep.subr.bf16.mxu0 %v3212
    %4509 = vmatpush2.bf16.msra.mxu0 %v3211
    %4510 = vmatprep.subr.bf16.mxu0 %v3210
    %4511 = vmatpush2.bf16.msra.mxu0 %v3209
    %4512 = vmatprep.mubr.bf16.mxu0 %v944
    %4513 = vmatmul.mubr.bf16.gmra.mxu0 %v943
    %v4514 = vpop.f32.mrf.mxu0
    %v4515 = vadd.f32 %v4474, %v4514
    %v4516 = vpop.f32.mrf.mxu0
    %v4517 = vadd.f32 %v4476, %v4516
    %v4518 = vpop.f32.mrf.mxu0
    %v4519 = vpop.f32.mrf.mxu0
    %4520 = vdwg.mxu0
    %4521 = vmatprep.subr.bf16.mxu0 %v3240
    %4522 = vmatpush1.bf16.msra.mxu0 %v3239
    %4523 = vmatprep.subr.bf16.mxu0 %v3238
    %4524 = vmatpush1.bf16.msra.mxu0 %v3237
    %4525 = vmatprep.subr.bf16.mxu0 %v3236
    %4526 = vmatpush1.bf16.msra.mxu0 %v3235
    %4527 = vmatprep.subr.bf16.mxu0 %v3234
    %4528 = vmatpush1.bf16.msra.mxu0 %v3233
    %4529 = vmatprep.subr.bf16.mxu0 %v3232
    %4530 = vmatpush1.bf16.msra.mxu0 %v3231
    %4531 = vmatprep.subr.bf16.mxu0 %v3230
    %4532 = vmatpush1.bf16.msra.mxu0 %v3229
    %4533 = vmatprep.subr.bf16.mxu0 %v3228
    %4534 = vmatpush1.bf16.msra.mxu0 %v3227
    %4535 = vmatprep.subr.bf16.mxu0 %v3226
    %4536 = vmatpush1.bf16.msra.mxu0 %v3225
    %4537 = vmatprep.subr.bf16.mxu0 %v3256
    %4538 = vmatpush2.bf16.msra.mxu0 %v3255
    %4539 = vmatprep.subr.bf16.mxu0 %v3254
    %4540 = vmatpush2.bf16.msra.mxu0 %v3253
    %4541 = vmatprep.subr.bf16.mxu0 %v3252
    %4542 = vmatpush2.bf16.msra.mxu0 %v3251
    %4543 = vmatprep.subr.bf16.mxu0 %v3250
    %4544 = vmatpush2.bf16.msra.mxu0 %v3249
    %4545 = vmatprep.subr.bf16.mxu0 %v3248
    %4546 = vmatpush2.bf16.msra.mxu0 %v3247
    %4547 = vmatprep.subr.bf16.mxu0 %v3246
    %4548 = vmatpush2.bf16.msra.mxu0 %v3245
    %4549 = vmatprep.subr.bf16.mxu0 %v3244
    %4550 = vmatpush2.bf16.msra.mxu0 %v3243
    %4551 = vmatprep.subr.bf16.mxu0 %v3242
    %4552 = vmatpush2.bf16.msra.mxu0 %v3241
    %4553 = vmatprep.mubr.bf16.mxu0 %v946
    %4554 = vmatmul.mubr.bf16.gmra.mxu0 %v945
    %v4555 = vpop.f32.mrf.mxu0
    %v4556 = vadd.f32 %v4515, %v4555
    %v4557 = vpop.f32.mrf.mxu0
    %v4558 = vadd.f32 %v4517, %v4557
    %v4559 = vpop.f32.mrf.mxu0
    %v4560 = vpop.f32.mrf.mxu0
    %4561 = vdwg.mxu0
    %4562 = vmatprep.subr.bf16.mxu0 %v3272
    %4563 = vmatpush1.bf16.msra.mxu0 %v3271
    %4564 = vmatprep.subr.bf16.mxu0 %v3270
    %4565 = vmatpush1.bf16.msra.mxu0 %v3269
    %4566 = vmatprep.subr.bf16.mxu0 %v3268
    %4567 = vmatpush1.bf16.msra.mxu0 %v3267
    %4568 = vmatprep.subr.bf16.mxu0 %v3266
    %4569 = vmatpush1.bf16.msra.mxu0 %v3265
    %4570 = vmatprep.subr.bf16.mxu0 %v3264
    %4571 = vmatpush1.bf16.msra.mxu0 %v3263
    %4572 = vmatprep.subr.bf16.mxu0 %v3262
    %4573 = vmatpush1.bf16.msra.mxu0 %v3261
    %4574 = vmatprep.subr.bf16.mxu0 %v3260
    %4575 = vmatpush1.bf16.msra.mxu0 %v3259
    %4576 = vmatprep.subr.bf16.mxu0 %v3258
    %4577 = vmatpush1.bf16.msra.mxu0 %v3257
    %4578 = vmatprep.subr.bf16.mxu0 %v3288
    %4579 = vmatpush2.bf16.msra.mxu0 %v3287
    %4580 = vmatprep.subr.bf16.mxu0 %v3286
    %4581 = vmatpush2.bf16.msra.mxu0 %v3285
    %4582 = vmatprep.subr.bf16.mxu0 %v3284
    %4583 = vmatpush2.bf16.msra.mxu0 %v3283
    %4584 = vmatprep.subr.bf16.mxu0 %v3282
    %4585 = vmatpush2.bf16.msra.mxu0 %v3281
    %4586 = vmatprep.subr.bf16.mxu0 %v3280
    %4587 = vmatpush2.bf16.msra.mxu0 %v3279
    %4588 = vmatprep.subr.bf16.mxu0 %v3278
    %4589 = vmatpush2.bf16.msra.mxu0 %v3277
    %4590 = vmatprep.subr.bf16.mxu0 %v3276
    %4591 = vmatpush2.bf16.msra.mxu0 %v3275
    %4592 = vmatprep.subr.bf16.mxu0 %v3274
    %4593 = vmatpush2.bf16.msra.mxu0 %v3273
    %4594 = vmatprep.mubr.bf16.mxu0 %v948
    %4595 = vmatmul.mubr.bf16.gmra.mxu0 %v947
    %v4596 = vpop.f32.mrf.mxu0
    %v4597 = vadd.f32 %v4556, %v4596
    %v4598 = vpop.f32.mrf.mxu0
    %v4599 = vadd.f32 %v4558, %v4598
    %v4600 = vpop.f32.mrf.mxu0
    %v4601 = vpop.f32.mrf.mxu0
    %4602 = vdwg.mxu0
    %v4603 = vmul.f32 %v4597, 0.5
    %v4604 = vmul.f32 %v4599, 0.5
    %v4605 = vmul.f32 %v4597, 0.70710677
    %v4606 = vmul.f32 %v4599, 0.70710677
    %v4607 = verf.f32.pop %v4605
    %v4608 = verf.f32.pop %v4606
    %v4609 = vadd.f32 %v4607, 1.0
    %v4610 = vadd.f32 %v4608, 1.0
    %v4611 = vmul.f32 %v4603, %v4609
    %v4612 = vmul.f32 %v4604, %v4610
    %v4613 = vpack.c.bf16 %v4611, %v4611
    %v4614 = vpack.c.bf16 %v4612, %v4612
    %v4616 = vlaneseq
    %v4617 = vshrl.u32 %v4616, 7
    %v4618 = vsub.s32 0, %v4617
    %v4619 = vrot.slane %v845, %v4618
    %v4620 = vlaneseq
    %v4621 = vshrl.u32 %v4620, 7
    %v4622 = vsub.s32 1, %v4621
    %v4623 = vrot.slane %v845, %v4622
    %v4658 = vunpack.c.l.b16 %v813
    %v4659 = vunpack.c.h.b16 %v813
    %v4660 = vunpack.c.l.b16 %v814
    %v4661 = vunpack.c.h.b16 %v814
    %v4662 = vunpack.c.l.b16 %v815
    %v4663 = vunpack.c.h.b16 %v815
    %v4664 = vunpack.c.l.b16 %v816
    %v4665 = vunpack.c.h.b16 %v816
    %v4666 = vunpack.c.l.b16 %v817
    %v4667 = vunpack.c.h.b16 %v817
    %v4668 = vunpack.c.l.b16 %v818
    %v4669 = vunpack.c.h.b16 %v818
    %v4670 = vunpack.c.l.b16 %v819
    %v4671 = vunpack.c.h.b16 %v819
    %v4672 = vunpack.c.l.b16 %v820
    %v4673 = vunpack.c.h.b16 %v820
    %v4674 = vunpack.c.l.b16 %v821
    %v4675 = vunpack.c.h.b16 %v821
    %v4676 = vunpack.c.l.b16 %v822
    %v4677 = vunpack.c.h.b16 %v822
    %v4678 = vunpack.c.l.b16 %v823
    %v4679 = vunpack.c.h.b16 %v823
    %v4680 = vunpack.c.l.b16 %v824
    %v4681 = vunpack.c.h.b16 %v824
    %v4682 = vunpack.c.l.b16 %v825
    %v4683 = vunpack.c.h.b16 %v825
    %v4684 = vunpack.c.l.b16 %v826
    %v4685 = vunpack.c.h.b16 %v826
    %v4686 = vunpack.c.l.b16 %v827
    %v4687 = vunpack.c.h.b16 %v827
    %v4688 = vunpack.c.l.b16 %v828
    %v4689 = vunpack.c.h.b16 %v828
    %v4690 = vunpack.c.l.b16 %v829
    %v4691 = vunpack.c.h.b16 %v829
    %v4692 = vunpack.c.l.b16 %v830
    %v4693 = vunpack.c.h.b16 %v830
    %v4694 = vunpack.c.l.b16 %v831
    %v4695 = vunpack.c.h.b16 %v831
    %v4696 = vunpack.c.l.b16 %v832
    %v4697 = vunpack.c.h.b16 %v832
    %v4698 = vunpack.c.l.b16 %v833
    %v4699 = vunpack.c.h.b16 %v833
    %v4700 = vunpack.c.l.b16 %v834
    %v4701 = vunpack.c.h.b16 %v834
    %v4702 = vunpack.c.l.b16 %v835
    %v4703 = vunpack.c.h.b16 %v835
    %v4704 = vunpack.c.l.b16 %v836
    %v4705 = vunpack.c.h.b16 %v836
    %v4706 = vunpack.c.l.b16 %v837
    %v4707 = vunpack.c.h.b16 %v837
    %v4708 = vunpack.c.l.b16 %v838
    %v4709 = vunpack.c.h.b16 %v838
    %v4710 = vunpack.c.l.b16 %v839
    %v4711 = vunpack.c.h.b16 %v839
    %v4712 = vunpack.c.l.b16 %v840
    %v4713 = vunpack.c.h.b16 %v840
    %v4714 = vunpack.c.l.b16 %v841
    %v4715 = vunpack.c.h.b16 %v841
    %v4716 = vunpack.c.l.b16 %v842
    %v4717 = vunpack.c.h.b16 %v842
    %v4718 = vunpack.c.l.b16 %v843
    %v4719 = vunpack.c.h.b16 %v843
    %v4720 = vunpack.c.l.b16 %v844
    %v4721 = vunpack.c.h.b16 %v844
    %v4722 = vpack.c.b16 %v4660, %v4658
    %v4723 = vpack.c.b16 %v4661, %v4659
    %v4724 = vpack.c.b16 %v4664, %v4662
    %v4725 = vpack.c.b16 %v4665, %v4663
    %v4726 = vpack.c.b16 %v4668, %v4666
    %v4727 = vpack.c.b16 %v4669, %v4667
    %v4728 = vpack.c.b16 %v4672, %v4670
    %v4729 = vpack.c.b16 %v4673, %v4671
    %v4730 = vpack.c.b16 %v4676, %v4674
    %v4731 = vpack.c.b16 %v4677, %v4675
    %v4732 = vpack.c.b16 %v4680, %v4678
    %v4733 = vpack.c.b16 %v4681, %v4679
    %v4734 = vpack.c.b16 %v4684, %v4682
    %v4735 = vpack.c.b16 %v4685, %v4683
    %v4736 = vpack.c.b16 %v4688, %v4686
    %v4737 = vpack.c.b16 %v4689, %v4687
    %v4738 = vpack.c.b16 %v4692, %v4690
    %v4739 = vpack.c.b16 %v4693, %v4691
    %v4740 = vpack.c.b16 %v4696, %v4694
    %v4741 = vpack.c.b16 %v4697, %v4695
    %v4742 = vpack.c.b16 %v4700, %v4698
    %v4743 = vpack.c.b16 %v4701, %v4699
    %v4744 = vpack.c.b16 %v4704, %v4702
    %v4745 = vpack.c.b16 %v4705, %v4703
    %v4746 = vpack.c.b16 %v4708, %v4706
    %v4747 = vpack.c.b16 %v4709, %v4707
    %v4748 = vpack.c.b16 %v4712, %v4710
    %v4749 = vpack.c.b16 %v4713, %v4711
    %v4750 = vpack.c.b16 %v4716, %v4714
    %v4751 = vpack.c.b16 %v4717, %v4715
    %v4752 = vpack.c.b16 %v4720, %v4718
    %v4753 = vpack.c.b16 %v4721, %v4719
    %4786 = vmatprep.subr.bf16.mxu0 %v4737
    %4787 = vmatpush1.bf16.msra.mxu0 %v4736
    %4788 = vmatprep.subr.bf16.mxu0 %v4735
    %4789 = vmatpush1.bf16.msra.mxu0 %v4734
    %4790 = vmatprep.subr.bf16.mxu0 %v4733
    %4791 = vmatpush1.bf16.msra.mxu0 %v4732
    %4792 = vmatprep.subr.bf16.mxu0 %v4731
    %4793 = vmatpush1.bf16.msra.mxu0 %v4730
    %4794 = vmatprep.subr.bf16.mxu0 %v4729
    %4795 = vmatpush1.bf16.msra.mxu0 %v4728
    %4796 = vmatprep.subr.bf16.mxu0 %v4727
    %4797 = vmatpush1.bf16.msra.mxu0 %v4726
    %4798 = vmatprep.subr.bf16.mxu0 %v4725
    %4799 = vmatpush1.bf16.msra.mxu0 %v4724
    %4800 = vmatprep.subr.bf16.mxu0 %v4723
    %4801 = vmatpush1.bf16.msra.mxu0 %v4722
    %4802 = vmatprep.subr.bf16.mxu0 %v4753
    %4803 = vmatpush2.bf16.msra.mxu0 %v4752
    %4804 = vmatprep.subr.bf16.mxu0 %v4751
    %4805 = vmatpush2.bf16.msra.mxu0 %v4750
    %4806 = vmatprep.subr.bf16.mxu0 %v4749
    %4807 = vmatpush2.bf16.msra.mxu0 %v4748
    %4808 = vmatprep.subr.bf16.mxu0 %v4747
    %4809 = vmatpush2.bf16.msra.mxu0 %v4746
    %4810 = vmatprep.subr.bf16.mxu0 %v4745
    %4811 = vmatpush2.bf16.msra.mxu0 %v4744
    %4812 = vmatprep.subr.bf16.mxu0 %v4743
    %4813 = vmatpush2.bf16.msra.mxu0 %v4742
    %4814 = vmatprep.subr.bf16.mxu0 %v4741
    %4815 = vmatpush2.bf16.msra.mxu0 %v4740
    %4816 = vmatprep.subr.bf16.mxu0 %v4739
    %4817 = vmatpush2.bf16.msra.mxu0 %v4738
    %4818 = vmatprep.mubr.bf16.mxu0 %v4614
    %4819 = vmatmul.mubr.bf16.gmra.mxu0 %v4613
    %v4820 = vpop.f32.mrf.mxu0
    %v4821 = vadd.f32 %v4619, %v4820
    %v4822 = vpop.f32.mrf.mxu0
    %v4823 = vadd.f32 %v4623, %v4822
    %v4824 = vpop.f32.mrf.mxu0
    %v4825 = vpop.f32.mrf.mxu0
    %4826 = vdwg.mxu0
    %v4827 = vadd.f32 %v4821, %v4597
    %v4828 = vadd.f32 %v4823, %v4599
    %v4829 = vadd.f32 %v4827, %v4828
    %4830 = vadd.xlane.f32.xlu0 %v4829
    %v4831 = vpop.xlane.xlu0 %4830
    %v4832 = vrcp.pop 256.0
    %v4833 = vmul.f32 %v4831, %v4832
    %v4834 = vsub.f32 %v4827, %v4833
    %v4835 = vsub.f32 %v4828, %v4833
    %v4836 = vmul.f32 %v4834, %v4834
    %v4837 = vmul.f32 %v4835, %v4835
    %v4838 = vadd.f32 %v4836, %v4837
    %4839 = vadd.xlane.f32.xlu0 %v4838
    %v4840 = vpop.xlane.xlu0 %4839
    %v4841 = vmul.f32 %v4840, %v4832
    %v4842 = vadd.f32 %v4841, 1e-05
    %v4843 = vrsqrt.pop %v4842
    %v4844 = vmul.f32 %v4834, %v4843
    %v4845 = vmul.f32 %v4835, %v4843
    %v4847 = vlaneseq
    %v4848 = vshrl.u32 %v4847, 7
    %v4849 = vsub.s32 0, %v4848
    %v4850 = vrot.slane %v846, %v4849
    %v4851 = vlaneseq
    %v4852 = vshrl.u32 %v4851, 7
    %v4853 = vsub.s32 1, %v4852
    %v4854 = vrot.slane %v846, %v4853
    %v4857 = vmul.f32 %v4844, %v4850
    %v4858 = vmul.f32 %v4845, %v4854
    %v4860 = vlaneseq
    %v4861 = vshrl.u32 %v4860, 7
    %v4862 = vsub.s32 0, %v4861
    %v4863 = vrot.slane %v847, %v4862
    %v4864 = vlaneseq
    %v4865 = vshrl.u32 %v4864, 7
    %v4866 = vsub.s32 1, %v4865
    %v4867 = vrot.slane %v847, %v4866
    %v4870 = vadd.f32 %v4857, %v4863
    %v4871 = vadd.f32 %v4858, %v4867
    %v4872 = vld [vmem:[#allocation5] sm:$0xff]
    %v4873 = vld [vmem:[#allocation5 + $0x8] sm:$0xff]
    %v4874 = vld [vmem:[#allocation16] sm:$0xff]
    %v4875 = vld [vmem:[#allocation16 + $0x8] sm:$0xff]
    %v4876 = vld [vmem:[#allocation16 + $0x10] sm:$0xff]
    %v4877 = vld [vmem:[#allocation16 + $0x18] sm:$0xff]
    %v4878 = vld [vmem:[#allocation16 + $0x20] sm:$0xff]
    %v4879 = vld [vmem:[#allocation16 + $0x28] sm:$0xff]
    %v4880 = vld [vmem:[#allocation16 + $0x30] sm:$0xff]
    %v4881 = vld [vmem:[#allocation16 + $0x38] sm:$0xff]
    %v4882 = vld [vmem:[#allocation16 + $0x40] sm:$0xff]
    %v4883 = vld [vmem:[#allocation16 + $0x48] sm:$0xff]
    %v4884 = vld [vmem:[#allocation16 + $0x50] sm:$0xff]
    %v4885 = vld [vmem:[#allocation16 + $0x58] sm:$0xff]
    %v4886 = vld [vmem:[#allocation16 + $0x60] sm:$0xff]
    %v4887 = vld [vmem:[#allocation16 + $0x68] sm:$0xff]
    %v4888 = vld [vmem:[#allocation16 + $0x70] sm:$0xff]
    %v4889 = vld [vmem:[#allocation16 + $0x78] sm:$0xff]
    %v4890 = vld [vmem:[#allocation16 + $0x80] sm:$0xff]
    %v4891 = vld [vmem:[#allocation16 + $0x88] sm:$0xff]
    %v4892 = vld [vmem:[#allocation16 + $0x90] sm:$0xff]
    %v4893 = vld [vmem:[#allocation16 + $0x98] sm:$0xff]
    %v4894 = vld [vmem:[#allocation16 + $0xa0] sm:$0xff]
    %v4895 = vld [vmem:[#allocation16 + $0xa8] sm:$0xff]
    %v4896 = vld [vmem:[#allocation16 + $0xb0] sm:$0xff]
    %v4897 = vld [vmem:[#allocation16 + $0xb8] sm:$0xff]
    %v4898 = vld [vmem:[#allocation16 + $0xc0] sm:$0xff]
    %v4899 = vld [vmem:[#allocation16 + $0xc8] sm:$0xff]
    %v4900 = vld [vmem:[#allocation16 + $0xd0] sm:$0xff]
    %v4901 = vld [vmem:[#allocation16 + $0xd8] sm:$0xff]
    %v4902 = vld [vmem:[#allocation16 + $0xe0] sm:$0xff]
    %v4903 = vld [vmem:[#allocation16 + $0xe8] sm:$0xff]
    %v4904 = vld [vmem:[#allocation16 + $0xf0] sm:$0xff]
    %v4905 = vld [vmem:[#allocation16 + $0xf8] sm:$0xff]
    %v4906 = vld [vmem:[#allocation16 + $0x100] sm:$0xff]
    %v4907 = vld [vmem:[#allocation16 + $0x108] sm:$0xff]
    %v4908 = vld [vmem:[#allocation16 + $0x110] sm:$0xff]
    %v4909 = vld [vmem:[#allocation16 + $0x118] sm:$0xff]
    %v4910 = vld [vmem:[#allocation16 + $0x120] sm:$0xff]
    %v4911 = vld [vmem:[#allocation16 + $0x128] sm:$0xff]
    %v4912 = vld [vmem:[#allocation16 + $0x130] sm:$0xff]
    %v4913 = vld [vmem:[#allocation16 + $0x138] sm:$0xff]
    %v4914 = vld [vmem:[#allocation16 + $0x140] sm:$0xff]
    %v4915 = vld [vmem:[#allocation16 + $0x148] sm:$0xff]
    %v4916 = vld [vmem:[#allocation16 + $0x150] sm:$0xff]
    %v4917 = vld [vmem:[#allocation16 + $0x158] sm:$0xff]
    %v4918 = vld [vmem:[#allocation16 + $0x160] sm:$0xff]
    %v4919 = vld [vmem:[#allocation16 + $0x168] sm:$0xff]
    %v4920 = vld [vmem:[#allocation16 + $0x170] sm:$0xff]
    %v4921 = vld [vmem:[#allocation16 + $0x178] sm:$0xff]
    %v4922 = vld [vmem:[#allocation16 + $0x180] sm:$0xff]
    %v4923 = vld [vmem:[#allocation16 + $0x188] sm:$0xff]
    %v4924 = vld [vmem:[#allocation16 + $0x190] sm:$0xff]
    %v4925 = vld [vmem:[#allocation16 + $0x198] sm:$0xff]
    %v4926 = vld [vmem:[#allocation16 + $0x1a0] sm:$0xff]
    %v4927 = vld [vmem:[#allocation16 + $0x1a8] sm:$0xff]
    %v4928 = vld [vmem:[#allocation16 + $0x1b0] sm:$0xff]
    %v4929 = vld [vmem:[#allocation16 + $0x1b8] sm:$0xff]
    %v4930 = vld [vmem:[#allocation16 + $0x1c0] sm:$0xff]
    %v4931 = vld [vmem:[#allocation16 + $0x1c8] sm:$0xff]
    %v4932 = vld [vmem:[#allocation16 + $0x1d0] sm:$0xff]
    %v4933 = vld [vmem:[#allocation16 + $0x1d8] sm:$0xff]
    %v4934 = vld [vmem:[#allocation16 + $0x1e0] sm:$0xff]
    %v4935 = vld [vmem:[#allocation16 + $0x1e8] sm:$0xff]
    %v4936 = vld [vmem:[#allocation16 + $0x1f0] sm:$0xff]
    %v4937 = vld [vmem:[#allocation16 + $0x1f8] sm:$0xff]
    %v4938 = vld [vmem:[#allocation17] sm:$0x3]
    %v4939 = vld [vmem:[#allocation19] sm:$0xff]
    %v4940 = vld [vmem:[#allocation19 + $0x8] sm:$0xff]
    %v4941 = vld [vmem:[#allocation19 + $0x10] sm:$0xff]
    %v4942 = vld [vmem:[#allocation19 + $0x18] sm:$0xff]
    %v4943 = vld [vmem:[#allocation19 + $0x20] sm:$0xff]
    %v4944 = vld [vmem:[#allocation19 + $0x28] sm:$0xff]
    %v4945 = vld [vmem:[#allocation19 + $0x30] sm:$0xff]
    %v4946 = vld [vmem:[#allocation19 + $0x38] sm:$0xff]
    %v4947 = vld [vmem:[#allocation19 + $0x40] sm:$0xff]
    %v4948 = vld [vmem:[#allocation19 + $0x48] sm:$0xff]
    %v4949 = vld [vmem:[#allocation19 + $0x50] sm:$0xff]
    %v4950 = vld [vmem:[#allocation19 + $0x58] sm:$0xff]
    %v4951 = vld [vmem:[#allocation19 + $0x60] sm:$0xff]
    %v4952 = vld [vmem:[#allocation19 + $0x68] sm:$0xff]
    %v4953 = vld [vmem:[#allocation19 + $0x70] sm:$0xff]
    %v4954 = vld [vmem:[#allocation19 + $0x78] sm:$0xff]
    %v4955 = vld [vmem:[#allocation19 + $0x80] sm:$0xff]
    %v4956 = vld [vmem:[#allocation19 + $0x88] sm:$0xff]
    %v4957 = vld [vmem:[#allocation19 + $0x90] sm:$0xff]
    %v4958 = vld [vmem:[#allocation19 + $0x98] sm:$0xff]
    %v4959 = vld [vmem:[#allocation19 + $0xa0] sm:$0xff]
    %v4960 = vld [vmem:[#allocation19 + $0xa8] sm:$0xff]
    %v4961 = vld [vmem:[#allocation19 + $0xb0] sm:$0xff]
    %v4962 = vld [vmem:[#allocation19 + $0xb8] sm:$0xff]
    %v4963 = vld [vmem:[#allocation19 + $0xc0] sm:$0xff]
    %v4964 = vld [vmem:[#allocation19 + $0xc8] sm:$0xff]
    %v4965 = vld [vmem:[#allocation19 + $0xd0] sm:$0xff]
    %v4966 = vld [vmem:[#allocation19 + $0xd8] sm:$0xff]
    %v4967 = vld [vmem:[#allocation19 + $0xe0] sm:$0xff]
    %v4968 = vld [vmem:[#allocation19 + $0xe8] sm:$0xff]
    %v4969 = vld [vmem:[#allocation19 + $0xf0] sm:$0xff]
    %v4970 = vld [vmem:[#allocation19 + $0xf8] sm:$0xff]
    %v4971 = vld [vmem:[#allocation20] sm:$0x3]
    %v4972 = vld [vmem:[#allocation22] sm:$0x3]
    %v4973 = vld [vmem:[#allocation23] sm:$0x3]
    %v4975 = vlaneseq
    %v4976 = vshrl.u32 %v4975, 7
    %v4977 = vsub.s32 0, %v4976
    %v4978 = vrot.slane %v4938, %v4977
    %v4979 = vlaneseq
    %v4980 = vshrl.u32 %v4979, 7
    %v4981 = vsub.s32 1, %v4980
    %v4982 = vrot.slane %v4938, %v4981
    %v4987 = vunpack.c.l.b16 %v4872
    %v4988 = vunpack.c.h.b16 %v4872
    %v4989 = vunpack.c.l.b16 %v4873
    %v4990 = vunpack.c.h.b16 %v4873
    %v4991 = vpack.c.b16 %v4987, %v4987
    %v4992 = vpack.c.b16 %v4988, %v4988
    %v4993 = vpack.c.b16 %v4989, %v4989
    %v4994 = vpack.c.b16 %v4990, %v4990
    %v5063 = vunpack.c.l.b16 %v4874
    %v5064 = vunpack.c.h.b16 %v4874
    %v5065 = vunpack.c.l.b16 %v4875
    %v5066 = vunpack.c.h.b16 %v4875
    %v5067 = vunpack.c.l.b16 %v4876
    %v5068 = vunpack.c.h.b16 %v4876
    %v5069 = vunpack.c.l.b16 %v4877
    %v5070 = vunpack.c.h.b16 %v4877
    %v5071 = vunpack.c.l.b16 %v4878
    %v5072 = vunpack.c.h.b16 %v4878
    %v5073 = vunpack.c.l.b16 %v4879
    %v5074 = vunpack.c.h.b16 %v4879
    %v5075 = vunpack.c.l.b16 %v4880
    %v5076 = vunpack.c.h.b16 %v4880
    %v5077 = vunpack.c.l.b16 %v4881
    %v5078 = vunpack.c.h.b16 %v4881
    %v5079 = vunpack.c.l.b16 %v4882
    %v5080 = vunpack.c.h.b16 %v4882
    %v5081 = vunpack.c.l.b16 %v4883
    %v5082 = vunpack.c.h.b16 %v4883
    %v5083 = vunpack.c.l.b16 %v4884
    %v5084 = vunpack.c.h.b16 %v4884
    %v5085 = vunpack.c.l.b16 %v4885
    %v5086 = vunpack.c.h.b16 %v4885
    %v5087 = vunpack.c.l.b16 %v4886
    %v5088 = vunpack.c.h.b16 %v4886
    %v5089 = vunpack.c.l.b16 %v4887
    %v5090 = vunpack.c.h.b16 %v4887
    %v5091 = vunpack.c.l.b16 %v4888
    %v5092 = vunpack.c.h.b16 %v4888
    %v5093 = vunpack.c.l.b16 %v4889
    %v5094 = vunpack.c.h.b16 %v4889
    %v5095 = vunpack.c.l.b16 %v4890
    %v5096 = vunpack.c.h.b16 %v4890
    %v5097 = vunpack.c.l.b16 %v4891
    %v5098 = vunpack.c.h.b16 %v4891
    %v5099 = vunpack.c.l.b16 %v4892
    %v5100 = vunpack.c.h.b16 %v4892
    %v5101 = vunpack.c.l.b16 %v4893
    %v5102 = vunpack.c.h.b16 %v4893
    %v5103 = vunpack.c.l.b16 %v4894
    %v5104 = vunpack.c.h.b16 %v4894
    %v5105 = vunpack.c.l.b16 %v4895
    %v5106 = vunpack.c.h.b16 %v4895
    %v5107 = vunpack.c.l.b16 %v4896
    %v5108 = vunpack.c.h.b16 %v4896
    %v5109 = vunpack.c.l.b16 %v4897
    %v5110 = vunpack.c.h.b16 %v4897
    %v5111 = vunpack.c.l.b16 %v4898
    %v5112 = vunpack.c.h.b16 %v4898
    %v5113 = vunpack.c.l.b16 %v4899
    %v5114 = vunpack.c.h.b16 %v4899
    %v5115 = vunpack.c.l.b16 %v4900
    %v5116 = vunpack.c.h.b16 %v4900
    %v5117 = vunpack.c.l.b16 %v4901
    %v5118 = vunpack.c.h.b16 %v4901
    %v5119 = vunpack.c.l.b16 %v4902
    %v5120 = vunpack.c.h.b16 %v4902
    %v5121 = vunpack.c.l.b16 %v4903
    %v5122 = vunpack.c.h.b16 %v4903
    %v5123 = vunpack.c.l.b16 %v4904
    %v5124 = vunpack.c.h.b16 %v4904
    %v5125 = vunpack.c.l.b16 %v4905
    %v5126 = vunpack.c.h.b16 %v4905
    %v5127 = vunpack.c.l.b16 %v4906
    %v5128 = vunpack.c.h.b16 %v4906
    %v5129 = vunpack.c.l.b16 %v4907
    %v5130 = vunpack.c.h.b16 %v4907
    %v5131 = vunpack.c.l.b16 %v4908
    %v5132 = vunpack.c.h.b16 %v4908
    %v5133 = vunpack.c.l.b16 %v4909
    %v5134 = vunpack.c.h.b16 %v4909
    %v5135 = vunpack.c.l.b16 %v4910
    %v5136 = vunpack.c.h.b16 %v4910
    %v5137 = vunpack.c.l.b16 %v4911
    %v5138 = vunpack.c.h.b16 %v4911
    %v5139 = vunpack.c.l.b16 %v4912
    %v5140 = vunpack.c.h.b16 %v4912
    %v5141 = vunpack.c.l.b16 %v4913
    %v5142 = vunpack.c.h.b16 %v4913
    %v5143 = vunpack.c.l.b16 %v4914
    %v5144 = vunpack.c.h.b16 %v4914
    %v5145 = vunpack.c.l.b16 %v4915
    %v5146 = vunpack.c.h.b16 %v4915
    %v5147 = vunpack.c.l.b16 %v4916
    %v5148 = vunpack.c.h.b16 %v4916
    %v5149 = vunpack.c.l.b16 %v4917
    %v5150 = vunpack.c.h.b16 %v4917
    %v5151 = vunpack.c.l.b16 %v4918
    %v5152 = vunpack.c.h.b16 %v4918
    %v5153 = vunpack.c.l.b16 %v4919
    %v5154 = vunpack.c.h.b16 %v4919
    %v5155 = vunpack.c.l.b16 %v4920
    %v5156 = vunpack.c.h.b16 %v4920
    %v5157 = vunpack.c.l.b16 %v4921
    %v5158 = vunpack.c.h.b16 %v4921
    %v5159 = vunpack.c.l.b16 %v4922
    %v5160 = vunpack.c.h.b16 %v4922
    %v5161 = vunpack.c.l.b16 %v4923
    %v5162 = vunpack.c.h.b16 %v4923
    %v5163 = vunpack.c.l.b16 %v4924
    %v5164 = vunpack.c.h.b16 %v4924
    %v5165 = vunpack.c.l.b16 %v4925
    %v5166 = vunpack.c.h.b16 %v4925
    %v5167 = vunpack.c.l.b16 %v4926
    %v5168 = vunpack.c.h.b16 %v4926
    %v5169 = vunpack.c.l.b16 %v4927
    %v5170 = vunpack.c.h.b16 %v4927
    %v5171 = vunpack.c.l.b16 %v4928
    %v5172 = vunpack.c.h.b16 %v4928
    %v5173 = vunpack.c.l.b16 %v4929
    %v5174 = vunpack.c.h.b16 %v4929
    %v5175 = vunpack.c.l.b16 %v4930
    %v5176 = vunpack.c.h.b16 %v4930
    %v5177 = vunpack.c.l.b16 %v4931
    %v5178 = vunpack.c.h.b16 %v4931
    %v5179 = vunpack.c.l.b16 %v4932
    %v5180 = vunpack.c.h.b16 %v4932
    %v5181 = vunpack.c.l.b16 %v4933
    %v5182 = vunpack.c.h.b16 %v4933
    %v5183 = vunpack.c.l.b16 %v4934
    %v5184 = vunpack.c.h.b16 %v4934
    %v5185 = vunpack.c.l.b16 %v4935
    %v5186 = vunpack.c.h.b16 %v4935
    %v5187 = vunpack.c.l.b16 %v4936
    %v5188 = vunpack.c.h.b16 %v4936
    %v5189 = vunpack.c.l.b16 %v4937
    %v5190 = vunpack.c.h.b16 %v4937
    %v5191 = vpack.c.b16 %v5065, %v5063
    %v5192 = vpack.c.b16 %v5066, %v5064
    %v5193 = vpack.c.b16 %v5069, %v5067
    %v5194 = vpack.c.b16 %v5070, %v5068
    %v5195 = vpack.c.b16 %v5073, %v5071
    %v5196 = vpack.c.b16 %v5074, %v5072
    %v5197 = vpack.c.b16 %v5077, %v5075
    %v5198 = vpack.c.b16 %v5078, %v5076
    %v5199 = vpack.c.b16 %v5081, %v5079
    %v5200 = vpack.c.b16 %v5082, %v5080
    %v5201 = vpack.c.b16 %v5085, %v5083
    %v5202 = vpack.c.b16 %v5086, %v5084
    %v5203 = vpack.c.b16 %v5089, %v5087
    %v5204 = vpack.c.b16 %v5090, %v5088
    %v5205 = vpack.c.b16 %v5093, %v5091
    %v5206 = vpack.c.b16 %v5094, %v5092
    %v5207 = vpack.c.b16 %v5097, %v5095
    %v5208 = vpack.c.b16 %v5098, %v5096
    %v5209 = vpack.c.b16 %v5101, %v5099
    %v5210 = vpack.c.b16 %v5102, %v5100
    %v5211 = vpack.c.b16 %v5105, %v5103
    %v5212 = vpack.c.b16 %v5106, %v5104
    %v5213 = vpack.c.b16 %v5109, %v5107
    %v5214 = vpack.c.b16 %v5110, %v5108
    %v5215 = vpack.c.b16 %v5113, %v5111
    %v5216 = vpack.c.b16 %v5114, %v5112
    %v5217 = vpack.c.b16 %v5117, %v5115
    %v5218 = vpack.c.b16 %v5118, %v5116
    %v5219 = vpack.c.b16 %v5121, %v5119
    %v5220 = vpack.c.b16 %v5122, %v5120
    %v5221 = vpack.c.b16 %v5125, %v5123
    %v5222 = vpack.c.b16 %v5126, %v5124
    %v5223 = vpack.c.b16 %v5129, %v5127
    %v5224 = vpack.c.b16 %v5130, %v5128
    %v5225 = vpack.c.b16 %v5133, %v5131
    %v5226 = vpack.c.b16 %v5134, %v5132
    %v5227 = vpack.c.b16 %v5137, %v5135
    %v5228 = vpack.c.b16 %v5138, %v5136
    %v5229 = vpack.c.b16 %v5141, %v5139
    %v5230 = vpack.c.b16 %v5142, %v5140
    %v5231 = vpack.c.b16 %v5145, %v5143
    %v5232 = vpack.c.b16 %v5146, %v5144
    %v5233 = vpack.c.b16 %v5149, %v5147
    %v5234 = vpack.c.b16 %v5150, %v5148
    %v5235 = vpack.c.b16 %v5153, %v5151
    %v5236 = vpack.c.b16 %v5154, %v5152
    %v5237 = vpack.c.b16 %v5157, %v5155
    %v5238 = vpack.c.b16 %v5158, %v5156
    %v5239 = vpack.c.b16 %v5161, %v5159
    %v5240 = vpack.c.b16 %v5162, %v5160
    %v5241 = vpack.c.b16 %v5165, %v5163
    %v5242 = vpack.c.b16 %v5166, %v5164
    %v5243 = vpack.c.b16 %v5169, %v5167
    %v5244 = vpack.c.b16 %v5170, %v5168
    %v5245 = vpack.c.b16 %v5173, %v5171
    %v5246 = vpack.c.b16 %v5174, %v5172
    %v5247 = vpack.c.b16 %v5177, %v5175
    %v5248 = vpack.c.b16 %v5178, %v5176
    %v5249 = vpack.c.b16 %v5181, %v5179
    %v5250 = vpack.c.b16 %v5182, %v5180
    %v5251 = vpack.c.b16 %v5185, %v5183
    %v5252 = vpack.c.b16 %v5186, %v5184
    %v5253 = vpack.c.b16 %v5189, %v5187
    %v5254 = vpack.c.b16 %v5190, %v5188
    %5319 = vmatprep.subr.bf16.mxu0 %v5206
    %5320 = vmatpush1.bf16.msra.mxu0 %v5205
    %5321 = vmatprep.subr.bf16.mxu0 %v5204
    %5322 = vmatpush1.bf16.msra.mxu0 %v5203
    %5323 = vmatprep.subr.bf16.mxu0 %v5202
    %5324 = vmatpush1.bf16.msra.mxu0 %v5201
    %5325 = vmatprep.subr.bf16.mxu0 %v5200
    %5326 = vmatpush1.bf16.msra.mxu0 %v5199
    %5327 = vmatprep.subr.bf16.mxu0 %v5198
    %5328 = vmatpush1.bf16.msra.mxu0 %v5197
    %5329 = vmatprep.subr.bf16.mxu0 %v5196
    %5330 = vmatpush1.bf16.msra.mxu0 %v5195
    %5331 = vmatprep.subr.bf16.mxu0 %v5194
    %5332 = vmatpush1.bf16.msra.mxu0 %v5193
    %5333 = vmatprep.subr.bf16.mxu0 %v5192
    %5334 = vmatpush1.bf16.msra.mxu0 %v5191
    %5335 = vmatprep.subr.bf16.mxu0 %v5222
    %5336 = vmatpush2.bf16.msra.mxu0 %v5221
    %5337 = vmatprep.subr.bf16.mxu0 %v5220
    %5338 = vmatpush2.bf16.msra.mxu0 %v5219
    %5339 = vmatprep.subr.bf16.mxu0 %v5218
    %5340 = vmatpush2.bf16.msra.mxu0 %v5217
    %5341 = vmatprep.subr.bf16.mxu0 %v5216
    %5342 = vmatpush2.bf16.msra.mxu0 %v5215
    %5343 = vmatprep.subr.bf16.mxu0 %v5214
    %5344 = vmatpush2.bf16.msra.mxu0 %v5213
    %5345 = vmatprep.subr.bf16.mxu0 %v5212
    %5346 = vmatpush2.bf16.msra.mxu0 %v5211
    %5347 = vmatprep.subr.bf16.mxu0 %v5210
    %5348 = vmatpush2.bf16.msra.mxu0 %v5209
    %5349 = vmatprep.subr.bf16.mxu0 %v5208
    %5350 = vmatpush2.bf16.msra.mxu0 %v5207
    %5351 = vmatprep.mubr.bf16.mxu0 %v4992
    %5352 = vmatmul.mubr.bf16.gmra.mxu0 %v4991
    %v5353 = vpop.f32.mrf.mxu0
    %v5354 = vadd.f32 %v4978, %v5353
    %v5355 = vpop.f32.mrf.mxu0
    %v5356 = vadd.f32 %v4982, %v5355
    %v5357 = vpop.f32.mrf.mxu0
    %v5358 = vpop.f32.mrf.mxu0
    %5359 = vdwg.mxu0
    %5360 = vmatprep.subr.bf16.mxu0 %v5238
    %5361 = vmatpush1.bf16.msra.mxu0 %v5237
    %5362 = vmatprep.subr.bf16.mxu0 %v5236
    %5363 = vmatpush1.bf16.msra.mxu0 %v5235
    %5364 = vmatprep.subr.bf16.mxu0 %v5234
    %5365 = vmatpush1.bf16.msra.mxu0 %v5233
    %5366 = vmatprep.subr.bf16.mxu0 %v5232
    %5367 = vmatpush1.bf16.msra.mxu0 %v5231
    %5368 = vmatprep.subr.bf16.mxu0 %v5230
    %5369 = vmatpush1.bf16.msra.mxu0 %v5229
    %5370 = vmatprep.subr.bf16.mxu0 %v5228
    %5371 = vmatpush1.bf16.msra.mxu0 %v5227
    %5372 = vmatprep.subr.bf16.mxu0 %v5226
    %5373 = vmatpush1.bf16.msra.mxu0 %v5225
    %5374 = vmatprep.subr.bf16.mxu0 %v5224
    %5375 = vmatpush1.bf16.msra.mxu0 %v5223
    %5376 = vmatprep.subr.bf16.mxu0 %v5254
    %5377 = vmatpush2.bf16.msra.mxu0 %v5253
    %5378 = vmatprep.subr.bf16.mxu0 %v5252
    %5379 = vmatpush2.bf16.msra.mxu0 %v5251
    %5380 = vmatprep.subr.bf16.mxu0 %v5250
    %5381 = vmatpush2.bf16.msra.mxu0 %v5249
    %5382 = vmatprep.subr.bf16.mxu0 %v5248
    %5383 = vmatpush2.bf16.msra.mxu0 %v5247
    %5384 = vmatprep.subr.bf16.mxu0 %v5246
    %5385 = vmatpush2.bf16.msra.mxu0 %v5245
    %5386 = vmatprep.subr.bf16.mxu0 %v5244
    %5387 = vmatpush2.bf16.msra.mxu0 %v5243
    %5388 = vmatprep.subr.bf16.mxu0 %v5242
    %5389 = vmatpush2.bf16.msra.mxu0 %v5241
    %5390 = vmatprep.subr.bf16.mxu0 %v5240
    %5391 = vmatpush2.bf16.msra.mxu0 %v5239
    %5392 = vmatprep.mubr.bf16.mxu0 %v4994
    %5393 = vmatmul.mubr.bf16.gmra.mxu0 %v4993
    %v5394 = vpop.f32.mrf.mxu0
    %v5395 = vadd.f32 %v5354, %v5394
    %v5396 = vpop.f32.mrf.mxu0
    %v5397 = vadd.f32 %v5356, %v5396
    %v5398 = vpop.f32.mrf.mxu0
    %v5399 = vpop.f32.mrf.mxu0
    %5400 = vdwg.mxu0
    %v5401 = vmul.f32 %v5395, 0.5
    %v5402 = vmul.f32 %v5397, 0.5
    %v5403 = vmul.f32 %v5395, 0.70710677
    %v5404 = vmul.f32 %v5397, 0.70710677
    %v5405 = verf.f32.pop %v5403
    %v5406 = verf.f32.pop %v5404
    %v5407 = vadd.f32 %v5405, 1.0
    %v5408 = vadd.f32 %v5406, 1.0
    %v5409 = vmul.f32 %v5401, %v5407
    %v5410 = vmul.f32 %v5402, %v5408
    %v5411 = vpack.c.bf16 %v5409, %v5409
    %v5412 = vpack.c.bf16 %v5410, %v5410
    %v5414 = vlaneseq
    %v5415 = vshrl.u32 %v5414, 7
    %v5416 = vsub.s32 0, %v5415
    %v5417 = vrot.slane %v4971, %v5416
    %v5418 = vlaneseq
    %v5419 = vshrl.u32 %v5418, 7
    %v5420 = vsub.s32 1, %v5419
    %v5421 = vrot.slane %v4971, %v5420
    %v5456 = vunpack.c.l.b16 %v4939
    %v5457 = vunpack.c.h.b16 %v4939
    %v5458 = vunpack.c.l.b16 %v4940
    %v5459 = vunpack.c.h.b16 %v4940
    %v5460 = vunpack.c.l.b16 %v4941
    %v5461 = vunpack.c.h.b16 %v4941
    %v5462 = vunpack.c.l.b16 %v4942
    %v5463 = vunpack.c.h.b16 %v4942
    %v5464 = vunpack.c.l.b16 %v4943
    %v5465 = vunpack.c.h.b16 %v4943
    %v5466 = vunpack.c.l.b16 %v4944
    %v5467 = vunpack.c.h.b16 %v4944
    %v5468 = vunpack.c.l.b16 %v4945
    %v5469 = vunpack.c.h.b16 %v4945
    %v5470 = vunpack.c.l.b16 %v4946
    %v5471 = vunpack.c.h.b16 %v4946
    %v5472 = vunpack.c.l.b16 %v4947
    %v5473 = vunpack.c.h.b16 %v4947
    %v5474 = vunpack.c.l.b16 %v4948
    %v5475 = vunpack.c.h.b16 %v4948
    %v5476 = vunpack.c.l.b16 %v4949
    %v5477 = vunpack.c.h.b16 %v4949
    %v5478 = vunpack.c.l.b16 %v4950
    %v5479 = vunpack.c.h.b16 %v4950
    %v5480 = vunpack.c.l.b16 %v4951
    %v5481 = vunpack.c.h.b16 %v4951
    %v5482 = vunpack.c.l.b16 %v4952
    %v5483 = vunpack.c.h.b16 %v4952
    %v5484 = vunpack.c.l.b16 %v4953
    %v5485 = vunpack.c.h.b16 %v4953
    %v5486 = vunpack.c.l.b16 %v4954
    %v5487 = vunpack.c.h.b16 %v4954
    %v5488 = vunpack.c.l.b16 %v4955
    %v5489 = vunpack.c.h.b16 %v4955
    %v5490 = vunpack.c.l.b16 %v4956
    %v5491 = vunpack.c.h.b16 %v4956
    %v5492 = vunpack.c.l.b16 %v4957
    %v5493 = vunpack.c.h.b16 %v4957
    %v5494 = vunpack.c.l.b16 %v4958
    %v5495 = vunpack.c.h.b16 %v4958
    %v5496 = vunpack.c.l.b16 %v4959
    %v5497 = vunpack.c.h.b16 %v4959
    %v5498 = vunpack.c.l.b16 %v4960
    %v5499 = vunpack.c.h.b16 %v4960
    %v5500 = vunpack.c.l.b16 %v4961
    %v5501 = vunpack.c.h.b16 %v4961
    %v5502 = vunpack.c.l.b16 %v4962
    %v5503 = vunpack.c.h.b16 %v4962
    %v5504 = vunpack.c.l.b16 %v4963
    %v5505 = vunpack.c.h.b16 %v4963
    %v5506 = vunpack.c.l.b16 %v4964
    %v5507 = vunpack.c.h.b16 %v4964
    %v5508 = vunpack.c.l.b16 %v4965
    %v5509 = vunpack.c.h.b16 %v4965
    %v5510 = vunpack.c.l.b16 %v4966
    %v5511 = vunpack.c.h.b16 %v4966
    %v5512 = vunpack.c.l.b16 %v4967
    %v5513 = vunpack.c.h.b16 %v4967
    %v5514 = vunpack.c.l.b16 %v4968
    %v5515 = vunpack.c.h.b16 %v4968
    %v5516 = vunpack.c.l.b16 %v4969
    %v5517 = vunpack.c.h.b16 %v4969
    %v5518 = vunpack.c.l.b16 %v4970
    %v5519 = vunpack.c.h.b16 %v4970
    %v5520 = vpack.c.b16 %v5458, %v5456
    %v5521 = vpack.c.b16 %v5459, %v5457
    %v5522 = vpack.c.b16 %v5462, %v5460
    %v5523 = vpack.c.b16 %v5463, %v5461
    %v5524 = vpack.c.b16 %v5466, %v5464
    %v5525 = vpack.c.b16 %v5467, %v5465
    %v5526 = vpack.c.b16 %v5470, %v5468
    %v5527 = vpack.c.b16 %v5471, %v5469
    %v5528 = vpack.c.b16 %v5474, %v5472
    %v5529 = vpack.c.b16 %v5475, %v5473
    %v5530 = vpack.c.b16 %v5478, %v5476
    %v5531 = vpack.c.b16 %v5479, %v5477
    %v5532 = vpack.c.b16 %v5482, %v5480
    %v5533 = vpack.c.b16 %v5483, %v5481
    %v5534 = vpack.c.b16 %v5486, %v5484
    %v5535 = vpack.c.b16 %v5487, %v5485
    %v5536 = vpack.c.b16 %v5490, %v5488
    %v5537 = vpack.c.b16 %v5491, %v5489
    %v5538 = vpack.c.b16 %v5494, %v5492
    %v5539 = vpack.c.b16 %v5495, %v5493
    %v5540 = vpack.c.b16 %v5498, %v5496
    %v5541 = vpack.c.b16 %v5499, %v5497
    %v5542 = vpack.c.b16 %v5502, %v5500
    %v5543 = vpack.c.b16 %v5503, %v5501
    %v5544 = vpack.c.b16 %v5506, %v5504
    %v5545 = vpack.c.b16 %v5507, %v5505
    %v5546 = vpack.c.b16 %v5510, %v5508
    %v5547 = vpack.c.b16 %v5511, %v5509
    %v5548 = vpack.c.b16 %v5514, %v5512
    %v5549 = vpack.c.b16 %v5515, %v5513
    %v5550 = vpack.c.b16 %v5518, %v5516
    %v5551 = vpack.c.b16 %v5519, %v5517
    %5584 = vmatprep.subr.bf16.mxu0 %v5535
    %5585 = vmatpush1.bf16.msra.mxu0 %v5534
    %5586 = vmatprep.subr.bf16.mxu0 %v5533
    %5587 = vmatpush1.bf16.msra.mxu0 %v5532
    %5588 = vmatprep.subr.bf16.mxu0 %v5531
    %5589 = vmatpush1.bf16.msra.mxu0 %v5530
    %5590 = vmatprep.subr.bf16.mxu0 %v5529
    %5591 = vmatpush1.bf16.msra.mxu0 %v5528
    %5592 = vmatprep.subr.bf16.mxu0 %v5527
    %5593 = vmatpush1.bf16.msra.mxu0 %v5526
    %5594 = vmatprep.subr.bf16.mxu0 %v5525
    %5595 = vmatpush1.bf16.msra.mxu0 %v5524
    %5596 = vmatprep.subr.bf16.mxu0 %v5523
    %5597 = vmatpush1.bf16.msra.mxu0 %v5522
    %5598 = vmatprep.subr.bf16.mxu0 %v5521
    %5599 = vmatpush1.bf16.msra.mxu0 %v5520
    %5600 = vmatprep.subr.bf16.mxu0 %v5551
    %5601 = vmatpush2.bf16.msra.mxu0 %v5550
    %5602 = vmatprep.subr.bf16.mxu0 %v5549
    %5603 = vmatpush2.bf16.msra.mxu0 %v5548
    %5604 = vmatprep.subr.bf16.mxu0 %v5547
    %5605 = vmatpush2.bf16.msra.mxu0 %v5546
    %5606 = vmatprep.subr.bf16.mxu0 %v5545
    %5607 = vmatpush2.bf16.msra.mxu0 %v5544
    %5608 = vmatprep.subr.bf16.mxu0 %v5543
    %5609 = vmatpush2.bf16.msra.mxu0 %v5542
    %5610 = vmatprep.subr.bf16.mxu0 %v5541
    %5611 = vmatpush2.bf16.msra.mxu0 %v5540
    %5612 = vmatprep.subr.bf16.mxu0 %v5539
    %5613 = vmatpush2.bf16.msra.mxu0 %v5538
    %5614 = vmatprep.subr.bf16.mxu0 %v5537
    %5615 = vmatpush2.bf16.msra.mxu0 %v5536
    %5616 = vmatprep.mubr.bf16.mxu0 %v5412
    %5617 = vmatmul.mubr.bf16.gmra.mxu0 %v5411
    %v5618 = vpop.f32.mrf.mxu0
    %v5619 = vadd.f32 %v5417, %v5618
    %v5620 = vpop.f32.mrf.mxu0
    %v5621 = vadd.f32 %v5421, %v5620
    %v5622 = vpop.f32.mrf.mxu0
    %v5623 = vpop.f32.mrf.mxu0
    %5624 = vdwg.mxu0
    %v5625 = vadd.f32 %v5619, %v5395
    %v5626 = vadd.f32 %v5621, %v5397
    %v5627 = vadd.f32 %v5625, %v5626
    %5628 = vadd.xlane.f32.xlu0 %v5627
    %v5629 = vpop.xlane.xlu0 %5628
    %v5630 = vmul.f32 %v5629, %v4832
    %v5631 = vsub.f32 %v5625, %v5630
    %v5632 = vsub.f32 %v5626, %v5630
    %v5633 = vmul.f32 %v5631, %v5631
    %v5634 = vmul.f32 %v5632, %v5632
    %v5635 = vadd.f32 %v5633, %v5634
    %5636 = vadd.xlane.f32.xlu0 %v5635
    %v5637 = vpop.xlane.xlu0 %5636
    %v5638 = vmul.f32 %v5637, %v4832
    %v5639 = vadd.f32 %v5638, 1e-05
    %v5640 = vrsqrt.pop %v5639
    %v5641 = vmul.f32 %v5631, %v5640
    %v5642 = vmul.f32 %v5632, %v5640
    %v5644 = vlaneseq
    %v5645 = vshrl.u32 %v5644, 7
    %v5646 = vsub.s32 0, %v5645
    %v5647 = vrot.slane %v4972, %v5646
    %v5648 = vlaneseq
    %v5649 = vshrl.u32 %v5648, 7
    %v5650 = vsub.s32 1, %v5649
    %v5651 = vrot.slane %v4972, %v5650
    %v5654 = vmul.f32 %v5641, %v5647
    %v5655 = vmul.f32 %v5642, %v5651
    %v5657 = vlaneseq
    %v5658 = vshrl.u32 %v5657, 7
    %v5659 = vsub.s32 0, %v5658
    %v5660 = vrot.slane %v4973, %v5659
    %v5661 = vlaneseq
    %v5662 = vshrl.u32 %v5661, 7
    %v5663 = vsub.s32 1, %v5662
    %v5664 = vrot.slane %v4973, %v5663
    %v5667 = vadd.f32 %v5654, %v5660
    %v5668 = vadd.f32 %v5655, %v5664
    %5669 = vmatprep.subr.mxu0 0.0
    %5670 = vmatpush1.xpose.msra.mxu0 0.0
    %5671 = vmatprep.subr.mxu0 0.0
    %5672 = vmatpush1.xpose.msra.mxu0 0.0
    %5673 = vmatprep.subr.mxu0 0.0
    %5674 = vmatpush1.xpose.msra.mxu0 0.0
    %5675 = vmatprep.subr.mxu0 0.0
    %5676 = vmatpush1.xpose.msra.mxu0 0.0
    %5677 = vmatprep.subr.mxu0 0.0
    %5678 = vmatpush1.xpose.msra.mxu0 0.0
    %5679 = vmatprep.subr.mxu0 0.0
    %5680 = vmatpush1.xpose.msra.mxu0 0.0
    %5681 = vmatprep.subr.mxu0 0.0
    %5682 = vmatpush1.xpose.msra.mxu0 0.0
    %5683 = vmatprep.subr.mxu0 0.0
    %5684 = vmatpush1.xpose.msra.mxu0 0.0
    %5685 = vmatprep.subr.mxu0 0.0
    %5686 = vmatpush1.xpose.msra.mxu0 0.0
    %5687 = vmatprep.subr.mxu0 0.0
    %5688 = vmatpush1.xpose.msra.mxu0 0.0
    %5689 = vmatprep.subr.mxu0 0.0
    %5690 = vmatpush1.xpose.msra.mxu0 0.0
    %5691 = vmatprep.subr.mxu0 0.0
    %5692 = vmatpush1.xpose.msra.mxu0 0.0
    %5693 = vmatprep.subr.mxu0 0.0
    %5694 = vmatpush1.xpose.msra.mxu0 0.0
    %5695 = vmatprep.subr.mxu0 0.0
    %5696 = vmatpush1.xpose.msra.mxu0 0.0
    %5697 = vmatprep.subr.mxu0 0.0
    %5698 = vmatpush1.xpose.msra.mxu0 0.0
    %5699 = vmatprep.subr.mxu0 %v4871
    %5700 = vmatpush1.xpose.msra.mxu0 %v4870
    %5701 = vmatprep.subr.mxu0 0.0
    %5702 = vmatpush2.xpose.msra.mxu0 0.0
    %5703 = vmatprep.subr.mxu0 0.0
    %5704 = vmatpush2.xpose.msra.mxu0 0.0
    %5705 = vmatprep.subr.mxu0 0.0
    %5706 = vmatpush2.xpose.msra.mxu0 0.0
    %5707 = vmatprep.subr.mxu0 0.0
    %5708 = vmatpush2.xpose.msra.mxu0 0.0
    %5709 = vmatprep.subr.mxu0 0.0
    %5710 = vmatpush2.xpose.msra.mxu0 0.0
    %5711 = vmatprep.subr.mxu0 0.0
    %5712 = vmatpush2.xpose.msra.mxu0 0.0
    %5713 = vmatprep.subr.mxu0 0.0
    %5714 = vmatpush2.xpose.msra.mxu0 0.0
    %5715 = vmatprep.subr.mxu0 0.0
    %5716 = vmatpush2.xpose.msra.mxu0 0.0
    %5717 = vmatprep.subr.mxu0 0.0
    %5718 = vmatpush2.xpose.msra.mxu0 0.0
    %5719 = vmatprep.subr.mxu0 0.0
    %5720 = vmatpush2.xpose.msra.mxu0 0.0
    %5721 = vmatprep.subr.mxu0 0.0
    %5722 = vmatpush2.xpose.msra.mxu0 0.0
    %5723 = vmatprep.subr.mxu0 0.0
    %5724 = vmatpush2.xpose.msra.mxu0 0.0
    %5725 = vmatprep.subr.mxu0 0.0
    %5726 = vmatpush2.xpose.msra.mxu0 0.0
    %5727 = vmatprep.subr.mxu0 0.0
    %5728 = vmatpush2.xpose.msra.mxu0 0.0
    %5729 = vmatprep.subr.mxu0 0.0
    %5730 = vmatpush2.xpose.msra.mxu0 0.0
    %5731 = vmatprep.subr.mxu0 0.0
    %5732 = vmatpush2.xpose.msra.mxu0 0.0
    %5733 = vmatprep.mubr.f32.mxu0 %v5668
    %5734 = vmatmul.mubr.f32.gmra.mxu0 %v5667
    %v5735 = vpop.f32.mrf.mxu0
    %v5736 = vadd.f32 0.0, %v5735
    %v5737 = vpop.f32.mrf.mxu0
    %5738 = vdwg.mxu0
    %5739 = vmatprep.subr.mxu0 0.0
    %5740 = vmatpush1.xpose.msra.mxu0 0.0
    %5741 = vmatprep.subr.mxu0 0.0
    %5742 = vmatpush1.xpose.msra.mxu0 0.0
    %5743 = vmatprep.subr.mxu0 0.0
    %5744 = vmatpush1.xpose.msra.mxu0 0.0
    %5745 = vmatprep.subr.mxu0 0.0
    %5746 = vmatpush1.xpose.msra.mxu0 0.0
    %5747 = vmatprep.subr.mxu0 0.0
    %5748 = vmatpush1.xpose.msra.mxu0 0.0
    %5749 = vmatprep.subr.mxu0 0.0
    %5750 = vmatpush1.xpose.msra.mxu0 0.0
    %5751 = vmatprep.subr.mxu0 0.0
    %5752 = vmatpush1.xpose.msra.mxu0 0.0
    %5753 = vmatprep.subr.mxu0 0.0
    %5754 = vmatpush1.xpose.msra.mxu0 0.0
    %5755 = vmatprep.subr.mxu0 0.0
    %5756 = vmatpush1.xpose.msra.mxu0 0.0
    %5757 = vmatprep.subr.mxu0 0.0
    %5758 = vmatpush1.xpose.msra.mxu0 0.0
    %5759 = vmatprep.subr.mxu0 0.0
    %5760 = vmatpush1.xpose.msra.mxu0 0.0
    %5761 = vmatprep.subr.mxu0 0.0
    %5762 = vmatpush1.xpose.msra.mxu0 0.0
    %5763 = vmatprep.subr.mxu0 0.0
    %5764 = vmatpush1.xpose.msra.mxu0 0.0
    %5765 = vmatprep.subr.mxu0 0.0
    %5766 = vmatpush1.xpose.msra.mxu0 0.0
    %5767 = vmatprep.subr.mxu0 0.0
    %5768 = vmatpush1.xpose.msra.mxu0 0.0
    %5769 = vmatprep.subr.mxu0 %v4871
    %5770 = vmatpush1.xpose.msra.mxu0 %v4870
    %5771 = vmatprep.subr.mxu0 0.0
    %5772 = vmatpush2.xpose.msra.mxu0 0.0
    %5773 = vmatprep.subr.mxu0 0.0
    %5774 = vmatpush2.xpose.msra.mxu0 0.0
    %5775 = vmatprep.subr.mxu0 0.0
    %5776 = vmatpush2.xpose.msra.mxu0 0.0
    %5777 = vmatprep.subr.mxu0 0.0
    %5778 = vmatpush2.xpose.msra.mxu0 0.0
    %5779 = vmatprep.subr.mxu0 0.0
    %5780 = vmatpush2.xpose.msra.mxu0 0.0
    %5781 = vmatprep.subr.mxu0 0.0
    %5782 = vmatpush2.xpose.msra.mxu0 0.0
    %5783 = vmatprep.subr.mxu0 0.0
    %5784 = vmatpush2.xpose.msra.mxu0 0.0
    %5785 = vmatprep.subr.mxu0 0.0
    %5786 = vmatpush2.xpose.msra.mxu0 0.0
    %5787 = vmatprep.subr.mxu0 0.0
    %5788 = vmatpush2.xpose.msra.mxu0 0.0
    %5789 = vmatprep.subr.mxu0 0.0
    %5790 = vmatpush2.xpose.msra.mxu0 0.0
    %5791 = vmatprep.subr.mxu0 0.0
    %5792 = vmatpush2.xpose.msra.mxu0 0.0
    %5793 = vmatprep.subr.mxu0 0.0
    %5794 = vmatpush2.xpose.msra.mxu0 0.0
    %5795 = vmatprep.subr.mxu0 0.0
    %5796 = vmatpush2.xpose.msra.mxu0 0.0
    %5797 = vmatprep.subr.mxu0 0.0
    %5798 = vmatpush2.xpose.msra.mxu0 0.0
    %5799 = vmatprep.subr.mxu0 0.0
    %5800 = vmatpush2.xpose.msra.mxu0 0.0
    %5801 = vmatprep.subr.mxu0 0.0
    %5802 = vmatpush2.xpose.msra.mxu0 0.0
    %5803 = vmatprep.mubr.f32.mxu0 %v4871
    %5804 = vmatmul.mubr.f32.gmra.mxu0 %v4870
    %v5805 = vpop.f32.mrf.mxu0
    %v5806 = vadd.f32 0.0, %v5805
    %v5807 = vpop.f32.mrf.mxu0
    %5808 = vdwg.mxu0
    %5809 = vmatprep.subr.mxu0 0.0
    %5810 = vmatpush1.xpose.msra.mxu0 0.0
    %5811 = vmatprep.subr.mxu0 0.0
    %5812 = vmatpush1.xpose.msra.mxu0 0.0
    %5813 = vmatprep.subr.mxu0 0.0
    %5814 = vmatpush1.xpose.msra.mxu0 0.0
    %5815 = vmatprep.subr.mxu0 0.0
    %5816 = vmatpush1.xpose.msra.mxu0 0.0
    %5817 = vmatprep.subr.mxu0 0.0
    %5818 = vmatpush1.xpose.msra.mxu0 0.0
    %5819 = vmatprep.subr.mxu0 0.0
    %5820 = vmatpush1.xpose.msra.mxu0 0.0
    %5821 = vmatprep.subr.mxu0 0.0
    %5822 = vmatpush1.xpose.msra.mxu0 0.0
    %5823 = vmatprep.subr.mxu0 0.0
    %5824 = vmatpush1.xpose.msra.mxu0 0.0
    %5825 = vmatprep.subr.mxu0 0.0
    %5826 = vmatpush1.xpose.msra.mxu0 0.0
    %5827 = vmatprep.subr.mxu0 0.0
    %5828 = vmatpush1.xpose.msra.mxu0 0.0
    %5829 = vmatprep.subr.mxu0 0.0
    %5830 = vmatpush1.xpose.msra.mxu0 0.0
    %5831 = vmatprep.subr.mxu0 0.0
    %5832 = vmatpush1.xpose.msra.mxu0 0.0
    %5833 = vmatprep.subr.mxu0 0.0
    %5834 = vmatpush1.xpose.msra.mxu0 0.0
    %5835 = vmatprep.subr.mxu0 0.0
    %5836 = vmatpush1.xpose.msra.mxu0 0.0
    %5837 = vmatprep.subr.mxu0 0.0
    %5838 = vmatpush1.xpose.msra.mxu0 0.0
    %5839 = vmatprep.subr.mxu0 %v5668
    %5840 = vmatpush1.xpose.msra.mxu0 %v5667
    %5841 = vmatprep.subr.mxu0 0.0
    %5842 = vmatpush2.xpose.msra.mxu0 0.0
    %5843 = vmatprep.subr.mxu0 0.0
    %5844 = vmatpush2.xpose.msra.mxu0 0.0
    %5845 = vmatprep.subr.mxu0 0.0
    %5846 = vmatpush2.xpose.msra.mxu0 0.0
    %5847 = vmatprep.subr.mxu0 0.0
    %5848 = vmatpush2.xpose.msra.mxu0 0.0
    %5849 = vmatprep.subr.mxu0 0.0
    %5850 = vmatpush2.xpose.msra.mxu0 0.0
    %5851 = vmatprep.subr.mxu0 0.0
    %5852 = vmatpush2.xpose.msra.mxu0 0.0
    %5853 = vmatprep.subr.mxu0 0.0
    %5854 = vmatpush2.xpose.msra.mxu0 0.0
    %5855 = vmatprep.subr.mxu0 0.0
    %5856 = vmatpush2.xpose.msra.mxu0 0.0
    %5857 = vmatprep.subr.mxu0 0.0
    %5858 = vmatpush2.xpose.msra.mxu0 0.0
    %5859 = vmatprep.subr.mxu0 0.0
    %5860 = vmatpush2.xpose.msra.mxu0 0.0
    %5861 = vmatprep.subr.mxu0 0.0
    %5862 = vmatpush2.xpose.msra.mxu0 0.0
    %5863 = vmatprep.subr.mxu0 0.0
    %5864 = vmatpush2.xpose.msra.mxu0 0.0
    %5865 = vmatprep.subr.mxu0 0.0
    %5866 = vmatpush2.xpose.msra.mxu0 0.0
    %5867 = vmatprep.subr.mxu0 0.0
    %5868 = vmatpush2.xpose.msra.mxu0 0.0
    %5869 = vmatprep.subr.mxu0 0.0
    %5870 = vmatpush2.xpose.msra.mxu0 0.0
    %5871 = vmatprep.subr.mxu0 0.0
    %5872 = vmatpush2.xpose.msra.mxu0 0.0
    %5873 = vmatprep.mubr.f32.mxu0 %v5668
    %5874 = vmatmul.mubr.f32.gmra.mxu0 %v5667
    %v5875 = vpop.f32.mrf.mxu0
    %v5876 = vadd.f32 %v5806, %v5875
    %v5877 = vpop.f32.mrf.mxu0
    %5878 = vdwg.mxu0
    %v5879 = vmul.f32 %v5876, 0.5
    %vm5880 = vcmask 64512
    %v5881 = vsel %vm5880, %v5879, -inf
    %5882 = vmax.xlane.f32.xlu0 %v5881
    %v5883 = vpop.xlane.xlu0 %5882
    %v5884 = vsub.f32 %v5879, %v5883
    %v5885 = vmul.f32 %v5884, 1.442695
    %v5886 = vpow.pop %v5885
    %v5887 = vsel %vm5880, %v5886, 0.0
    %5888 = vadd.xlane.f32.xlu0 %v5887
    %v5889 = vpop.xlane.xlu0 %5888
    %v5890 = vrcp.pop %v5889
    %v5891 = vmul.f32 %v5886, %v5890
    %v5892 = vsub.f32 0.0, %v5891
    %v5893 = vsel %vm5880, %v5736, -inf
    %5894 = vmax.xlane.f32.xlu0 %v5893
    %v5895 = vpop.xlane.xlu0 %5894
    %v5896 = vsub.f32 %v5736, %v5895
    %v5897 = vmul.f32 %v5896, 1.442695
    %v5898 = vpow.pop %v5897
    %v5899 = vsel %vm5880, %v5898, 0.0
    %5900 = vadd.xlane.f32.xlu0 %v5899
    %v5901 = vpop.xlane.xlu0 %5900
    %v5902 = vlog2.pop %v5901
    %v5903 = vmul.f32 %v5902, 0.6931472
    %v5904 = vsub.f32 %v5896, %v5903
    %v5905 = vmul.f32 %v5892, %v5904
    %v5906 = vsel %vm5880, %v5905, 0.0
    %5907 = vadd.xlane.f32.xlu0 %v5906
    %v5908 = vpop.xlane.xlu0 %5907
    %v5909 = vrot.slane %v5908, 4
    %v5910 = vadd.f32 %v5908, %v5909
    %v5911 = vrot.slane %v5910, 2
    %v5912 = vadd.f32 %v5910, %v5911
    %v5913 = vrot.slane %v5912, 1
    %v5914 = vadd.f32 %v5912, %v5913
    %v5915 = vrot.slane %v5893, 4
    %v5916 = vmax.f32 %v5893, %v5915
    %v5917 = vrot.slane %v5916, 2
    %v5918 = vmax.f32 %v5916, %v5917
    %v5919 = vrot.slane %v5918, 1
    %v5920 = vmax.f32 %v5918, %v5919
    %v5921 = vsub.f32 %v5736, %v5920
    %v5922 = vmul.f32 %v5921, 1.442695
    %v5923 = vpow.pop %v5922
    %v5924 = vsel %vm5880, %v5923, 0.0
    %v5925 = vrot.slane %v5924, 4
    %v5926 = vadd.f32 %v5924, %v5925
    %v5927 = vrot.slane %v5926, 2
    %v5928 = vadd.f32 %v5926, %v5927
    %v5929 = vrot.slane %v5928, 1
    %v5930 = vadd.f32 %v5928, %v5929
    %v5931 = vlog2.pop %v5930
    %v5932 = vmul.f32 %v5931, 0.6931472
    %v5933 = vsub.f32 %v5921, %v5932
    %v5934 = vmul.f32 %v5892, %v5933
    %v5935 = vsel %vm5880, %v5934, 0.0
    %5936 = vadd.xlane.f32.xlu0 %v5935
    %v5937 = vpop.xlane.xlu0 %5936
    %v5938 = vrot.slane %v5937, 4
    %v5939 = vadd.f32 %v5937, %v5938
    %v5940 = vrot.slane %v5939, 2
    %v5941 = vadd.f32 %v5939, %v5940
    %v5942 = vrot.slane %v5941, 1
    %v5943 = vadd.f32 %v5941, %v5942
    %v5944 = vadd.f32 %v5914, %v5943
    %v5945 = vmul.f32 %v5944, 0.0625
    %vm5946 = vcmask 0
    %5947 = vst.msk [vmem:[#allocation25] sm:$0x1] %vm5946, %v5945
    // Predicated region
    $region114: #{tpu_custom_call.1} parent=1 // pred_check
      _
    $region115: #{tpu_custom_call.1} parent=1 // pred_check_branch
      %5949 = sbr.rel (0) target = $region117
    $region116: #{tpu_custom_call.1} parent=1 // pred_region
      %s5951 = ssub.s32 16, 16
      %5952 = vsyncadd [#allocation4], %s5951
      %s5954 = sshll.u32 [#allocation25], 4
      %s5955 = int_to_ptr.vmem [resolvable:$true] %s5954
      %5957 = dma.vmem_to_hbm [thread:$0]  %s5955, 16, %s14, [#allocation4]
    $region117: #{tpu_custom_call.1} parent=1 // pred_fallthru
      _
    // Predicated region
    $region118: #{tpu_custom_call.1} parent=1 // pred_check
      _
    $region119: #{tpu_custom_call.1} parent=1 // pred_check_branch
      %5959 = sbr.rel (0) target = $region121
    $region120: #{tpu_custom_call.1} parent=1 // pred_region
      %5960 = dma.done [#allocation4], 16
    $region121: #{tpu_custom_call.1} parent=1 // pred_fallthru
      _
    %5961 = vsyncpa [#allocation3], 1
    %5962 = vsyncpa [#allocation6], 1
    %5963 = vsyncpa [#allocation9], 1
    %5964 = vsyncpa [#allocation12], 1
    %5965 = vsyncpa [#allocation15], 1
    %5966 = vsyncpa [#allocation18], 1
    %5967 = vsyncpa [#allocation21], 1
    %5968 = vsyncpa [#allocation24], 1
    %5969 = vsyncpa [#allocation4], 1

</llo_original>
